<compile_context>
chip_gen: v6e
topology: v6e:2x2x1
jax: 0.10.0
libtpu: 0.0.40
codegen_flags: <defaults>
</compile_context>

<pallas_src>
import functools
import math

import jax
import jax.numpy as jnp
from jax.experimental import pallas as pl
from jax.experimental.pallas import tpu as pltpu

_EPS = 1e-5

# (kernel_size, padding) for the two conv branches of FABiS6Block.
TFA_SPECS = ((2, 1), (3, 1), (4, 2))
CFA_SPECS = ((2, 1), (4, 2), (8, 4))
MAX_PAD = 4                      # max |tap offset| -> symmetric zero pad
N_TAP = 2 * MAX_PAD              # tap offsets -4..3 (8 consecutive tokens)


def _ln(x, gamma, beta):
    """LayerNorm over last dim (biased variance, eps=1e-5) — jnp only."""
    mu = jnp.mean(x, axis=-1, keepdims=True)
    var = jnp.mean(jnp.square(x - mu), axis=-1, keepdims=True)
    return (x - mu) * jax.lax.rsqrt(var + _EPS) * gamma + beta


# --------------------------------------------------------------------------
# Kernel 1: temporal (tfa) + contextual (cfa) feature aggregation, row-tiled.
#   xmain : (Tn*B, E)  tokens [i*Tn, (i+1)*Tn) of the zero-padded slab
#   xhalo : (2P*B, E)  the next 2P tokens (halo for the conv taps)
#   One matmul: taps (rows, 8E) @ Wcomb (8E, 2E) -> [tfa_raw | cfa_raw].
# --------------------------------------------------------------------------
def _feature_agg_kernel(xmain_ref, xhalo_ref, w_ref, b_ref,
                        tg_ref, tbeta_ref, cg_ref, cbeta_ref, fg_ref, fbeta_ref,
                        o_ref, *, batch, n_tap):
    rows, e = o_ref.shape
    window = jnp.concatenate([xmain_ref[...], xhalo_ref[...]], axis=0)
    # Pack the 8 tap-shifted slabs along the contraction dim (K = 8E).
    taps = jnp.concatenate(
        [window[k * batch:k * batch + rows, :] for k in range(n_tap)], axis=-1)
    raw = jnp.dot(taps, w_ref[...], preferred_element_type=jnp.float32) + b_ref[...]
    tfa = _ln(raw[:, :e], tg_ref[...], tbeta_ref[...])
    cfa = _ln(raw[:, e:], cg_ref[...], cbeta_ref[...])
    o_ref[...] = _ln(tfa + cfa, fg_ref[...], fbeta_ref[...]).astype(o_ref.dtype)


# --------------------------------------------------------------------------
# Kernel 2: fused bidirectional SelectiveStateSpace (S6) + final LayerNorm.
#   x block: (chunk, R_tile, E); every row is an independent recurrence
#   (chunks x batch), forward half walks t = 0..ck-1, backward half walks
#   t = ck-1..0 (== flip -> scan -> flip of the reference, fused).
# --------------------------------------------------------------------------
def _s6_kernel(xc_ref, wsel_ref, bsel_ref, wa_ref, wb_ref, wc_ref, d_ref,
               gdir_ref, bdir_ref, gfin_ref, bfin_ref, o_ref,
               sf_scr, sb_scr, af_scr, ab_scr, hf_scr, hb_scr):
    ck, r, e = xc_ref.shape
    e2 = 2 * e
    x_flat = xc_ref[...].reshape(ck * r, e)

    # --- hoisted out of the scan: selection gate and x @ A^T, both directions
    # as single (ck*r, E) x (E, 2E) matmuls (N = 2E: [fwd | bwd]).
    zsel = jnp.dot(x_flat, wsel_ref[...],
                   preferred_element_type=jnp.float32) + bsel_ref[...]
    sel = pl.reciprocal(1.0 + jnp.exp(-zsel), approx=True)
    xa = jnp.dot(x_flat, wa_ref[...], preferred_element_type=jnp.float32)
    sf_scr[...] = sel[:, :e].reshape(ck, r, e)
    sb_scr[...] = sel[:, e:].reshape(ck, r, e)
    af_scr[...] = xa[:, :e].reshape(ck, r, e)
    ab_scr[...] = xa[:, e:].reshape(ck, r, e)

    wb = wb_ref[...]                              # blockdiag(Bf^T, Bb^T), (2E, 2E)

    # --- serial part: only the h-recurrence; per-step loads from VMEM scratch.
    def step(t, h):
        tb = ck - 1 - t
        xa_t = jnp.concatenate([af_scr[t], ab_scr[tb]], axis=-1)
        sel_t = jnp.concatenate([sf_scr[t], sb_scr[tb]], axis=-1)
        h = jnp.tanh(xa_t + jnp.dot(h, wb,
                                    preferred_element_type=jnp.float32)) * sel_t
        hf_scr[t] = h[:, :e]
        hb_scr[tb] = h[:, e:]
        return h

    jax.lax.fori_loop(0, ck, step, jnp.zeros((r, e2), jnp.float32), unroll=True)

    # --- batched epilogue: y = H @ blockdiag(Cf^T, Cb^T) + [x|x]*[Df|Db],
    # per-direction LayerNorms, then the final LayerNorm over 2E (old kernel 3).
    h_flat = jnp.concatenate([hf_scr[...].reshape(ck * r, e),
                              hb_scr[...].reshape(ck * r, e)], axis=-1)
    y = jnp.dot(h_flat, wc_ref[...], preferred_element_type=jnp.float32)
    y = y + jnp.concatenate([x_flat, x_flat], axis=-1) * d_ref[...]
    y_dir = jnp.concatenate(
        [_ln(y[:, :e], gdir_ref[:, :e], bdir_ref[:, :e]),
         _ln(y[:, e:], gdir_ref[:, e:], bdir_ref[:, e:])], axis=-1)
    out = _ln(y_dir, gfin_ref[...], bfin_ref[...])
    o_ref[...] = out.reshape(ck, r, e2).astype(o_ref.dtype)


# --------------------------------------------------------------------------
# Parameter construction / packing
# --------------------------------------------------------------------------
def _conv_splits(emb):
    c = emb // 3
    return [c, c, emb - 2 * c]


def init_params(key, emb):
    keys = iter(jax.random.split(key, 64))

    def normal(shape, scale=0.1):
        return scale * jax.random.normal(next(keys), shape, dtype=jnp.float32)

    def uniform(shape, bound):
        return jax.random.uniform(next(keys), shape, jnp.float32, -bound, bound)

    splits = _conv_splits(emb)
    p = {}
    for name, specs in (("tfa", TFA_SPECS), ("cfa", CFA_SPECS)):
        ws, bs = [], []
        for (k, _), oc in zip(specs, splits):
            bound = 1.0 / math.sqrt(emb * k)
            ws.append(uniform((oc, emb, k), bound))
            bs.append(uniform((oc,), bound))
        p[f"{name}_w"] = ws
        p[f"{name}_b"] = bs

    for name in ("tfa", "cfa", "feat"):
        p[f"{name}_gamma"] = 1.0 + normal((emb,), 0.1)
        p[f"{name}_beta"] = normal((emb,), 0.1)

    for d in ("fwd", "bwd"):
        bound = 1.0 / math.sqrt(emb)
        p[d] = dict(A=normal((emb, emb)), B=normal((emb, emb)),
                    C=normal((emb, emb)), D=normal((emb,)),
                    Wsel=uniform((emb, emb), bound), bsel=uniform((emb,), bound),
                    gamma=1.0 + normal((emb,), 0.1), beta=normal((emb,), 0.1))

    p["final_gamma"] = 1.0 + normal((2 * emb,), 0.1)
    p["final_beta"] = normal((2 * emb,), 0.1)
    return p


def _combine_conv_weights(params, emb):
    """Fold all 6 Conv1d branches into one (8E, 2E) weight + one (1, 2E) bias.

    Column block 0 (:E) is the tfa branch, column block 1 (E:) is cfa; row
    block k holds the weights for tap offset (k - MAX_PAD).
    """
    w = jnp.zeros((N_TAP * emb, 2 * emb), jnp.float32)
    b_parts = []
    for col0, (name, specs) in enumerate((("tfa", TFA_SPECS), ("cfa", CFA_SPECS))):
        out_start = 0
        for (ksize, pad), wi in zip(specs, params[f"{name}_w"]):
            excess = 2 * pad - ksize + 1
            # reference trims only from the right for these (k, pad) specs
            assert excess >= 0 and excess // 2 == 0
            oc = wi.shape[0]
            for kk in range(ksize):
                tap = kk - pad + MAX_PAD
                col = col0 * emb + out_start
                w = w.at[tap * emb:(tap + 1) * emb, col:col + oc].set(wi[:, :, kk].T)
            out_start += oc
        b_parts.append(jnp.concatenate(params[f"{name}_b"]))
    bias = jnp.concatenate(b_parts)[None, :].astype(jnp.float32)
    return w, bias


def _s6_weights(params, emb):
    pf, pb = params["fwd"], params["bwd"]
    zeros = jnp.zeros((emb, emb), jnp.float32)
    wsel = jnp.concatenate([pf["Wsel"].T, pb["Wsel"].T], axis=1)       # (E, 2E)
    bsel = jnp.concatenate([pf["bsel"], pb["bsel"]])[None, :]          # (1, 2E)
    wa = jnp.concatenate([pf["A"].T, pb["A"].T], axis=1)               # (E, 2E)
    wbblk = jnp.block([[pf["B"].T, zeros], [zeros, pb["B"].T]])        # (2E, 2E)
    wcblk = jnp.block([[pf["C"].T, zeros], [zeros, pb["C"].T]])        # (2E, 2E)
    dvec = jnp.concatenate([pf["D"], pb["D"]])[None, :]
    gdir = jnp.concatenate([pf["gamma"], pb["gamma"]])[None, :]
    bdir = jnp.concatenate([pf["beta"], pb["beta"]])[None, :]
    return (wsel.astype(jnp.float32), bsel.astype(jnp.float32),
            wa.astype(jnp.float32), wbblk.astype(jnp.float32),
            wcblk.astype(jnp.float32), dvec.astype(jnp.float32),
            gdir.astype(jnp.float32), bdir.astype(jnp.float32))


# --------------------------------------------------------------------------
# Tiling helpers
# --------------------------------------------------------------------------
def _round_up(v, m):
    return ((v + m - 1) // m) * m


def _pick_token_tile(seq_len, batch):
    """Largest multiple-of-8 divisor of seq_len with <= ~1024 rows per tile."""
    cap = max(8, (1024 // max(batch, 1)) // 8 * 8)
    best = 8
    d = 8
    while d <= seq_len:
        if seq_len % d == 0 and d <= cap:
            best = d
        d += 8
    return best


def _pick_row_tile(total, cap=128):
    """Row tile (multiple of 8) and padded total for the S6 grid."""
    n_tiles = max(1, -(-total // cap))
    tile = _round_up(-(-total // n_tiles), 8)
    return tile, n_tiles * tile


# --------------------------------------------------------------------------
# Forward wrapper
# --------------------------------------------------------------------------
def fabis6_forward(x, params, history_tokens=16):
    """Pallas implementation of FABiS6Block.forward.  x: (S, B, E) float32."""
    S, Bn, E = x.shape
    ck = history_tokens
    assert S % ck == 0, "demo assumes seq_len % history_tokens == 0"
    # TODO(synk): support a ragged final S6 chunk (seq_len % history_tokens != 0).

    rows = S * Bn
    P = MAX_PAD
    row2 = lambda v: v[None, :].astype(jnp.float32)

    def const(shape):
        return pl.BlockSpec(shape, lambda i, _s=shape: (0,) * len(_s))

    cparams = pltpu.CompilerParams(
        dimension_semantics=("parallel",),
        vmem_limit_bytes=32 * 1024 * 1024)

    # ---- kernel 1: tiled feature aggregation (single 8E->2E matmul + 3 LNs) ----
    wcomb, bias = _combine_conv_weights(params, E)
    xp = jnp.pad(x, ((P, P), (0, 0), (0, 0))).reshape((S + 2 * P) * Bn, E)
    xp = xp.astype(jnp.float32)

    Tn = _pick_token_tile(S, Bn)
    n_t = S // Tn
    halo_scale = Tn // N_TAP

    agg_flat = pl.pallas_call(
        functools.partial(_feature_agg_kernel, batch=Bn, n_tap=N_TAP),
        out_shape=jax.ShapeDtypeStruct((rows, E), jnp.float32),
        grid=(n_t,),
        in_specs=[
            pl.BlockSpec((Tn * Bn, E), lambda i: (i, 0)),                 # main
            pl.BlockSpec((N_TAP * Bn, E),
                         lambda i: ((i + 1) * halo_scale, 0)),            # halo
            const((N_TAP * E, 2 * E)),                                    # Wcomb
            const((1, 2 * E)),                                            # bias
            const((1, E)), const((1, E)),                                 # tfa LN
            const((1, E)), const((1, E)),                                 # cfa LN
            const((1, E)), const((1, E)),                                 # feat LN
        ],
        out_specs=pl.BlockSpec((Tn * Bn, E), lambda i: (i, 0)),
        compiler_params=cparams,
    )(xp, xp, wcomb, bias,
      row2(params["tfa_gamma"]), row2(params["tfa_beta"]),
      row2(params["cfa_gamma"]), row2(params["cfa_beta"]),
      row2(params["feat_gamma"]), row2(params["feat_beta"]))

    # ---- kernel 2: fused bidirectional S6 + final LayerNorm, tiled over rows ----
    nc = S // ck
    R = nc * Bn
    R_tile, R_pad = _pick_row_tile(R)

    # chunked layout: (chunk, nc*B, E); chunks are independent -> batched as rows
    xc = agg_flat.reshape(nc, ck, Bn, E).transpose(1, 0, 2, 3).reshape(ck, R, E)
    if R_pad != R:
        xc = jnp.pad(xc, ((0, 0), (0, R_pad - R), (0, 0)))

    wsel, bsel, wa, wbblk, wcblk, dvec, gdir, bdir = _s6_weights(params, E)
    gfin = row2(params["final_gamma"])
    bfin = row2(params["final_beta"])

    n_r = R_pad // R_tile
    y_ch = pl.pallas_call(
        _s6_kernel,
        out_shape=jax.ShapeDtypeStruct((ck, R_pad, 2 * E), jnp.float32),
        grid=(n_r,),
        in_specs=[
            pl.BlockSpec((ck, R_tile, E), lambda j: (0, j, 0)),           # x
            const((E, 2 * E)), const((1, 2 * E)),                         # Wsel, bsel
            const((E, 2 * E)),                                            # A
            const((2 * E, 2 * E)), const((2 * E, 2 * E)),                 # Bblk, Cblk
            const((1, 2 * E)),                                            # D
            const((1, 2 * E)), const((1, 2 * E)),                         # dir gamma/beta
            const((1, 2 * E)), const((1, 2 * E)),                         # final gamma/beta
        ],
        out_specs=pl.BlockSpec((ck, R_tile, 2 * E), lambda j: (0, j, 0)),
        scratch_shapes=[pltpu.VMEM((ck, R_tile, E), jnp.float32)
                        for _ in range(6)],
        compiler_params=cparams,
    )(xc, wsel, bsel, wa, wbblk, wcblk, dvec, gdir, bdir, gfin, bfin)

    y = y_ch[:, :R, :].reshape(ck, nc, Bn, 2 * E).transpose(1, 0, 2, 3)
    return y.reshape(S, Bn, 2 * E)


# --------------------------------------------------------------------------
# Pure-JAX reference (mirrors the PyTorch module op-for-op)
# --------------------------------------------------------------------------
def _ln_ref(x, gamma, beta):
    mu = jnp.mean(x, axis=-1, keepdims=True)
    var = jnp.mean(jnp.square(x - mu), axis=-1, keepdims=True)
    return (x - mu) / jnp.sqrt(var + _EPS) * gamma + beta


def reference_forward(x, params, history_tokens=16):
    S, Bn, E = x.shape
    xc = jnp.transpose(x, (1, 2, 0))                       # (B, E, S)

    def trim(y):
        ex = y.shape[-1] - S
        if ex <= 0:
            return y
        tl = ex // 2
        tr = ex - tl
        return y[..., tl:] if tr == 0 else y[..., tl:y.shape[-1] - tr]

    def branch(name, specs):
        outs = []
        for (k, pad), w, b in zip(specs, params[f"{name}_w"], params[f"{name}_b"]):
            y = jax.lax.conv_general_dilated(
                xc, w, window_strides=(1,), padding=[(pad, pad)],
                dimension_numbers=("NCH", "OIH", "NCH")) + b[None, :, None]
            outs.append(trim(y))
        feat = jnp.concatenate(outs, axis=1)               # (B, E, S)
        return jnp.transpose(feat, (2, 0, 1))              # (S, B, E)

    tfa = _ln_ref(branch("tfa", TFA_SPECS), params["tfa_gamma"], params["tfa_beta"])
    cfa = _ln_ref(branch("cfa", CFA_SPECS), params["cfa_gamma"], params["cfa_beta"])
    agg = _ln_ref(tfa + cfa, params["feat_gamma"], params["feat_beta"])

    def s6(xs, pp):
        outs = []
        for c0 in range(0, S, history_tokens):
            chk = xs[c0:c0 + history_tokens]
            sel = 1.0 / (1.0 + jnp.exp(-(chk @ pp["Wsel"].T + pp["bsel"])))
            h = jnp.zeros((Bn, E), jnp.float32)
            ys = []
            for t in range(chk.shape[0]):
                x_t = chk[t]
                h = jnp.tanh(x_t @ pp["A"].T + h @ pp["B"].T) * sel[t]
                ys.append(h @ pp["C"].T + x_t * pp["D"])
            outs.append(jnp.stack(ys, axis=0))
        return _ln_ref(jnp.concatenate(outs, axis=0), pp["gamma"], pp["beta"])

    f = s6(agg, params["fwd"])
    b = jnp.flip(s6(jnp.flip(agg, axis=0), params["bwd"]), axis=0)
    y = jnp.concatenate([f, b], axis=-1)
    return _ln_ref(y, params["final_gamma"], params["final_beta"])


if __name__ == "__main__":
    EMB = 64           # n_embedding_dim
    SEQ = 32           # seq_len (2 chunks of history_tokens)
    BATCH = 2
    HIST = 16          # history_tokens / S6 chunk size

    key = jax.random.PRNGKey(0)
    kx, kp = jax.random.split(key)
    x = jax.random.normal(kx, (SEQ, BATCH, EMB), dtype=jnp.float32)
    params = init_params(kp, EMB)

    forward = jax.jit(fabis6_forward, static_argnames=("history_tokens",))
    out = forward(x, params, history_tokens=HIST)
    out = jax.block_until_ready(out)
    assert out.shape == (SEQ, BATCH, 2 * EMB)
    assert bool(jnp.all(jnp.isfinite(out)))

    with jax.default_matmul_precision("highest"):
        ref = reference_forward(x, params, history_tokens=HIST)
    ref = jax.block_until_ready(ref)
    max_err = float(jnp.max(jnp.abs(out - ref)))
    assert jnp.allclose(out, ref, atol=2e-2, rtol=2e-2), max_err

    print("KERNEL_OK")
</pallas_src>

<mosaic_0001>
module attributes {stable_mosaic.version = 11 : i64} {
  func.func @_feature_agg_kernel(%arg0: i32, %arg1: memref<64x64xf32, #tpu.memory_space<vmem>>, %arg2: memref<16x64xf32, #tpu.memory_space<vmem>>, %arg3: memref<512x128xf32, #tpu.memory_space<vmem>>, %arg4: memref<1x128xf32, #tpu.memory_space<vmem>>, %arg5: memref<1x64xf32, #tpu.memory_space<vmem>>, %arg6: memref<1x64xf32, #tpu.memory_space<vmem>>, %arg7: memref<1x64xf32, #tpu.memory_space<vmem>>, %arg8: memref<1x64xf32, #tpu.memory_space<vmem>>, %arg9: memref<1x64xf32, #tpu.memory_space<vmem>>, %arg10: memref<1x64xf32, #tpu.memory_space<vmem>>, %arg11: memref<64x64xf32, #tpu.memory_space<vmem>>) attributes {dimension_semantics = [#tpu.dimension_semantics<parallel>], iteration_bounds = array<i64: 1>, scalar_prefetch = 0 : i64, scratch_operands = 0 : i64, tpu.core_type = #tpu.core_type<tc>, window_params = [{transform_indices = @transform_0, window_bounds = array<i64: 64, 64>}, {transform_indices = @transform_1, window_bounds = array<i64: 16, 64>}, {pipeline_mode = #tpu.pipeline_mode<synchronous>, transform_indices = @transform_2, window_bounds = array<i64: 512, 128>}, {pipeline_mode = #tpu.pipeline_mode<synchronous>, transform_indices = @transform_3, window_bounds = array<i64: 1, 128>}, {pipeline_mode = #tpu.pipeline_mode<synchronous>, transform_indices = @transform_4, window_bounds = array<i64: 1, 64>}, {pipeline_mode = #tpu.pipeline_mode<synchronous>, transform_indices = @transform_5, window_bounds = array<i64: 1, 64>}, {pipeline_mode = #tpu.pipeline_mode<synchronous>, transform_indices = @transform_6, window_bounds = array<i64: 1, 64>}, {pipeline_mode = #tpu.pipeline_mode<synchronous>, transform_indices = @transform_7, window_bounds = array<i64: 1, 64>}, {pipeline_mode = #tpu.pipeline_mode<synchronous>, transform_indices = @transform_8, window_bounds = array<i64: 1, 64>}, {pipeline_mode = #tpu.pipeline_mode<synchronous>, transform_indices = @transform_9, window_bounds = array<i64: 1, 64>}, {transform_indices = @transform_10, window_bounds = array<i64: 64, 64>}]} {
    %c0 = arith.constant 0 : index
    %c0_0 = arith.constant 0 : index
    %0 = vector.load %arg1[%c0, %c0_0] : memref<64x64xf32, #tpu.memory_space<vmem>>, vector<64x64xf32>
    %c0_1 = arith.constant 0 : index
    %c0_2 = arith.constant 0 : index
    %1 = vector.load %arg2[%c0_1, %c0_2] : memref<16x64xf32, #tpu.memory_space<vmem>>, vector<16x64xf32>
    %2 = tpu.concatenate %0, %1 in 0 : vector<64x64xf32>, vector<16x64xf32> -> vector<80x64xf32>
    %3 = vector.extract_strided_slice %2 {offsets = [0, 0], sizes = [64, 64], strides = [1, 1]} : vector<80x64xf32> to vector<64x64xf32>
    %4 = vector.extract_strided_slice %2 {offsets = [2, 0], sizes = [64, 64], strides = [1, 1]} : vector<80x64xf32> to vector<64x64xf32>
    %5 = vector.extract_strided_slice %2 {offsets = [4, 0], sizes = [64, 64], strides = [1, 1]} : vector<80x64xf32> to vector<64x64xf32>
    %6 = vector.extract_strided_slice %2 {offsets = [6, 0], sizes = [64, 64], strides = [1, 1]} : vector<80x64xf32> to vector<64x64xf32>
    %7 = vector.extract_strided_slice %2 {offsets = [8, 0], sizes = [64, 64], strides = [1, 1]} : vector<80x64xf32> to vector<64x64xf32>
    %8 = vector.extract_strided_slice %2 {offsets = [10, 0], sizes = [64, 64], strides = [1, 1]} : vector<80x64xf32> to vector<64x64xf32>
    %9 = vector.extract_strided_slice %2 {offsets = [12, 0], sizes = [64, 64], strides = [1, 1]} : vector<80x64xf32> to vector<64x64xf32>
    %10 = vector.extract_strided_slice %2 {offsets = [14, 0], sizes = [64, 64], strides = [1, 1]} : vector<80x64xf32> to vector<64x64xf32>
    %11 = tpu.concatenate %3, %4, %5, %6, %7, %8, %9, %10 in 1 : vector<64x64xf32>, vector<64x64xf32>, vector<64x64xf32>, vector<64x64xf32>, vector<64x64xf32>, vector<64x64xf32>, vector<64x64xf32>, vector<64x64xf32> -> vector<64x512xf32>
    %c0_3 = arith.constant 0 : index
    %c0_4 = arith.constant 0 : index
    %12 = vector.load %arg3[%c0_3, %c0_4] : memref<512x128xf32, #tpu.memory_space<vmem>>, vector<512x128xf32>
    %cst = arith.constant dense<0.000000e+00> : vector<64x128xf32>
    %13 = tpu.matmul %11, %12, %cst {dimension_numbers = #tpu.dot_dimension_numbers<[1], [0], [0], [1], [0, 0, 1, 1], [], []>} : vector<64x512xf32>, vector<512x128xf32>, vector<64x128xf32> -> vector<64x128xf32>
    %c0_5 = arith.constant 0 : index
    %c0_6 = arith.constant 0 : index
    %14 = vector.load %arg4[%c0_5, %c0_6] : memref<1x128xf32, #tpu.memory_space<vmem>>, vector<1x128xf32>
    %15 = vector.broadcast %14 : vector<1x128xf32> to vector<64x128xf32>
    %16 = arith.addf %13, %15 : vector<64x128xf32>
    %17 = vector.extract_strided_slice %16 {offsets = [0, 0], sizes = [64, 64], strides = [1, 1]} : vector<64x128xf32> to vector<64x64xf32>
    %c0_7 = arith.constant 0 : index
    %c0_8 = arith.constant 0 : index
    %18 = vector.load %arg5[%c0_7, %c0_8] : memref<1x64xf32, #tpu.memory_space<vmem>>, vector<1x64xf32>
    %c0_9 = arith.constant 0 : index
    %c0_10 = arith.constant 0 : index
    %19 = vector.load %arg6[%c0_9, %c0_10] : memref<1x64xf32, #tpu.memory_space<vmem>>, vector<1x64xf32>
    %cst_11 = arith.constant dense<0.000000e+00> : vector<64xf32>
    %20 = vector.multi_reduction <add>, %17, %cst_11 [1] : vector<64x64xf32> to vector<64xf32>
    %21 = vector.shape_cast %20 : vector<64xf32> to vector<64x1xf32>
    %cst_12 = arith.constant 6.400000e+01 : f32
    %22 = vector.broadcast %cst_12 : f32 to vector<64x1xf32>
    %23 = arith.divf %21, %22 : vector<64x1xf32>
    %24 = vector.broadcast %23 : vector<64x1xf32> to vector<64x64xf32>
    %25 = arith.subf %17, %24 : vector<64x64xf32>
    %26 = arith.mulf %25, %25 : vector<64x64xf32>
    %cst_13 = arith.constant dense<0.000000e+00> : vector<64xf32>
    %27 = vector.multi_reduction <add>, %26, %cst_13 [1] : vector<64x64xf32> to vector<64xf32>
    %28 = vector.shape_cast %27 : vector<64xf32> to vector<64x1xf32>
    %cst_14 = arith.constant 6.400000e+01 : f32
    %29 = vector.broadcast %cst_14 : f32 to vector<64x1xf32>
    %30 = arith.divf %28, %29 : vector<64x1xf32>
    %31 = vector.broadcast %23 : vector<64x1xf32> to vector<64x64xf32>
    %32 = arith.subf %17, %31 : vector<64x64xf32>
    %cst_15 = arith.constant 9.99999974E-6 : f32
    %33 = vector.broadcast %cst_15 : f32 to vector<64x1xf32>
    %34 = arith.addf %30, %33 : vector<64x1xf32>
    %35 = math.rsqrt %34 : vector<64x1xf32>
    %36 = vector.broadcast %35 : vector<64x1xf32> to vector<64x64xf32>
    %37 = arith.mulf %32, %36 : vector<64x64xf32>
    %38 = vector.broadcast %18 : vector<1x64xf32> to vector<64x64xf32>
    %39 = arith.mulf %37, %38 : vector<64x64xf32>
    %40 = vector.broadcast %19 : vector<1x64xf32> to vector<64x64xf32>
    %41 = arith.addf %39, %40 : vector<64x64xf32>
    %42 = vector.extract_strided_slice %16 {offsets = [0, 64], sizes = [64, 64], strides = [1, 1]} : vector<64x128xf32> to vector<64x64xf32>
    %c0_16 = arith.constant 0 : index
    %c0_17 = arith.constant 0 : index
    %43 = vector.load %arg7[%c0_16, %c0_17] : memref<1x64xf32, #tpu.memory_space<vmem>>, vector<1x64xf32>
    %c0_18 = arith.constant 0 : index
    %c0_19 = arith.constant 0 : index
    %44 = vector.load %arg8[%c0_18, %c0_19] : memref<1x64xf32, #tpu.memory_space<vmem>>, vector<1x64xf32>
    %cst_20 = arith.constant dense<0.000000e+00> : vector<64xf32>
    %45 = vector.multi_reduction <add>, %42, %cst_20 [1] : vector<64x64xf32> to vector<64xf32>
    %46 = vector.shape_cast %45 : vector<64xf32> to vector<64x1xf32>
    %cst_21 = arith.constant 6.400000e+01 : f32
    %47 = vector.broadcast %cst_21 : f32 to vector<64x1xf32>
    %48 = arith.divf %46, %47 : vector<64x1xf32>
    %49 = vector.broadcast %48 : vector<64x1xf32> to vector<64x64xf32>
    %50 = arith.subf %42, %49 : vector<64x64xf32>
    %51 = arith.mulf %50, %50 : vector<64x64xf32>
    %cst_22 = arith.constant dense<0.000000e+00> : vector<64xf32>
    %52 = vector.multi_reduction <add>, %51, %cst_22 [1] : vector<64x64xf32> to vector<64xf32>
    %53 = vector.shape_cast %52 : vector<64xf32> to vector<64x1xf32>
    %cst_23 = arith.constant 6.400000e+01 : f32
    %54 = vector.broadcast %cst_23 : f32 to vector<64x1xf32>
    %55 = arith.divf %53, %54 : vector<64x1xf32>
    %56 = vector.broadcast %48 : vector<64x1xf32> to vector<64x64xf32>
    %57 = arith.subf %42, %56 : vector<64x64xf32>
    %cst_24 = arith.constant 9.99999974E-6 : f32
    %58 = vector.broadcast %cst_24 : f32 to vector<64x1xf32>
    %59 = arith.addf %55, %58 : vector<64x1xf32>
    %60 = math.rsqrt %59 : vector<64x1xf32>
    %61 = vector.broadcast %60 : vector<64x1xf32> to vector<64x64xf32>
    %62 = arith.mulf %57, %61 : vector<64x64xf32>
    %63 = vector.broadcast %43 : vector<1x64xf32> to vector<64x64xf32>
    %64 = arith.mulf %62, %63 : vector<64x64xf32>
    %65 = vector.broadcast %44 : vector<1x64xf32> to vector<64x64xf32>
    %66 = arith.addf %64, %65 : vector<64x64xf32>
    %67 = arith.addf %41, %66 : vector<64x64xf32>
    %c0_25 = arith.constant 0 : index
    %c0_26 = arith.constant 0 : index
    %68 = vector.load %arg9[%c0_25, %c0_26] : memref<1x64xf32, #tpu.memory_space<vmem>>, vector<1x64xf32>
    %c0_27 = arith.constant 0 : index
    %c0_28 = arith.constant 0 : index
    %69 = vector.load %arg10[%c0_27, %c0_28] : memref<1x64xf32, #tpu.memory_space<vmem>>, vector<1x64xf32>
    %cst_29 = arith.constant dense<0.000000e+00> : vector<64xf32>
    %70 = vector.multi_reduction <add>, %67, %cst_29 [1] : vector<64x64xf32> to vector<64xf32>
    %71 = vector.shape_cast %70 : vector<64xf32> to vector<64x1xf32>
    %cst_30 = arith.constant 6.400000e+01 : f32
    %72 = vector.broadcast %cst_30 : f32 to vector<64x1xf32>
    %73 = arith.divf %71, %72 : vector<64x1xf32>
    %74 = vector.broadcast %73 : vector<64x1xf32> to vector<64x64xf32>
    %75 = arith.subf %67, %74 : vector<64x64xf32>
    %76 = arith.mulf %75, %75 : vector<64x64xf32>
    %cst_31 = arith.constant dense<0.000000e+00> : vector<64xf32>
    %77 = vector.multi_reduction <add>, %76, %cst_31 [1] : vector<64x64xf32> to vector<64xf32>
    %78 = vector.shape_cast %77 : vector<64xf32> to vector<64x1xf32>
    %cst_32 = arith.constant 6.400000e+01 : f32
    %79 = vector.broadcast %cst_32 : f32 to vector<64x1xf32>
    %80 = arith.divf %78, %79 : vector<64x1xf32>
    %81 = vector.broadcast %73 : vector<64x1xf32> to vector<64x64xf32>
    %82 = arith.subf %67, %81 : vector<64x64xf32>
    %cst_33 = arith.constant 9.99999974E-6 : f32
    %83 = vector.broadcast %cst_33 : f32 to vector<64x1xf32>
    %84 = arith.addf %80, %83 : vector<64x1xf32>
    %85 = math.rsqrt %84 : vector<64x1xf32>
    %86 = vector.broadcast %85 : vector<64x1xf32> to vector<64x64xf32>
    %87 = arith.mulf %82, %86 : vector<64x64xf32>
    %88 = vector.broadcast %68 : vector<1x64xf32> to vector<64x64xf32>
    %89 = arith.mulf %87, %88 : vector<64x64xf32>
    %90 = vector.broadcast %69 : vector<1x64xf32> to vector<64x64xf32>
    %91 = arith.addf %89, %90 : vector<64x64xf32>
    %c0_34 = arith.constant 0 : index
    %c0_35 = arith.constant 0 : index
    %92 = vector.load %arg11[%c0_34, %c0_35] : memref<64x64xf32, #tpu.memory_space<vmem>>, vector<64x64xf32>
    tpu.vector_store %arg11[%c0_34, %c0_35], %91 {strides = array<i32>} : memref<64x64xf32, #tpu.memory_space<vmem>>, vector<64x64xf32>,
    return
  }
  func.func @transform_0(%arg0: i32) -> (i32, i32) {
    %c0_i32 = arith.constant 0 : i32
    %c0_i32_0 = arith.constant 0 : i32
    return %arg0, %c0_i32 : i32, i32
  }
  func.func @transform_1(%arg0: i32) -> (i32, i32) {
    %c1_i32 = arith.constant 1 : i32
    %0 = arith.addi %arg0, %c1_i32 : i32
    %c4_i32 = arith.constant 4 : i32
    %1 = arith.muli %0, %c4_i32 : i32
    %c0_i32 = arith.constant 0 : i32
    %c0_i32_0 = arith.constant 0 : i32
    return %1, %c0_i32 : i32, i32
  }
  func.func @transform_2(%arg0: i32) -> (i32, i32) {
    %c0_i32 = arith.constant 0 : i32
    %c0_i32_0 = arith.constant 0 : i32
    %c0_i32_1 = arith.constant 0 : i32
    return %c0_i32, %c0_i32_0 : i32, i32
  }
  func.func @transform_3(%arg0: i32) -> (i32, i32) {
    %c0_i32 = arith.constant 0 : i32
    %c0_i32_0 = arith.constant 0 : i32
    %c0_i32_1 = arith.constant 0 : i32
    return %c0_i32, %c0_i32_0 : i32, i32
  }
  func.func @transform_4(%arg0: i32) -> (i32, i32) {
    %c0_i32 = arith.constant 0 : i32
    %c0_i32_0 = arith.constant 0 : i32
    %c0_i32_1 = arith.constant 0 : i32
    return %c0_i32, %c0_i32_0 : i32, i32
  }
  func.func @transform_5(%arg0: i32) -> (i32, i32) {
    %c0_i32 = arith.constant 0 : i32
    %c0_i32_0 = arith.constant 0 : i32
    %c0_i32_1 = arith.constant 0 : i32
    return %c0_i32, %c0_i32_0 : i32, i32
  }
  func.func @transform_6(%arg0: i32) -> (i32, i32) {
    %c0_i32 = arith.constant 0 : i32
    %c0_i32_0 = arith.constant 0 : i32
    %c0_i32_1 = arith.constant 0 : i32
    return %c0_i32, %c0_i32_0 : i32, i32
  }
  func.func @transform_7(%arg0: i32) -> (i32, i32) {
    %c0_i32 = arith.constant 0 : i32
    %c0_i32_0 = arith.constant 0 : i32
    %c0_i32_1 = arith.constant 0 : i32
    return %c0_i32, %c0_i32_0 : i32, i32
  }
  func.func @transform_8(%arg0: i32) -> (i32, i32) {
    %c0_i32 = arith.constant 0 : i32
    %c0_i32_0 = arith.constant 0 : i32
    %c0_i32_1 = arith.constant 0 : i32
    return %c0_i32, %c0_i32_0 : i32, i32
  }
  func.func @transform_9(%arg0: i32) -> (i32, i32) {
    %c0_i32 = arith.constant 0 : i32
    %c0_i32_0 = arith.constant 0 : i32
    %c0_i32_1 = arith.constant 0 : i32
    return %c0_i32, %c0_i32_0 : i32, i32
  }
  func.func @transform_10(%arg0: i32) -> (i32, i32) {
    %c0_i32 = arith.constant 0 : i32
    %c0_i32_0 = arith.constant 0 : i32
    return %arg0, %c0_i32 : i32, i32
  }
}

module attributes {stable_mosaic.version = 11 : i64} {
  func.func @_s6_kernel(%arg0: i32, %arg1: memref<16x8x64xf32, #tpu.memory_space<vmem>>, %arg2: memref<64x128xf32, #tpu.memory_space<vmem>>, %arg3: memref<1x128xf32, #tpu.memory_space<vmem>>, %arg4: memref<64x128xf32, #tpu.memory_space<vmem>>, %arg5: memref<128x128xf32, #tpu.memory_space<vmem>>, %arg6: memref<128x128xf32, #tpu.memory_space<vmem>>, %arg7: memref<1x128xf32, #tpu.memory_space<vmem>>, %arg8: memref<1x128xf32, #tpu.memory_space<vmem>>, %arg9: memref<1x128xf32, #tpu.memory_space<vmem>>, %arg10: memref<1x128xf32, #tpu.memory_space<vmem>>, %arg11: memref<1x128xf32, #tpu.memory_space<vmem>>, %arg12: memref<16x8x128xf32, #tpu.memory_space<vmem>>, %arg13: memref<16x8x64xf32, #tpu.memory_space<vmem>>, %arg14: memref<16x8x64xf32, #tpu.memory_space<vmem>>, %arg15: memref<16x8x64xf32, #tpu.memory_space<vmem>>, %arg16: memref<16x8x64xf32, #tpu.memory_space<vmem>>, %arg17: memref<16x8x64xf32, #tpu.memory_space<vmem>>, %arg18: memref<16x8x64xf32, #tpu.memory_space<vmem>>) attributes {dimension_semantics = [#tpu.dimension_semantics<parallel>], iteration_bounds = array<i64: 1>, scalar_prefetch = 0 : i64, scratch_operands = 6 : i64, tpu.core_type = #tpu.core_type<tc>, window_params = [{transform_indices = @transform_0, window_bounds = array<i64: 16, 8, 64>}, {pipeline_mode = #tpu.pipeline_mode<synchronous>, transform_indices = @transform_1, window_bounds = array<i64: 64, 128>}, {pipeline_mode = #tpu.pipeline_mode<synchronous>, transform_indices = @transform_2, window_bounds = array<i64: 1, 128>}, {pipeline_mode = #tpu.pipeline_mode<synchronous>, transform_indices = @transform_3, window_bounds = array<i64: 64, 128>}, {pipeline_mode = #tpu.pipeline_mode<synchronous>, transform_indices = @transform_4, window_bounds = array<i64: 128, 128>}, {pipeline_mode = #tpu.pipeline_mode<synchronous>, transform_indices = @transform_5, window_bounds = array<i64: 128, 128>}, {pipeline_mode = #tpu.pipeline_mode<synchronous>, transform_indices = @transform_6, window_bounds = array<i64: 1, 128>}, {pipeline_mode = #tpu.pipeline_mode<synchronous>, transform_indices = @transform_7, window_bounds = array<i64: 1, 128>}, {pipeline_mode = #tpu.pipeline_mode<synchronous>, transform_indices = @transform_8, window_bounds = array<i64: 1, 128>}, {pipeline_mode = #tpu.pipeline_mode<synchronous>, transform_indices = @transform_9, window_bounds = array<i64: 1, 128>}, {pipeline_mode = #tpu.pipeline_mode<synchronous>, transform_indices = @transform_10, window_bounds = array<i64: 1, 128>}, {transform_indices = @transform_11, window_bounds = array<i64: 16, 8, 128>}]} {
    %c0 = arith.constant 0 : index
    %c0_0 = arith.constant 0 : index
    %c0_1 = arith.constant 0 : index
    %0 = vector.load %arg1[%c0, %c0_0, %c0_1] : memref<16x8x64xf32, #tpu.memory_space<vmem>>, vector<16x8x64xf32>
    %1 = vector.shape_cast %0 : vector<16x8x64xf32> to vector<128x64xf32>
    %c0_2 = arith.constant 0 : index
    %c0_3 = arith.constant 0 : index
    %2 = vector.load %arg2[%c0_2, %c0_3] : memref<64x128xf32, #tpu.memory_space<vmem>>, vector<64x128xf32>
    %cst = arith.constant dense<0.000000e+00> : vector<128x128xf32>
    %3 = tpu.matmul %1, %2, %cst {dimension_numbers = #tpu.dot_dimension_numbers<[1], [0], [0], [1], [0, 0, 1, 1], [], []>} : vector<128x64xf32>, vector<64x128xf32>, vector<128x128xf32> -> vector<128x128xf32>
    %c0_4 = arith.constant 0 : index
    %c0_5 = arith.constant 0 : index
    %4 = vector.load %arg3[%c0_4, %c0_5] : memref<1x128xf32, #tpu.memory_space<vmem>>, vector<1x128xf32>
    %5 = vector.broadcast %4 : vector<1x128xf32> to vector<128x128xf32>
    %6 = arith.addf %3, %5 : vector<128x128xf32>
    %cst_6 = arith.constant 0.000000e+00 : f32
    %7 = vector.broadcast %cst_6 : f32 to vector<128x128xf32>
    %8 = arith.subf %7, %6 : vector<128x128xf32>
    %9 = math.exp %8 : vector<128x128xf32>
    %cst_7 = arith.constant 1.000000e+00 : f32
    %10 = vector.broadcast %cst_7 : f32 to vector<128x128xf32>
    %11 = arith.addf %10, %9 : vector<128x128xf32>
    %12 = tpu.reciprocal %11 {approx = true} : vector<128x128xf32> -> vector<128x128xf32>
    %c0_8 = arith.constant 0 : index
    %c0_9 = arith.constant 0 : index
    %13 = vector.load %arg4[%c0_8, %c0_9] : memref<64x128xf32, #tpu.memory_space<vmem>>, vector<64x128xf32>
    %cst_10 = arith.constant dense<0.000000e+00> : vector<128x128xf32>
    %14 = tpu.matmul %1, %13, %cst_10 {dimension_numbers = #tpu.dot_dimension_numbers<[1], [0], [0], [1], [0, 0, 1, 1], [], []>} : vector<128x64xf32>, vector<64x128xf32>, vector<128x128xf32> -> vector<128x128xf32>
    %15 = vector.extract_strided_slice %12 {offsets = [0, 0], sizes = [128, 64], strides = [1, 1]} : vector<128x128xf32> to vector<128x64xf32>
    %16 = vector.shape_cast %15 : vector<128x64xf32> to vector<16x8x64xf32>
    %c0_11 = arith.constant 0 : index
    %c0_12 = arith.constant 0 : index
    %c0_13 = arith.constant 0 : index
    %17 = vector.load %arg13[%c0_11, %c0_12, %c0_13] : memref<16x8x64xf32, #tpu.memory_space<vmem>>, vector<16x8x64xf32>
    tpu.vector_store %arg13[%c0_11, %c0_12, %c0_13], %16 {strides = array<i32>} : memref<16x8x64xf32, #tpu.memory_space<vmem>>, vector<16x8x64xf32>,
    %18 = vector.extract_strided_slice %12 {offsets = [0, 64], sizes = [128, 64], strides = [1, 1]} : vector<128x128xf32> to vector<128x64xf32>
    %19 = vector.shape_cast %18 : vector<128x64xf32> to vector<16x8x64xf32>
    %c0_14 = arith.constant 0 : index
    %c0_15 = arith.constant 0 : index
    %c0_16 = arith.constant 0 : index
    %20 = vector.load %arg14[%c0_14, %c0_15, %c0_16] : memref<16x8x64xf32, #tpu.memory_space<vmem>>, vector<16x8x64xf32>
    tpu.vector_store %arg14[%c0_14, %c0_15, %c0_16], %19 {strides = array<i32>} : memref<16x8x64xf32, #tpu.memory_space<vmem>>, vector<16x8x64xf32>,
    %21 = vector.extract_strided_slice %14 {offsets = [0, 0], sizes = [128, 64], strides = [1, 1]} : vector<128x128xf32> to vector<128x64xf32>
    %22 = vector.shape_cast %21 : vector<128x64xf32> to vector<16x8x64xf32>
    %c0_17 = arith.constant 0 : index
    %c0_18 = arith.constant 0 : index
    %c0_19 = arith.constant 0 : index
    %23 = vector.load %arg15[%c0_17, %c0_18, %c0_19] : memref<16x8x64xf32, #tpu.memory_space<vmem>>, vector<16x8x64xf32>
    tpu.vector_store %arg15[%c0_17, %c0_18, %c0_19], %22 {strides = array<i32>} : memref<16x8x64xf32, #tpu.memory_space<vmem>>, vector<16x8x64xf32>,
    %24 = vector.extract_strided_slice %14 {offsets = [0, 64], sizes = [128, 64], strides = [1, 1]} : vector<128x128xf32> to vector<128x64xf32>
    %25 = vector.shape_cast %24 : vector<128x64xf32> to vector<16x8x64xf32>
    %c0_20 = arith.constant 0 : index
    %c0_21 = arith.constant 0 : index
    %c0_22 = arith.constant 0 : index
    %26 = vector.load %arg16[%c0_20, %c0_21, %c0_22] : memref<16x8x64xf32, #tpu.memory_space<vmem>>, vector<16x8x64xf32>
    tpu.vector_store %arg16[%c0_20, %c0_21, %c0_22], %25 {strides = array<i32>} : memref<16x8x64xf32, #tpu.memory_space<vmem>>, vector<16x8x64xf32>,
    %c0_23 = arith.constant 0 : index
    %c0_24 = arith.constant 0 : index
    %27 = vector.load %arg5[%c0_23, %c0_24] : memref<128x128xf32, #tpu.memory_space<vmem>>, vector<128x128xf32>
    %cst_25 = arith.constant 0.000000e+00 : f32
    %28 = vector.broadcast %cst_25 : f32 to vector<8x128xf32>
    %c0_i32 = arith.constant 0 : i32
    %c15_i32 = arith.constant 15 : i32
    %29 = arith.subi %c15_i32, %c0_i32 : i32
    %30 = arith.index_cast %c0_i32 : i32 to index
    %c0_26 = arith.constant 0 : index
    %c0_27 = arith.constant 0 : index
    %31 = vector.load %arg15[%30, %c0_26, %c0_27] : memref<16x8x64xf32, #tpu.memory_space<vmem>>, vector<1x8x64xf32>
    %32 = vector.shape_cast %31 : vector<1x8x64xf32> to vector<8x64xf32>
    %33 = arith.index_cast %29 : i32 to index
    %c0_28 = arith.constant 0 : index
    %c0_29 = arith.constant 0 : index
    %34 = vector.load %arg16[%33, %c0_28, %c0_29] : memref<16x8x64xf32, #tpu.memory_space<vmem>>, vector<1x8x64xf32>
    %35 = vector.shape_cast %34 : vector<1x8x64xf32> to vector<8x64xf32>
    %36 = tpu.concatenate %32, %35 in 1 : vector<8x64xf32>, vector<8x64xf32> -> vector<8x128xf32>
    %37 = arith.index_cast %c0_i32 : i32 to index
    %c0_30 = arith.constant 0 : index
    %c0_31 = arith.constant 0 : index
    %38 = vector.load %arg13[%37, %c0_30, %c0_31] : memref<16x8x64xf32, #tpu.memory_space<vmem>>, vector<1x8x64xf32>
    %39 = vector.shape_cast %38 : vector<1x8x64xf32> to vector<8x64xf32>
    %40 = arith.index_cast %29 : i32 to index
    %c0_32 = arith.constant 0 : index
    %c0_33 = arith.constant 0 : index
    %41 = vector.load %arg14[%40, %c0_32, %c0_33] : memref<16x8x64xf32, #tpu.memory_space<vmem>>, vector<1x8x64xf32>
    %42 = vector.shape_cast %41 : vector<1x8x64xf32> to vector<8x64xf32>
    %43 = tpu.concatenate %39, %42 in 1 : vector<8x64xf32>, vector<8x64xf32> -> vector<8x128xf32>
    %cst_34 = arith.constant dense<0.000000e+00> : vector<8x128xf32>
    %44 = tpu.matmul %28, %27, %cst_34 {dimension_numbers = #tpu.dot_dimension_numbers<[1], [0], [0], [1], [0, 0, 1, 1], [], []>} : vector<8x128xf32>, vector<128x128xf32>, vector<8x128xf32> -> vector<8x128xf32>
    %45 = arith.addf %36, %44 : vector<8x128xf32>
    %46 = math.tanh %45 : vector<8x128xf32>
    %47 = arith.mulf %46, %43 : vector<8x128xf32>
    %48 = vector.extract_strided_slice %47 {offsets = [0, 0], sizes = [8, 64], strides = [1, 1]} : vector<8x128xf32> to vector<8x64xf32>
    %49 = arith.index_cast %c0_i32 : i32 to index
    %c0_35 = arith.constant 0 : index
    %c0_36 = arith.constant 0 : index
    %50 = vector.load %arg17[%49, %c0_35, %c0_36] : memref<16x8x64xf32, #tpu.memory_space<vmem>>, vector<1x8x64xf32>
    %51 = vector.shape_cast %50 : vector<1x8x64xf32> to vector<8x64xf32>
    %52 = vector.shape_cast %48 : vector<8x64xf32> to vector<1x8x64xf32>
    tpu.vector_store %arg17[%49, %c0_35, %c0_36], %52 {strides = array<i32>} : memref<16x8x64xf32, #tpu.memory_space<vmem>>, vector<1x8x64xf32>,
    %53 = vector.extract_strided_slice %47 {offsets = [0, 64], sizes = [8, 64], strides = [1, 1]} : vector<8x128xf32> to vector<8x64xf32>
    %54 = arith.index_cast %29 : i32 to index
    %c0_37 = arith.constant 0 : index
    %c0_38 = arith.constant 0 : index
    %55 = vector.load %arg18[%54, %c0_37, %c0_38] : memref<16x8x64xf32, #tpu.memory_space<vmem>>, vector<1x8x64xf32>
    %56 = vector.shape_cast %55 : vector<1x8x64xf32> to vector<8x64xf32>
    %57 = vector.shape_cast %53 : vector<8x64xf32> to vector<1x8x64xf32>
    tpu.vector_store %arg18[%54, %c0_37, %c0_38], %57 {strides = array<i32>} : memref<16x8x64xf32, #tpu.memory_space<vmem>>, vector<1x8x64xf32>,
    %c1_i32 = arith.constant 1 : i32
    %c15_i32_39 = arith.constant 15 : i32
    %58 = arith.subi %c15_i32_39, %c1_i32 : i32
    %59 = arith.index_cast %c1_i32 : i32 to index
    %c0_40 = arith.constant 0 : index
    %c0_41 = arith.constant 0 : index
    %60 = vector.load %arg15[%59, %c0_40, %c0_41] : memref<16x8x64xf32, #tpu.memory_space<vmem>>, vector<1x8x64xf32>
    %61 = vector.shape_cast %60 : vector<1x8x64xf32> to vector<8x64xf32>
    %62 = arith.index_cast %58 : i32 to index
    %c0_42 = arith.constant 0 : index
    %c0_43 = arith.constant 0 : index
    %63 = vector.load %arg16[%62, %c0_42, %c0_43] : memref<16x8x64xf32, #tpu.memory_space<vmem>>, vector<1x8x64xf32>
    %64 = vector.shape_cast %63 : vector<1x8x64xf32> to vector<8x64xf32>
    %65 = tpu.concatenate %61, %64 in 1 : vector<8x64xf32>, vector<8x64xf32> -> vector<8x128xf32>
    %66 = arith.index_cast %c1_i32 : i32 to index
    %c0_44 = arith.constant 0 : index
    %c0_45 = arith.constant 0 : index
    %67 = vector.load %arg13[%66, %c0_44, %c0_45] : memref<16x8x64xf32, #tpu.memory_space<vmem>>, vector<1x8x64xf32>
    %68 = vector.shape_cast %67 : vector<1x8x64xf32> to vector<8x64xf32>
    %69 = arith.index_cast %58 : i32 to index
    %c0_46 = arith.constant 0 : index
    %c0_47 = arith.constant 0 : index
    %70 = vector.load %arg14[%69, %c0_46, %c0_47] : memref<16x8x64xf32, #tpu.memory_space<vmem>>, vector<1x8x64xf32>
    %71 = vector.shape_cast %70 : vector<1x8x64xf32> to vector<8x64xf32>
    %72 = tpu.concatenate %68, %71 in 1 : vector<8x64xf32>, vector<8x64xf32> -> vector<8x128xf32>
    %cst_48 = arith.constant dense<0.000000e+00> : vector<8x128xf32>
    %73 = tpu.matmul %47, %27, %cst_48 {dimension_numbers = #tpu.dot_dimension_numbers<[1], [0], [0], [1], [0, 0, 1, 1], [], []>} : vector<8x128xf32>, vector<128x128xf32>, vector<8x128xf32> -> vector<8x128xf32>
    %74 = arith.addf %65, %73 : vector<8x128xf32>
    %75 = math.tanh %74 : vector<8x128xf32>
    %76 = arith.mulf %75, %72 : vector<8x128xf32>
    %77 = vector.extract_strided_slice %76 {offsets = [0, 0], sizes = [8, 64], strides = [1, 1]} : vector<8x128xf32> to vector<8x64xf32>
    %78 = arith.index_cast %c1_i32 : i32 to index
    %c0_49 = arith.constant 0 : index
    %c0_50 = arith.constant 0 : index
    %79 = vector.load %arg17[%78, %c0_49, %c0_50] : memref<16x8x64xf32, #tpu.memory_space<vmem>>, vector<1x8x64xf32>
    %80 = vector.shape_cast %79 : vector<1x8x64xf32> to vector<8x64xf32>
    %81 = vector.shape_cast %77 : vector<8x64xf32> to vector<1x8x64xf32>
    tpu.vector_store %arg17[%78, %c0_49, %c0_50], %81 {strides = array<i32>} : memref<16x8x64xf32, #tpu.memory_space<vmem>>, vector<1x8x64xf32>,
    %82 = vector.extract_strided_slice %76 {offsets = [0, 64], sizes = [8, 64], strides = [1, 1]} : vector<8x128xf32> to vector<8x64xf32>
    %83 = arith.index_cast %58 : i32 to index
    %c0_51 = arith.constant 0 : index
    %c0_52 = arith.constant 0 : index
    %84 = vector.load %arg18[%83, %c0_51, %c0_52] : memref<16x8x64xf32, #tpu.memory_space<vmem>>, vector<1x8x64xf32>
    %85 = vector.shape_cast %84 : vector<1x8x64xf32> to vector<8x64xf32>
    %86 = vector.shape_cast %82 : vector<8x64xf32> to vector<1x8x64xf32>
    tpu.vector_store %arg18[%83, %c0_51, %c0_52], %86 {strides = array<i32>} : memref<16x8x64xf32, #tpu.memory_space<vmem>>, vector<1x8x64xf32>,
    %c2_i32 = arith.constant 2 : i32
    %c15_i32_53 = arith.constant 15 : i32
    %87 = arith.subi %c15_i32_53, %c2_i32 : i32
    %88 = arith.index_cast %c2_i32 : i32 to index
    %c0_54 = arith.constant 0 : index
    %c0_55 = arith.constant 0 : index
    %89 = vector.load %arg15[%88, %c0_54, %c0_55] : memref<16x8x64xf32, #tpu.memory_space<vmem>>, vector<1x8x64xf32>
    %90 = vector.shape_cast %89 : vector<1x8x64xf32> to vector<8x64xf32>
    %91 = arith.index_cast %87 : i32 to index
    %c0_56 = arith.constant 0 : index
    %c0_57 = arith.constant 0 : index
    %92 = vector.load %arg16[%91, %c0_56, %c0_57] : memref<16x8x64xf32, #tpu.memory_space<vmem>>, vector<1x8x64xf32>
    %93 = vector.shape_cast %92 : vector<1x8x64xf32> to vector<8x64xf32>
    %94 = tpu.concatenate %90, %93 in 1 : vector<8x64xf32>, vector<8x64xf32> -> vector<8x128xf32>
    %95 = arith.index_cast %c2_i32 : i32 to index
    %c0_58 = arith.constant 0 : index
    %c0_59 = arith.constant 0 : index
    %96 = vector.load %arg13[%95, %c0_58, %c0_59] : memref<16x8x64xf32, #tpu.memory_space<vmem>>, vector<1x8x64xf32>
    %97 = vector.shape_cast %96 : vector<1x8x64xf32> to vector<8x64xf32>
    %98 = arith.index_cast %87 : i32 to index
    %c0_60 = arith.constant 0 : index
    %c0_61 = arith.constant 0 : index
    %99 = vector.load %arg14[%98, %c0_60, %c0_61] : memref<16x8x64xf32, #tpu.memory_space<vmem>>, vector<1x8x64xf32>
    %100 = vector.shape_cast %99 : vector<1x8x64xf32> to vector<8x64xf32>
    %101 = tpu.concatenate %97, %100 in 1 : vector<8x64xf32>, vector<8x64xf32> -> vector<8x128xf32>
    %cst_62 = arith.constant dense<0.000000e+00> : vector<8x128xf32>
    %102 = tpu.matmul %76, %27, %cst_62 {dimension_numbers = #tpu.dot_dimension_numbers<[1], [0], [0], [1], [0, 0, 1, 1], [], []>} : vector<8x128xf32>, vector<128x128xf32>, vector<8x128xf32> -> vector<8x128xf32>
    %103 = arith.addf %94, %102 : vector<8x128xf32>
    %104 = math.tanh %103 : vector<8x128xf32>
    %105 = arith.mulf %104, %101 : vector<8x128xf32>
    %106 = vector.extract_strided_slice %105 {offsets = [0, 0], sizes = [8, 64], strides = [1, 1]} : vector<8x128xf32> to vector<8x64xf32>
    %107 = arith.index_cast %c2_i32 : i32 to index
    %c0_63 = arith.constant 0 : index
    %c0_64 = arith.constant 0 : index
    %108 = vector.load %arg17[%107, %c0_63, %c0_64] : memref<16x8x64xf32, #tpu.memory_space<vmem>>, vector<1x8x64xf32>
    %109 = vector.shape_cast %108 : vector<1x8x64xf32> to vector<8x64xf32>
    %110 = vector.shape_cast %106 : vector<8x64xf32> to vector<1x8x64xf32>
    tpu.vector_store %arg17[%107, %c0_63, %c0_64], %110 {strides = array<i32>} : memref<16x8x64xf32, #tpu.memory_space<vmem>>, vector<1x8x64xf32>,
    %111 = vector.extract_strided_slice %105 {offsets = [0, 64], sizes = [8, 64], strides = [1, 1]} : vector<8x128xf32> to vector<8x64xf32>
    %112 = arith.index_cast %87 : i32 to index
    %c0_65 = arith.constant 0 : index
    %c0_66 = arith.constant 0 : index
    %113 = vector.load %arg18[%112, %c0_65, %c0_66] : memref<16x8x64xf32, #tpu.memory_space<vmem>>, vector<1x8x64xf32>
    %114 = vector.shape_cast %113 : vector<1x8x64xf32> to vector<8x64xf32>
    %115 = vector.shape_cast %111 : vector<8x64xf32> to vector<1x8x64xf32>
    tpu.vector_store %arg18[%112, %c0_65, %c0_66], %115 {strides = array<i32>} : memref<16x8x64xf32, #tpu.memory_space<vmem>>, vector<1x8x64xf32>,
    %c3_i32 = arith.constant 3 : i32
    %c15_i32_67 = arith.constant 15 : i32
    %116 = arith.subi %c15_i32_67, %c3_i32 : i32
    %117 = arith.index_cast %c3_i32 : i32 to index
    %c0_68 = arith.constant 0 : index
    %c0_69 = arith.constant 0 : index
    %118 = vector.load %arg15[%117, %c0_68, %c0_69] : memref<16x8x64xf32, #tpu.memory_space<vmem>>, vector<1x8x64xf32>
    %119 = vector.shape_cast %118 : vector<1x8x64xf32> to vector<8x64xf32>
    %120 = arith.index_cast %116 : i32 to index
    %c0_70 = arith.constant 0 : index
    %c0_71 = arith.constant 0 : index
    %121 = vector.load %arg16[%120, %c0_70, %c0_71] : memref<16x8x64xf32, #tpu.memory_space<vmem>>, vector<1x8x64xf32>
    %122 = vector.shape_cast %121 : vector<1x8x64xf32> to vector<8x64xf32>
    %123 = tpu.concatenate %119, %122 in 1 : vector<8x64xf32>, vector<8x64xf32> -> vector<8x128xf32>
    %124 = arith.index_cast %c3_i32 : i32 to index
    %c0_72 = arith.constant 0 : index
    %c0_73 = arith.constant 0 : index
    %125 = vector.load %arg13[%124, %c0_72, %c0_73] : memref<16x8x64xf32, #tpu.memory_space<vmem>>, vector<1x8x64xf32>
    %126 = vector.shape_cast %125 : vector<1x8x64xf32> to vector<8x64xf32>
    %127 = arith.index_cast %116 : i32 to index
    %c0_74 = arith.constant 0 : index
    %c0_75 = arith.constant 0 : index
    %128 = vector.load %arg14[%127, %c0_74, %c0_75] : memref<16x8x64xf32, #tpu.memory_space<vmem>>, vector<1x8x64xf32>
    %129 = vector.shape_cast %128 : vector<1x8x64xf32> to vector<8x64xf32>
    %130 = tpu.concatenate %126, %129 in 1 : vector<8x64xf32>, vector<8x64xf32> -> vector<8x128xf32>
    %cst_76 = arith.constant dense<0.000000e+00> : vector<8x128xf32>
    %131 = tpu.matmul %105, %27, %cst_76 {dimension_numbers = #tpu.dot_dimension_numbers<[1], [0], [0], [1], [0, 0, 1, 1], [], []>} : vector<8x128xf32>, vector<128x128xf32>, vector<8x128xf32> -> vector<8x128xf32>
    %132 = arith.addf %123, %131 : vector<8x128xf32>
    %133 = math.tanh %132 : vector<8x128xf32>
    %134 = arith.mulf %133, %130 : vector<8x128xf32>
    %135 = vector.extract_strided_slice %134 {offsets = [0, 0], sizes = [8, 64], strides = [1, 1]} : vector<8x128xf32> to vector<8x64xf32>
    %136 = arith.index_cast %c3_i32 : i32 to index
    %c0_77 = arith.constant 0 : index
    %c0_78 = arith.constant 0 : index
    %137 = vector.load %arg17[%136, %c0_77, %c0_78] : memref<16x8x64xf32, #tpu.memory_space<vmem>>, vector<1x8x64xf32>
    %138 = vector.shape_cast %137 : vector<1x8x64xf32> to vector<8x64xf32>
    %139 = vector.shape_cast %135 : vector<8x64xf32> to vector<1x8x64xf32>
    tpu.vector_store %arg17[%136, %c0_77, %c0_78], %139 {strides = array<i32>} : memref<16x8x64xf32, #tpu.memory_space<vmem>>, vector<1x8x64xf32>,
    %140 = vector.extract_strided_slice %134 {offsets = [0, 64], sizes = [8, 64], strides = [1, 1]} : vector<8x128xf32> to vector<8x64xf32>
    %141 = arith.index_cast %116 : i32 to index
    %c0_79 = arith.constant 0 : index
    %c0_80 = arith.constant 0 : index
    %142 = vector.load %arg18[%141, %c0_79, %c0_80] : memref<16x8x64xf32, #tpu.memory_space<vmem>>, vector<1x8x64xf32>
    %143 = vector.shape_cast %142 : vector<1x8x64xf32> to vector<8x64xf32>
    %144 = vector.shape_cast %140 : vector<8x64xf32> to vector<1x8x64xf32>
    tpu.vector_store %arg18[%141, %c0_79, %c0_80], %144 {strides = array<i32>} : memref<16x8x64xf32, #tpu.memory_space<vmem>>, vector<1x8x64xf32>,
    %c4_i32 = arith.constant 4 : i32
    %c15_i32_81 = arith.constant 15 : i32
    %145 = arith.subi %c15_i32_81, %c4_i32 : i32
    %146 = arith.index_cast %c4_i32 : i32 to index
    %c0_82 = arith.constant 0 : index
    %c0_83 = arith.constant 0 : index
    %147 = vector.load %arg15[%146, %c0_82, %c0_83] : memref<16x8x64xf32, #tpu.memory_space<vmem>>, vector<1x8x64xf32>
    %148 = vector.shape_cast %147 : vector<1x8x64xf32> to vector<8x64xf32>
    %149 = arith.index_cast %145 : i32 to index
    %c0_84 = arith.constant 0 : index
    %c0_85 = arith.constant 0 : index
    %150 = vector.load %arg16[%149, %c0_84, %c0_85] : memref<16x8x64xf32, #tpu.memory_space<vmem>>, vector<1x8x64xf32>
    %151 = vector.shape_cast %150 : vector<1x8x64xf32> to vector<8x64xf32>
    %152 = tpu.concatenate %148, %151 in 1 : vector<8x64xf32>, vector<8x64xf32> -> vector<8x128xf32>
    %153 = arith.index_cast %c4_i32 : i32 to index
    %c0_86 = arith.constant 0 : index
    %c0_87 = arith.constant 0 : index
    %154 = vector.load %arg13[%153, %c0_86, %c0_87] : memref<16x8x64xf32, #tpu.memory_space<vmem>>, vector<1x8x64xf32>
    %155 = vector.shape_cast %154 : vector<1x8x64xf32> to vector<8x64xf32>
    %156 = arith.index_cast %145 : i32 to index
    %c0_88 = arith.constant 0 : index
    %c0_89 = arith.constant 0 : index
    %157 = vector.load %arg14[%156, %c0_88, %c0_89] : memref<16x8x64xf32, #tpu.memory_space<vmem>>, vector<1x8x64xf32>
    %158 = vector.shape_cast %157 : vector<1x8x64xf32> to vector<8x64xf32>
    %159 = tpu.concatenate %155, %158 in 1 : vector<8x64xf32>, vector<8x64xf32> -> vector<8x128xf32>
    %cst_90 = arith.constant dense<0.000000e+00> : vector<8x128xf32>
    %160 = tpu.matmul %134, %27, %cst_90 {dimension_numbers = #tpu.dot_dimension_numbers<[1], [0], [0], [1], [0, 0, 1, 1], [], []>} : vector<8x128xf32>, vector<128x128xf32>, vector<8x128xf32> -> vector<8x128xf32>
    %161 = arith.addf %152, %160 : vector<8x128xf32>
    %162 = math.tanh %161 : vector<8x128xf32>
    %163 = arith.mulf %162, %159 : vector<8x128xf32>
    %164 = vector.extract_strided_slice %163 {offsets = [0, 0], sizes = [8, 64], strides = [1, 1]} : vector<8x128xf32> to vector<8x64xf32>
    %165 = arith.index_cast %c4_i32 : i32 to index
    %c0_91 = arith.constant 0 : index
    %c0_92 = arith.constant 0 : index
    %166 = vector.load %arg17[%165, %c0_91, %c0_92] : memref<16x8x64xf32, #tpu.memory_space<vmem>>, vector<1x8x64xf32>
    %167 = vector.shape_cast %166 : vector<1x8x64xf32> to vector<8x64xf32>
    %168 = vector.shape_cast %164 : vector<8x64xf32> to vector<1x8x64xf32>
    tpu.vector_store %arg17[%165, %c0_91, %c0_92], %168 {strides = array<i32>} : memref<16x8x64xf32, #tpu.memory_space<vmem>>, vector<1x8x64xf32>,
    %169 = vector.extract_strided_slice %163 {offsets = [0, 64], sizes = [8, 64], strides = [1, 1]} : vector<8x128xf32> to vector<8x64xf32>
    %170 = arith.index_cast %145 : i32 to index
    %c0_93 = arith.constant 0 : index
    %c0_94 = arith.constant 0 : index
    %171 = vector.load %arg18[%170, %c0_93, %c0_94] : memref<16x8x64xf32, #tpu.memory_space<vmem>>, vector<1x8x64xf32>
    %172 = vector.shape_cast %171 : vector<1x8x64xf32> to vector<8x64xf32>
    %173 = vector.shape_cast %169 : vector<8x64xf32> to vector<1x8x64xf32>
    tpu.vector_store %arg18[%170, %c0_93, %c0_94], %173 {strides = array<i32>} : memref<16x8x64xf32, #tpu.memory_space<vmem>>, vector<1x8x64xf32>,
    %c5_i32 = arith.constant 5 : i32
    %c15_i32_95 = arith.constant 15 : i32
    %174 = arith.subi %c15_i32_95, %c5_i32 : i32
    %175 = arith.index_cast %c5_i32 : i32 to index
    %c0_96 = arith.constant 0 : index
    %c0_97 = arith.constant 0 : index
    %176 = vector.load %arg15[%175, %c0_96, %c0_97] : memref<16x8x64xf32, #tpu.memory_space<vmem>>, vector<1x8x64xf32>
    %177 = vector.shape_cast %176 : vector<1x8x64xf32> to vector<8x64xf32>
    %178 = arith.index_cast %174 : i32 to index
    %c0_98 = arith.constant 0 : index
    %c0_99 = arith.constant 0 : index
    %179 = vector.load %arg16[%178, %c0_98, %c0_99] : memref<16x8x64xf32, #tpu.memory_space<vmem>>, vector<1x8x64xf32>
    %180 = vector.shape_cast %179 : vector<1x8x64xf32> to vector<8x64xf32>
    %181 = tpu.concatenate %177, %180 in 1 : vector<8x64xf32>, vector<8x64xf32> -> vector<8x128xf32>
    %182 = arith.index_cast %c5_i32 : i32 to index
    %c0_100 = arith.constant 0 : index
    %c0_101 = arith.constant 0 : index
    %183 = vector.load %arg13[%182, %c0_100, %c0_101] : memref<16x8x64xf32, #tpu.memory_space<vmem>>, vector<1x8x64xf32>
    %184 = vector.shape_cast %183 : vector<1x8x64xf32> to vector<8x64xf32>
    %185 = arith.index_cast %174 : i32 to index
    %c0_102 = arith.constant 0 : index
    %c0_103 = arith.constant 0 : index
    %186 = vector.load %arg14[%185, %c0_102, %c0_103] : memref<16x8x64xf32, #tpu.memory_space<vmem>>, vector<1x8x64xf32>
    %187 = vector.shape_cast %186 : vector<1x8x64xf32> to vector<8x64xf32>
    %188 = tpu.concatenate %184, %187 in 1 : vector<8x64xf32>, vector<8x64xf32> -> vector<8x128xf32>
    %cst_104 = arith.constant dense<0.000000e+00> : vector<8x128xf32>
    %189 = tpu.matmul %163, %27, %cst_104 {dimension_numbers = #tpu.dot_dimension_numbers<[1], [0], [0], [1], [0, 0, 1, 1], [], []>} : vector<8x128xf32>, vector<128x128xf32>, vector<8x128xf32> -> vector<8x128xf32>
    %190 = arith.addf %181, %189 : vector<8x128xf32>
    %191 = math.tanh %190 : vector<8x128xf32>
    %192 = arith.mulf %191, %188 : vector<8x128xf32>
    %193 = vector.extract_strided_slice %192 {offsets = [0, 0], sizes = [8, 64], strides = [1, 1]} : vector<8x128xf32> to vector<8x64xf32>
    %194 = arith.index_cast %c5_i32 : i32 to index
    %c0_105 = arith.constant 0 : index
    %c0_106 = arith.constant 0 : index
    %195 = vector.load %arg17[%194, %c0_105, %c0_106] : memref<16x8x64xf32, #tpu.memory_space<vmem>>, vector<1x8x64xf32>
    %196 = vector.shape_cast %195 : vector<1x8x64xf32> to vector<8x64xf32>
    %197 = vector.shape_cast %193 : vector<8x64xf32> to vector<1x8x64xf32>
    tpu.vector_store %arg17[%194, %c0_105, %c0_106], %197 {strides = array<i32>} : memref<16x8x64xf32, #tpu.memory_space<vmem>>, vector<1x8x64xf32>,
    %198 = vector.extract_strided_slice %192 {offsets = [0, 64], sizes = [8, 64], strides = [1, 1]} : vector<8x128xf32> to vector<8x64xf32>
    %199 = arith.index_cast %174 : i32 to index
    %c0_107 = arith.constant 0 : index
    %c0_108 = arith.constant 0 : index
    %200 = vector.load %arg18[%199, %c0_107, %c0_108] : memref<16x8x64xf32, #tpu.memory_space<vmem>>, vector<1x8x64xf32>
    %201 = vector.shape_cast %200 : vector<1x8x64xf32> to vector<8x64xf32>
    %202 = vector.shape_cast %198 : vector<8x64xf32> to vector<1x8x64xf32>
    tpu.vector_store %arg18[%199, %c0_107, %c0_108], %202 {strides = array<i32>} : memref<16x8x64xf32, #tpu.memory_space<vmem>>, vector<1x8x64xf32>,
    %c6_i32 = arith.constant 6 : i32
    %c15_i32_109 = arith.constant 15 : i32
    %203 = arith.subi %c15_i32_109, %c6_i32 : i32
    %204 = arith.index_cast %c6_i32 : i32 to index
    %c0_110 = arith.constant 0 : index
    %c0_111 = arith.constant 0 : index
    %205 = vector.load %arg15[%204, %c0_110, %c0_111] : memref<16x8x64xf32, #tpu.memory_space<vmem>>, vector<1x8x64xf32>
    %206 = vector.shape_cast %205 : vector<1x8x64xf32> to vector<8x64xf32>
    %207 = arith.index_cast %203 : i32 to index
    %c0_112 = arith.constant 0 : index
    %c0_113 = arith.constant 0 : index
    %208 = vector.load %arg16[%207, %c0_112, %c0_113] : memref<16x8x64xf32, #tpu.memory_space<vmem>>, vector<1x8x64xf32>
    %209 = vector.shape_cast %208 : vector<1x8x64xf32> to vector<8x64xf32>
    %210 = tpu.concatenate %206, %209 in 1 : vector<8x64xf32>, vector<8x64xf32> -> vector<8x128xf32>
    %211 = arith.index_cast %c6_i32 : i32 to index
    %c0_114 = arith.constant 0 : index
    %c0_115 = arith.constant 0 : index
    %212 = vector.load %arg13[%211, %c0_114, %c0_115] : memref<16x8x64xf32, #tpu.memory_space<vmem>>, vector<1x8x64xf32>
    %213 = vector.shape_cast %212 : vector<1x8x64xf32> to vector<8x64xf32>
    %214 = arith.index_cast %203 : i32 to index
    %c0_116 = arith.constant 0 : index
    %c0_117 = arith.constant 0 : index
    %215 = vector.load %arg14[%214, %c0_116, %c0_117] : memref<16x8x64xf32, #tpu.memory_space<vmem>>, vector<1x8x64xf32>
    %216 = vector.shape_cast %215 : vector<1x8x64xf32> to vector<8x64xf32>
    %217 = tpu.concatenate %213, %216 in 1 : vector<8x64xf32>, vector<8x64xf32> -> vector<8x128xf32>
    %cst_118 = arith.constant dense<0.000000e+00> : vector<8x128xf32>
    %218 = tpu.matmul %192, %27, %cst_118 {dimension_numbers = #tpu.dot_dimension_numbers<[1], [0], [0], [1], [0, 0, 1, 1], [], []>} : vector<8x128xf32>, vector<128x128xf32>, vector<8x128xf32> -> vector<8x128xf32>
    %219 = arith.addf %210, %218 : vector<8x128xf32>
    %220 = math.tanh %219 : vector<8x128xf32>
    %221 = arith.mulf %220, %217 : vector<8x128xf32>
    %222 = vector.extract_strided_slice %221 {offsets = [0, 0], sizes = [8, 64], strides = [1, 1]} : vector<8x128xf32> to vector<8x64xf32>
    %223 = arith.index_cast %c6_i32 : i32 to index
    %c0_119 = arith.constant 0 : index
    %c0_120 = arith.constant 0 : index
    %224 = vector.load %arg17[%223, %c0_119, %c0_120] : memref<16x8x64xf32, #tpu.memory_space<vmem>>, vector<1x8x64xf32>
    %225 = vector.shape_cast %224 : vector<1x8x64xf32> to vector<8x64xf32>
    %226 = vector.shape_cast %222 : vector<8x64xf32> to vector<1x8x64xf32>
    tpu.vector_store %arg17[%223, %c0_119, %c0_120], %226 {strides = array<i32>} : memref<16x8x64xf32, #tpu.memory_space<vmem>>, vector<1x8x64xf32>,
    %227 = vector.extract_strided_slice %221 {offsets = [0, 64], sizes = [8, 64], strides = [1, 1]} : vector<8x128xf32> to vector<8x64xf32>
    %228 = arith.index_cast %203 : i32 to index
    %c0_121 = arith.constant 0 : index
    %c0_122 = arith.constant 0 : index
    %229 = vector.load %arg18[%228, %c0_121, %c0_122] : memref<16x8x64xf32, #tpu.memory_space<vmem>>, vector<1x8x64xf32>
    %230 = vector.shape_cast %229 : vector<1x8x64xf32> to vector<8x64xf32>
    %231 = vector.shape_cast %227 : vector<8x64xf32> to vector<1x8x64xf32>
    tpu.vector_store %arg18[%228, %c0_121, %c0_122], %231 {strides = array<i32>} : memref<16x8x64xf32, #tpu.memory_space<vmem>>, vector<1x8x64xf32>,
    %c7_i32 = arith.constant 7 : i32
    %c15_i32_123 = arith.constant 15 : i32
    %232 = arith.subi %c15_i32_123, %c7_i32 : i32
    %233 = arith.index_cast %c7_i32 : i32 to index
    %c0_124 = arith.constant 0 : index
    %c0_125 = arith.constant 0 : index
    %234 = vector.load %arg15[%233, %c0_124, %c0_125] : memref<16x8x64xf32, #tpu.memory_space<vmem>>, vector<1x8x64xf32>
    %235 = vector.shape_cast %234 : vector<1x8x64xf32> to vector<8x64xf32>
    %236 = arith.index_cast %232 : i32 to index
    %c0_126 = arith.constant 0 : index
    %c0_127 = arith.constant 0 : index
    %237 = vector.load %arg16[%236, %c0_126, %c0_127] : memref<16x8x64xf32, #tpu.memory_space<vmem>>, vector<1x8x64xf32>
    %238 = vector.shape_cast %237 : vector<1x8x64xf32> to vector<8x64xf32>
    %239 = tpu.concatenate %235, %238 in 1 : vector<8x64xf32>, vector<8x64xf32> -> vector<8x128xf32>
    %240 = arith.index_cast %c7_i32 : i32 to index
    %c0_128 = arith.constant 0 : index
    %c0_129 = arith.constant 0 : index
    %241 = vector.load %arg13[%240, %c0_128, %c0_129] : memref<16x8x64xf32, #tpu.memory_space<vmem>>, vector<1x8x64xf32>
    %242 = vector.shape_cast %241 : vector<1x8x64xf32> to vector<8x64xf32>
    %243 = arith.index_cast %232 : i32 to index
    %c0_130 = arith.constant 0 : index
    %c0_131 = arith.constant 0 : index
    %244 = vector.load %arg14[%243, %c0_130, %c0_131] : memref<16x8x64xf32, #tpu.memory_space<vmem>>, vector<1x8x64xf32>
    %245 = vector.shape_cast %244 : vector<1x8x64xf32> to vector<8x64xf32>
    %246 = tpu.concatenate %242, %245 in 1 : vector<8x64xf32>, vector<8x64xf32> -> vector<8x128xf32>
    %cst_132 = arith.constant dense<0.000000e+00> : vector<8x128xf32>
    %247 = tpu.matmul %221, %27, %cst_132 {dimension_numbers = #tpu.dot_dimension_numbers<[1], [0], [0], [1], [0, 0, 1, 1], [], []>} : vector<8x128xf32>, vector<128x128xf32>, vector<8x128xf32> -> vector<8x128xf32>
    %248 = arith.addf %239, %247 : vector<8x128xf32>
    %249 = math.tanh %248 : vector<8x128xf32>
    %250 = arith.mulf %249, %246 : vector<8x128xf32>
    %251 = vector.extract_strided_slice %250 {offsets = [0, 0], sizes = [8, 64], strides = [1, 1]} : vector<8x128xf32> to vector<8x64xf32>
    %252 = arith.index_cast %c7_i32 : i32 to index
    %c0_133 = arith.constant 0 : index
    %c0_134 = arith.constant 0 : index
    %253 = vector.load %arg17[%252, %c0_133, %c0_134] : memref<16x8x64xf32, #tpu.memory_space<vmem>>, vector<1x8x64xf32>
    %254 = vector.shape_cast %253 : vector<1x8x64xf32> to vector<8x64xf32>
    %255 = vector.shape_cast %251 : vector<8x64xf32> to vector<1x8x64xf32>
    tpu.vector_store %arg17[%252, %c0_133, %c0_134], %255 {strides = array<i32>} : memref<16x8x64xf32, #tpu.memory_space<vmem>>, vector<1x8x64xf32>,
    %256 = vector.extract_strided_slice %250 {offsets = [0, 64], sizes = [8, 64], strides = [1, 1]} : vector<8x128xf32> to vector<8x64xf32>
    %257 = arith.index_cast %232 : i32 to index
    %c0_135 = arith.constant 0 : index
    %c0_136 = arith.constant 0 : index
    %258 = vector.load %arg18[%257, %c0_135, %c0_136] : memref<16x8x64xf32, #tpu.memory_space<vmem>>, vector<1x8x64xf32>
    %259 = vector.shape_cast %258 : vector<1x8x64xf32> to vector<8x64xf32>
    %260 = vector.shape_cast %256 : vector<8x64xf32> to vector<1x8x64xf32>
    tpu.vector_store %arg18[%257, %c0_135, %c0_136], %260 {strides = array<i32>} : memref<16x8x64xf32, #tpu.memory_space<vmem>>, vector<1x8x64xf32>,
    %c8_i32 = arith.constant 8 : i32
    %c15_i32_137 = arith.constant 15 : i32
    %261 = arith.subi %c15_i32_137, %c8_i32 : i32
    %262 = arith.index_cast %c8_i32 : i32 to index
    %c0_138 = arith.constant 0 : index
    %c0_139 = arith.constant 0 : index
    %263 = vector.load %arg15[%262, %c0_138, %c0_139] : memref<16x8x64xf32, #tpu.memory_space<vmem>>, vector<1x8x64xf32>
    %264 = vector.shape_cast %263 : vector<1x8x64xf32> to vector<8x64xf32>
    %265 = arith.index_cast %261 : i32 to index
    %c0_140 = arith.constant 0 : index
    %c0_141 = arith.constant 0 : index
    %266 = vector.load %arg16[%265, %c0_140, %c0_141] : memref<16x8x64xf32, #tpu.memory_space<vmem>>, vector<1x8x64xf32>
    %267 = vector.shape_cast %266 : vector<1x8x64xf32> to vector<8x64xf32>
    %268 = tpu.concatenate %264, %267 in 1 : vector<8x64xf32>, vector<8x64xf32> -> vector<8x128xf32>
    %269 = arith.index_cast %c8_i32 : i32 to index
    %c0_142 = arith.constant 0 : index
    %c0_143 = arith.constant 0 : index
    %270 = vector.load %arg13[%269, %c0_142, %c0_143] : memref<16x8x64xf32, #tpu.memory_space<vmem>>, vector<1x8x64xf32>
    %271 = vector.shape_cast %270 : vector<1x8x64xf32> to vector<8x64xf32>
    %272 = arith.index_cast %261 : i32 to index
    %c0_144 = arith.constant 0 : index
    %c0_145 = arith.constant 0 : index
    %273 = vector.load %arg14[%272, %c0_144, %c0_145] : memref<16x8x64xf32, #tpu.memory_space<vmem>>, vector<1x8x64xf32>
    %274 = vector.shape_cast %273 : vector<1x8x64xf32> to vector<8x64xf32>
    %275 = tpu.concatenate %271, %274 in 1 : vector<8x64xf32>, vector<8x64xf32> -> vector<8x128xf32>
    %cst_146 = arith.constant dense<0.000000e+00> : vector<8x128xf32>
    %276 = tpu.matmul %250, %27, %cst_146 {dimension_numbers = #tpu.dot_dimension_numbers<[1], [0], [0], [1], [0, 0, 1, 1], [], []>} : vector<8x128xf32>, vector<128x128xf32>, vector<8x128xf32> -> vector<8x128xf32>
    %277 = arith.addf %268, %276 : vector<8x128xf32>
    %278 = math.tanh %277 : vector<8x128xf32>
    %279 = arith.mulf %278, %275 : vector<8x128xf32>
    %280 = vector.extract_strided_slice %279 {offsets = [0, 0], sizes = [8, 64], strides = [1, 1]} : vector<8x128xf32> to vector<8x64xf32>
    %281 = arith.index_cast %c8_i32 : i32 to index
    %c0_147 = arith.constant 0 : index
    %c0_148 = arith.constant 0 : index
    %282 = vector.load %arg17[%281, %c0_147, %c0_148] : memref<16x8x64xf32, #tpu.memory_space<vmem>>, vector<1x8x64xf32>
    %283 = vector.shape_cast %282 : vector<1x8x64xf32> to vector<8x64xf32>
    %284 = vector.shape_cast %280 : vector<8x64xf32> to vector<1x8x64xf32>
    tpu.vector_store %arg17[%281, %c0_147, %c0_148], %284 {strides = array<i32>} : memref<16x8x64xf32, #tpu.memory_space<vmem>>, vector<1x8x64xf32>,
    %285 = vector.extract_strided_slice %279 {offsets = [0, 64], sizes = [8, 64], strides = [1, 1]} : vector<8x128xf32> to vector<8x64xf32>
    %286 = arith.index_cast %261 : i32 to index
    %c0_149 = arith.constant 0 : index
    %c0_150 = arith.constant 0 : index
    %287 = vector.load %arg18[%286, %c0_149, %c0_150] : memref<16x8x64xf32, #tpu.memory_space<vmem>>, vector<1x8x64xf32>
    %288 = vector.shape_cast %287 : vector<1x8x64xf32> to vector<8x64xf32>
    %289 = vector.shape_cast %285 : vector<8x64xf32> to vector<1x8x64xf32>
    tpu.vector_store %arg18[%286, %c0_149, %c0_150], %289 {strides = array<i32>} : memref<16x8x64xf32, #tpu.memory_space<vmem>>, vector<1x8x64xf32>,
    %c9_i32 = arith.constant 9 : i32
    %c15_i32_151 = arith.constant 15 : i32
    %290 = arith.subi %c15_i32_151, %c9_i32 : i32
    %291 = arith.index_cast %c9_i32 : i32 to index
    %c0_152 = arith.constant 0 : index
    %c0_153 = arith.constant 0 : index
    %292 = vector.load %arg15[%291, %c0_152, %c0_153] : memref<16x8x64xf32, #tpu.memory_space<vmem>>, vector<1x8x64xf32>
    %293 = vector.shape_cast %292 : vector<1x8x64xf32> to vector<8x64xf32>
    %294 = arith.index_cast %290 : i32 to index
    %c0_154 = arith.constant 0 : index
    %c0_155 = arith.constant 0 : index
    %295 = vector.load %arg16[%294, %c0_154, %c0_155] : memref<16x8x64xf32, #tpu.memory_space<vmem>>, vector<1x8x64xf32>
    %296 = vector.shape_cast %295 : vector<1x8x64xf32> to vector<8x64xf32>
    %297 = tpu.concatenate %293, %296 in 1 : vector<8x64xf32>, vector<8x64xf32> -> vector<8x128xf32>
    %298 = arith.index_cast %c9_i32 : i32 to index
    %c0_156 = arith.constant 0 : index
    %c0_157 = arith.constant 0 : index
    %299 = vector.load %arg13[%298, %c0_156, %c0_157] : memref<16x8x64xf32, #tpu.memory_space<vmem>>, vector<1x8x64xf32>
    %300 = vector.shape_cast %299 : vector<1x8x64xf32> to vector<8x64xf32>
    %301 = arith.index_cast %290 : i32 to index
    %c0_158 = arith.constant 0 : index
    %c0_159 = arith.constant 0 : index
    %302 = vector.load %arg14[%301, %c0_158, %c0_159] : memref<16x8x64xf32, #tpu.memory_space<vmem>>, vector<1x8x64xf32>
    %303 = vector.shape_cast %302 : vector<1x8x64xf32> to vector<8x64xf32>
    %304 = tpu.concatenate %300, %303 in 1 : vector<8x64xf32>, vector<8x64xf32> -> vector<8x128xf32>
    %cst_160 = arith.constant dense<0.000000e+00> : vector<8x128xf32>
    %305 = tpu.matmul %279, %27, %cst_160 {dimension_numbers = #tpu.dot_dimension_numbers<[1], [0], [0], [1], [0, 0, 1, 1], [], []>} : vector<8x128xf32>, vector<128x128xf32>, vector<8x128xf32> -> vector<8x128xf32>
    %306 = arith.addf %297, %305 : vector<8x128xf32>
    %307 = math.tanh %306 : vector<8x128xf32>
    %308 = arith.mulf %307, %304 : vector<8x128xf32>
    %309 = vector.extract_strided_slice %308 {offsets = [0, 0], sizes = [8, 64], strides = [1, 1]} : vector<8x128xf32> to vector<8x64xf32>
    %310 = arith.index_cast %c9_i32 : i32 to index
    %c0_161 = arith.constant 0 : index
    %c0_162 = arith.constant 0 : index
    %311 = vector.load %arg17[%310, %c0_161, %c0_162] : memref<16x8x64xf32, #tpu.memory_space<vmem>>, vector<1x8x64xf32>
    %312 = vector.shape_cast %311 : vector<1x8x64xf32> to vector<8x64xf32>
    %313 = vector.shape_cast %309 : vector<8x64xf32> to vector<1x8x64xf32>
    tpu.vector_store %arg17[%310, %c0_161, %c0_162], %313 {strides = array<i32>} : memref<16x8x64xf32, #tpu.memory_space<vmem>>, vector<1x8x64xf32>,
    %314 = vector.extract_strided_slice %308 {offsets = [0, 64], sizes = [8, 64], strides = [1, 1]} : vector<8x128xf32> to vector<8x64xf32>
    %315 = arith.index_cast %290 : i32 to index
    %c0_163 = arith.constant 0 : index
    %c0_164 = arith.constant 0 : index
    %316 = vector.load %arg18[%315, %c0_163, %c0_164] : memref<16x8x64xf32, #tpu.memory_space<vmem>>, vector<1x8x64xf32>
    %317 = vector.shape_cast %316 : vector<1x8x64xf32> to vector<8x64xf32>
    %318 = vector.shape_cast %314 : vector<8x64xf32> to vector<1x8x64xf32>
    tpu.vector_store %arg18[%315, %c0_163, %c0_164], %318 {strides = array<i32>} : memref<16x8x64xf32, #tpu.memory_space<vmem>>, vector<1x8x64xf32>,
    %c10_i32 = arith.constant 10 : i32
    %c15_i32_165 = arith.constant 15 : i32
    %319 = arith.subi %c15_i32_165, %c10_i32 : i32
    %320 = arith.index_cast %c10_i32 : i32 to index
    %c0_166 = arith.constant 0 : index
    %c0_167 = arith.constant 0 : index
    %321 = vector.load %arg15[%320, %c0_166, %c0_167] : memref<16x8x64xf32, #tpu.memory_space<vmem>>, vector<1x8x64xf32>
    %322 = vector.shape_cast %321 : vector<1x8x64xf32> to vector<8x64xf32>
    %323 = arith.index_cast %319 : i32 to index
    %c0_168 = arith.constant 0 : index
    %c0_169 = arith.constant 0 : index
    %324 = vector.load %arg16[%323, %c0_168, %c0_169] : memref<16x8x64xf32, #tpu.memory_space<vmem>>, vector<1x8x64xf32>
    %325 = vector.shape_cast %324 : vector<1x8x64xf32> to vector<8x64xf32>
    %326 = tpu.concatenate %322, %325 in 1 : vector<8x64xf32>, vector<8x64xf32> -> vector<8x128xf32>
    %327 = arith.index_cast %c10_i32 : i32 to index
    %c0_170 = arith.constant 0 : index
    %c0_171 = arith.constant 0 : index
    %328 = vector.load %arg13[%327, %c0_170, %c0_171] : memref<16x8x64xf32, #tpu.memory_space<vmem>>, vector<1x8x64xf32>
    %329 = vector.shape_cast %328 : vector<1x8x64xf32> to vector<8x64xf32>
    %330 = arith.index_cast %319 : i32 to index
    %c0_172 = arith.constant 0 : index
    %c0_173 = arith.constant 0 : index
    %331 = vector.load %arg14[%330, %c0_172, %c0_173] : memref<16x8x64xf32, #tpu.memory_space<vmem>>, vector<1x8x64xf32>
    %332 = vector.shape_cast %331 : vector<1x8x64xf32> to vector<8x64xf32>
    %333 = tpu.concatenate %329, %332 in 1 : vector<8x64xf32>, vector<8x64xf32> -> vector<8x128xf32>
    %cst_174 = arith.constant dense<0.000000e+00> : vector<8x128xf32>
    %334 = tpu.matmul %308, %27, %cst_174 {dimension_numbers = #tpu.dot_dimension_numbers<[1], [0], [0], [1], [0, 0, 1, 1], [], []>} : vector<8x128xf32>, vector<128x128xf32>, vector<8x128xf32> -> vector<8x128xf32>
    %335 = arith.addf %326, %334 : vector<8x128xf32>
    %336 = math.tanh %335 : vector<8x128xf32>
    %337 = arith.mulf %336, %333 : vector<8x128xf32>
    %338 = vector.extract_strided_slice %337 {offsets = [0, 0], sizes = [8, 64], strides = [1, 1]} : vector<8x128xf32> to vector<8x64xf32>
    %339 = arith.index_cast %c10_i32 : i32 to index
    %c0_175 = arith.constant 0 : index
    %c0_176 = arith.constant 0 : index
    %340 = vector.load %arg17[%339, %c0_175, %c0_176] : memref<16x8x64xf32, #tpu.memory_space<vmem>>, vector<1x8x64xf32>
    %341 = vector.shape_cast %340 : vector<1x8x64xf32> to vector<8x64xf32>
    %342 = vector.shape_cast %338 : vector<8x64xf32> to vector<1x8x64xf32>
    tpu.vector_store %arg17[%339, %c0_175, %c0_176], %342 {strides = array<i32>} : memref<16x8x64xf32, #tpu.memory_space<vmem>>, vector<1x8x64xf32>,
    %343 = vector.extract_strided_slice %337 {offsets = [0, 64], sizes = [8, 64], strides = [1, 1]} : vector<8x128xf32> to vector<8x64xf32>
    %344 = arith.index_cast %319 : i32 to index
    %c0_177 = arith.constant 0 : index
    %c0_178 = arith.constant 0 : index
    %345 = vector.load %arg18[%344, %c0_177, %c0_178] : memref<16x8x64xf32, #tpu.memory_space<vmem>>, vector<1x8x64xf32>
    %346 = vector.shape_cast %345 : vector<1x8x64xf32> to vector<8x64xf32>
    %347 = vector.shape_cast %343 : vector<8x64xf32> to vector<1x8x64xf32>
    tpu.vector_store %arg18[%344, %c0_177, %c0_178], %347 {strides = array<i32>} : memref<16x8x64xf32, #tpu.memory_space<vmem>>, vector<1x8x64xf32>,
    %c11_i32 = arith.constant 11 : i32
    %c15_i32_179 = arith.constant 15 : i32
    %348 = arith.subi %c15_i32_179, %c11_i32 : i32
    %349 = arith.index_cast %c11_i32 : i32 to index
    %c0_180 = arith.constant 0 : index
    %c0_181 = arith.constant 0 : index
    %350 = vector.load %arg15[%349, %c0_180, %c0_181] : memref<16x8x64xf32, #tpu.memory_space<vmem>>, vector<1x8x64xf32>
    %351 = vector.shape_cast %350 : vector<1x8x64xf32> to vector<8x64xf32>
    %352 = arith.index_cast %348 : i32 to index
    %c0_182 = arith.constant 0 : index
    %c0_183 = arith.constant 0 : index
    %353 = vector.load %arg16[%352, %c0_182, %c0_183] : memref<16x8x64xf32, #tpu.memory_space<vmem>>, vector<1x8x64xf32>
    %354 = vector.shape_cast %353 : vector<1x8x64xf32> to vector<8x64xf32>
    %355 = tpu.concatenate %351, %354 in 1 : vector<8x64xf32>, vector<8x64xf32> -> vector<8x128xf32>
    %356 = arith.index_cast %c11_i32 : i32 to index
    %c0_184 = arith.constant 0 : index
    %c0_185 = arith.constant 0 : index
    %357 = vector.load %arg13[%356, %c0_184, %c0_185] : memref<16x8x64xf32, #tpu.memory_space<vmem>>, vector<1x8x64xf32>
    %358 = vector.shape_cast %357 : vector<1x8x64xf32> to vector<8x64xf32>
    %359 = arith.index_cast %348 : i32 to index
    %c0_186 = arith.constant 0 : index
    %c0_187 = arith.constant 0 : index
    %360 = vector.load %arg14[%359, %c0_186, %c0_187] : memref<16x8x64xf32, #tpu.memory_space<vmem>>, vector<1x8x64xf32>
    %361 = vector.shape_cast %360 : vector<1x8x64xf32> to vector<8x64xf32>
    %362 = tpu.concatenate %358, %361 in 1 : vector<8x64xf32>, vector<8x64xf32> -> vector<8x128xf32>
    %cst_188 = arith.constant dense<0.000000e+00> : vector<8x128xf32>
    %363 = tpu.matmul %337, %27, %cst_188 {dimension_numbers = #tpu.dot_dimension_numbers<[1], [0], [0], [1], [0, 0, 1, 1], [], []>} : vector<8x128xf32>, vector<128x128xf32>, vector<8x128xf32> -> vector<8x128xf32>
    %364 = arith.addf %355, %363 : vector<8x128xf32>
    %365 = math.tanh %364 : vector<8x128xf32>
    %366 = arith.mulf %365, %362 : vector<8x128xf32>
    %367 = vector.extract_strided_slice %366 {offsets = [0, 0], sizes = [8, 64], strides = [1, 1]} : vector<8x128xf32> to vector<8x64xf32>
    %368 = arith.index_cast %c11_i32 : i32 to index
    %c0_189 = arith.constant 0 : index
    %c0_190 = arith.constant 0 : index
    %369 = vector.load %arg17[%368, %c0_189, %c0_190] : memref<16x8x64xf32, #tpu.memory_space<vmem>>, vector<1x8x64xf32>
    %370 = vector.shape_cast %369 : vector<1x8x64xf32> to vector<8x64xf32>
    %371 = vector.shape_cast %367 : vector<8x64xf32> to vector<1x8x64xf32>
    tpu.vector_store %arg17[%368, %c0_189, %c0_190], %371 {strides = array<i32>} : memref<16x8x64xf32, #tpu.memory_space<vmem>>, vector<1x8x64xf32>,
    %372 = vector.extract_strided_slice %366 {offsets = [0, 64], sizes = [8, 64], strides = [1, 1]} : vector<8x128xf32> to vector<8x64xf32>
    %373 = arith.index_cast %348 : i32 to index
    %c0_191 = arith.constant 0 : index
    %c0_192 = arith.constant 0 : index
    %374 = vector.load %arg18[%373, %c0_191, %c0_192] : memref<16x8x64xf32, #tpu.memory_space<vmem>>, vector<1x8x64xf32>
    %375 = vector.shape_cast %374 : vector<1x8x64xf32> to vector<8x64xf32>
    %376 = vector.shape_cast %372 : vector<8x64xf32> to vector<1x8x64xf32>
    tpu.vector_store %arg18[%373, %c0_191, %c0_192], %376 {strides = array<i32>} : memref<16x8x64xf32, #tpu.memory_space<vmem>>, vector<1x8x64xf32>,
    %c12_i32 = arith.constant 12 : i32
    %c15_i32_193 = arith.constant 15 : i32
    %377 = arith.subi %c15_i32_193, %c12_i32 : i32
    %378 = arith.index_cast %c12_i32 : i32 to index
    %c0_194 = arith.constant 0 : index
    %c0_195 = arith.constant 0 : index
    %379 = vector.load %arg15[%378, %c0_194, %c0_195] : memref<16x8x64xf32, #tpu.memory_space<vmem>>, vector<1x8x64xf32>
    %380 = vector.shape_cast %379 : vector<1x8x64xf32> to vector<8x64xf32>
    %381 = arith.index_cast %377 : i32 to index
    %c0_196 = arith.constant 0 : index
    %c0_197 = arith.constant 0 : index
    %382 = vector.load %arg16[%381, %c0_196, %c0_197] : memref<16x8x64xf32, #tpu.memory_space<vmem>>, vector<1x8x64xf32>
    %383 = vector.shape_cast %382 : vector<1x8x64xf32> to vector<8x64xf32>
    %384 = tpu.concatenate %380, %383 in 1 : vector<8x64xf32>, vector<8x64xf32> -> vector<8x128xf32>
    %385 = arith.index_cast %c12_i32 : i32 to index
    %c0_198 = arith.constant 0 : index
    %c0_199 = arith.constant 0 : index
    %386 = vector.load %arg13[%385, %c0_198, %c0_199] : memref<16x8x64xf32, #tpu.memory_space<vmem>>, vector<1x8x64xf32>
    %387 = vector.shape_cast %386 : vector<1x8x64xf32> to vector<8x64xf32>
    %388 = arith.index_cast %377 : i32 to index
    %c0_200 = arith.constant 0 : index
    %c0_201 = arith.constant 0 : index
    %389 = vector.load %arg14[%388, %c0_200, %c0_201] : memref<16x8x64xf32, #tpu.memory_space<vmem>>, vector<1x8x64xf32>
    %390 = vector.shape_cast %389 : vector<1x8x64xf32> to vector<8x64xf32>
    %391 = tpu.concatenate %387, %390 in 1 : vector<8x64xf32>, vector<8x64xf32> -> vector<8x128xf32>
    %cst_202 = arith.constant dense<0.000000e+00> : vector<8x128xf32>
    %392 = tpu.matmul %366, %27, %cst_202 {dimension_numbers = #tpu.dot_dimension_numbers<[1], [0], [0], [1], [0, 0, 1, 1], [], []>} : vector<8x128xf32>, vector<128x128xf32>, vector<8x128xf32> -> vector<8x128xf32>
    %393 = arith.addf %384, %392 : vector<8x128xf32>
    %394 = math.tanh %393 : vector<8x128xf32>
    %395 = arith.mulf %394, %391 : vector<8x128xf32>
    %396 = vector.extract_strided_slice %395 {offsets = [0, 0], sizes = [8, 64], strides = [1, 1]} : vector<8x128xf32> to vector<8x64xf32>
    %397 = arith.index_cast %c12_i32 : i32 to index
    %c0_203 = arith.constant 0 : index
    %c0_204 = arith.constant 0 : index
    %398 = vector.load %arg17[%397, %c0_203, %c0_204] : memref<16x8x64xf32, #tpu.memory_space<vmem>>, vector<1x8x64xf32>
    %399 = vector.shape_cast %398 : vector<1x8x64xf32> to vector<8x64xf32>
    %400 = vector.shape_cast %396 : vector<8x64xf32> to vector<1x8x64xf32>
    tpu.vector_store %arg17[%397, %c0_203, %c0_204], %400 {strides = array<i32>} : memref<16x8x64xf32, #tpu.memory_space<vmem>>, vector<1x8x64xf32>,
    %401 = vector.extract_strided_slice %395 {offsets = [0, 64], sizes = [8, 64], strides = [1, 1]} : vector<8x128xf32> to vector<8x64xf32>
    %402 = arith.index_cast %377 : i32 to index
    %c0_205 = arith.constant 0 : index
    %c0_206 = arith.constant 0 : index
    %403 = vector.load %arg18[%402, %c0_205, %c0_206] : memref<16x8x64xf32, #tpu.memory_space<vmem>>, vector<1x8x64xf32>
    %404 = vector.shape_cast %403 : vector<1x8x64xf32> to vector<8x64xf32>
    %405 = vector.shape_cast %401 : vector<8x64xf32> to vector<1x8x64xf32>
    tpu.vector_store %arg18[%402, %c0_205, %c0_206], %405 {strides = array<i32>} : memref<16x8x64xf32, #tpu.memory_space<vmem>>, vector<1x8x64xf32>,
    %c13_i32 = arith.constant 13 : i32
    %c15_i32_207 = arith.constant 15 : i32
    %406 = arith.subi %c15_i32_207, %c13_i32 : i32
    %407 = arith.index_cast %c13_i32 : i32 to index
    %c0_208 = arith.constant 0 : index
    %c0_209 = arith.constant 0 : index
    %408 = vector.load %arg15[%407, %c0_208, %c0_209] : memref<16x8x64xf32, #tpu.memory_space<vmem>>, vector<1x8x64xf32>
    %409 = vector.shape_cast %408 : vector<1x8x64xf32> to vector<8x64xf32>
    %410 = arith.index_cast %406 : i32 to index
    %c0_210 = arith.constant 0 : index
    %c0_211 = arith.constant 0 : index
    %411 = vector.load %arg16[%410, %c0_210, %c0_211] : memref<16x8x64xf32, #tpu.memory_space<vmem>>, vector<1x8x64xf32>
    %412 = vector.shape_cast %411 : vector<1x8x64xf32> to vector<8x64xf32>
    %413 = tpu.concatenate %409, %412 in 1 : vector<8x64xf32>, vector<8x64xf32> -> vector<8x128xf32>
    %414 = arith.index_cast %c13_i32 : i32 to index
    %c0_212 = arith.constant 0 : index
    %c0_213 = arith.constant 0 : index
    %415 = vector.load %arg13[%414, %c0_212, %c0_213] : memref<16x8x64xf32, #tpu.memory_space<vmem>>, vector<1x8x64xf32>
    %416 = vector.shape_cast %415 : vector<1x8x64xf32> to vector<8x64xf32>
    %417 = arith.index_cast %406 : i32 to index
    %c0_214 = arith.constant 0 : index
    %c0_215 = arith.constant 0 : index
    %418 = vector.load %arg14[%417, %c0_214, %c0_215] : memref<16x8x64xf32, #tpu.memory_space<vmem>>, vector<1x8x64xf32>
    %419 = vector.shape_cast %418 : vector<1x8x64xf32> to vector<8x64xf32>
    %420 = tpu.concatenate %416, %419 in 1 : vector<8x64xf32>, vector<8x64xf32> -> vector<8x128xf32>
    %cst_216 = arith.constant dense<0.000000e+00> : vector<8x128xf32>
    %421 = tpu.matmul %395, %27, %cst_216 {dimension_numbers = #tpu.dot_dimension_numbers<[1], [0], [0], [1], [0, 0, 1, 1], [], []>} : vector<8x128xf32>, vector<128x128xf32>, vector<8x128xf32> -> vector<8x128xf32>
    %422 = arith.addf %413, %421 : vector<8x128xf32>
    %423 = math.tanh %422 : vector<8x128xf32>
    %424 = arith.mulf %423, %420 : vector<8x128xf32>
    %425 = vector.extract_strided_slice %424 {offsets = [0, 0], sizes = [8, 64], strides = [1, 1]} : vector<8x128xf32> to vector<8x64xf32>
    %426 = arith.index_cast %c13_i32 : i32 to index
    %c0_217 = arith.constant 0 : index
    %c0_218 = arith.constant 0 : index
    %427 = vector.load %arg17[%426, %c0_217, %c0_218] : memref<16x8x64xf32, #tpu.memory_space<vmem>>, vector<1x8x64xf32>
    %428 = vector.shape_cast %427 : vector<1x8x64xf32> to vector<8x64xf32>
    %429 = vector.shape_cast %425 : vector<8x64xf32> to vector<1x8x64xf32>
    tpu.vector_store %arg17[%426, %c0_217, %c0_218], %429 {strides = array<i32>} : memref<16x8x64xf32, #tpu.memory_space<vmem>>, vector<1x8x64xf32>,
    %430 = vector.extract_strided_slice %424 {offsets = [0, 64], sizes = [8, 64], strides = [1, 1]} : vector<8x128xf32> to vector<8x64xf32>
    %431 = arith.index_cast %406 : i32 to index
    %c0_219 = arith.constant 0 : index
    %c0_220 = arith.constant 0 : index
    %432 = vector.load %arg18[%431, %c0_219, %c0_220] : memref<16x8x64xf32, #tpu.memory_space<vmem>>, vector<1x8x64xf32>
    %433 = vector.shape_cast %432 : vector<1x8x64xf32> to vector<8x64xf32>
    %434 = vector.shape_cast %430 : vector<8x64xf32> to vector<1x8x64xf32>
    tpu.vector_store %arg18[%431, %c0_219, %c0_220], %434 {strides = array<i32>} : memref<16x8x64xf32, #tpu.memory_space<vmem>>, vector<1x8x64xf32>,
    %c14_i32 = arith.constant 14 : i32
    %c15_i32_221 = arith.constant 15 : i32
    %435 = arith.subi %c15_i32_221, %c14_i32 : i32
    %436 = arith.index_cast %c14_i32 : i32 to index
    %c0_222 = arith.constant 0 : index
    %c0_223 = arith.constant 0 : index
    %437 = vector.load %arg15[%436, %c0_222, %c0_223] : memref<16x8x64xf32, #tpu.memory_space<vmem>>, vector<1x8x64xf32>
    %438 = vector.shape_cast %437 : vector<1x8x64xf32> to vector<8x64xf32>
    %439 = arith.index_cast %435 : i32 to index
    %c0_224 = arith.constant 0 : index
    %c0_225 = arith.constant 0 : index
    %440 = vector.load %arg16[%439, %c0_224, %c0_225] : memref<16x8x64xf32, #tpu.memory_space<vmem>>, vector<1x8x64xf32>
    %441 = vector.shape_cast %440 : vector<1x8x64xf32> to vector<8x64xf32>
    %442 = tpu.concatenate %438, %441 in 1 : vector<8x64xf32>, vector<8x64xf32> -> vector<8x128xf32>
    %443 = arith.index_cast %c14_i32 : i32 to index
    %c0_226 = arith.constant 0 : index
    %c0_227 = arith.constant 0 : index
    %444 = vector.load %arg13[%443, %c0_226, %c0_227] : memref<16x8x64xf32, #tpu.memory_space<vmem>>, vector<1x8x64xf32>
    %445 = vector.shape_cast %444 : vector<1x8x64xf32> to vector<8x64xf32>
    %446 = arith.index_cast %435 : i32 to index
    %c0_228 = arith.constant 0 : index
    %c0_229 = arith.constant 0 : index
    %447 = vector.load %arg14[%446, %c0_228, %c0_229] : memref<16x8x64xf32, #tpu.memory_space<vmem>>, vector<1x8x64xf32>
    %448 = vector.shape_cast %447 : vector<1x8x64xf32> to vector<8x64xf32>
    %449 = tpu.concatenate %445, %448 in 1 : vector<8x64xf32>, vector<8x64xf32> -> vector<8x128xf32>
    %cst_230 = arith.constant dense<0.000000e+00> : vector<8x128xf32>
    %450 = tpu.matmul %424, %27, %cst_230 {dimension_numbers = #tpu.dot_dimension_numbers<[1], [0], [0], [1], [0, 0, 1, 1], [], []>} : vector<8x128xf32>, vector<128x128xf32>, vector<8x128xf32> -> vector<8x128xf32>
    %451 = arith.addf %442, %450 : vector<8x128xf32>
    %452 = math.tanh %451 : vector<8x128xf32>
    %453 = arith.mulf %452, %449 : vector<8x128xf32>
    %454 = vector.extract_strided_slice %453 {offsets = [0, 0], sizes = [8, 64], strides = [1, 1]} : vector<8x128xf32> to vector<8x64xf32>
    %455 = arith.index_cast %c14_i32 : i32 to index
    %c0_231 = arith.constant 0 : index
    %c0_232 = arith.constant 0 : index
    %456 = vector.load %arg17[%455, %c0_231, %c0_232] : memref<16x8x64xf32, #tpu.memory_space<vmem>>, vector<1x8x64xf32>
    %457 = vector.shape_cast %456 : vector<1x8x64xf32> to vector<8x64xf32>
    %458 = vector.shape_cast %454 : vector<8x64xf32> to vector<1x8x64xf32>
    tpu.vector_store %arg17[%455, %c0_231, %c0_232], %458 {strides = array<i32>} : memref<16x8x64xf32, #tpu.memory_space<vmem>>, vector<1x8x64xf32>,
    %459 = vector.extract_strided_slice %453 {offsets = [0, 64], sizes = [8, 64], strides = [1, 1]} : vector<8x128xf32> to vector<8x64xf32>
    %460 = arith.index_cast %435 : i32 to index
    %c0_233 = arith.constant 0 : index
    %c0_234 = arith.constant 0 : index
    %461 = vector.load %arg18[%460, %c0_233, %c0_234] : memref<16x8x64xf32, #tpu.memory_space<vmem>>, vector<1x8x64xf32>
    %462 = vector.shape_cast %461 : vector<1x8x64xf32> to vector<8x64xf32>
    %463 = vector.shape_cast %459 : vector<8x64xf32> to vector<1x8x64xf32>
    tpu.vector_store %arg18[%460, %c0_233, %c0_234], %463 {strides = array<i32>} : memref<16x8x64xf32, #tpu.memory_space<vmem>>, vector<1x8x64xf32>,
    %c15_i32_235 = arith.constant 15 : i32
    %c15_i32_236 = arith.constant 15 : i32
    %464 = arith.subi %c15_i32_236, %c15_i32_235 : i32
    %465 = arith.index_cast %c15_i32_235 : i32 to index
    %c0_237 = arith.constant 0 : index
    %c0_238 = arith.constant 0 : index
    %466 = vector.load %arg15[%465, %c0_237, %c0_238] : memref<16x8x64xf32, #tpu.memory_space<vmem>>, vector<1x8x64xf32>
    %467 = vector.shape_cast %466 : vector<1x8x64xf32> to vector<8x64xf32>
    %468 = arith.index_cast %464 : i32 to index
    %c0_239 = arith.constant 0 : index
    %c0_240 = arith.constant 0 : index
    %469 = vector.load %arg16[%468, %c0_239, %c0_240] : memref<16x8x64xf32, #tpu.memory_space<vmem>>, vector<1x8x64xf32>
    %470 = vector.shape_cast %469 : vector<1x8x64xf32> to vector<8x64xf32>
    %471 = tpu.concatenate %467, %470 in 1 : vector<8x64xf32>, vector<8x64xf32> -> vector<8x128xf32>
    %472 = arith.index_cast %c15_i32_235 : i32 to index
    %c0_241 = arith.constant 0 : index
    %c0_242 = arith.constant 0 : index
    %473 = vector.load %arg13[%472, %c0_241, %c0_242] : memref<16x8x64xf32, #tpu.memory_space<vmem>>, vector<1x8x64xf32>
    %474 = vector.shape_cast %473 : vector<1x8x64xf32> to vector<8x64xf32>
    %475 = arith.index_cast %464 : i32 to index
    %c0_243 = arith.constant 0 : index
    %c0_244 = arith.constant 0 : index
    %476 = vector.load %arg14[%475, %c0_243, %c0_244] : memref<16x8x64xf32, #tpu.memory_space<vmem>>, vector<1x8x64xf32>
    %477 = vector.shape_cast %476 : vector<1x8x64xf32> to vector<8x64xf32>
    %478 = tpu.concatenate %474, %477 in 1 : vector<8x64xf32>, vector<8x64xf32> -> vector<8x128xf32>
    %cst_245 = arith.constant dense<0.000000e+00> : vector<8x128xf32>
    %479 = tpu.matmul %453, %27, %cst_245 {dimension_numbers = #tpu.dot_dimension_numbers<[1], [0], [0], [1], [0, 0, 1, 1], [], []>} : vector<8x128xf32>, vector<128x128xf32>, vector<8x128xf32> -> vector<8x128xf32>
    %480 = arith.addf %471, %479 : vector<8x128xf32>
    %481 = math.tanh %480 : vector<8x128xf32>
    %482 = arith.mulf %481, %478 : vector<8x128xf32>
    %483 = vector.extract_strided_slice %482 {offsets = [0, 0], sizes = [8, 64], strides = [1, 1]} : vector<8x128xf32> to vector<8x64xf32>
    %484 = arith.index_cast %c15_i32_235 : i32 to index
    %c0_246 = arith.constant 0 : index
    %c0_247 = arith.constant 0 : index
    %485 = vector.load %arg17[%484, %c0_246, %c0_247] : memref<16x8x64xf32, #tpu.memory_space<vmem>>, vector<1x8x64xf32>
    %486 = vector.shape_cast %485 : vector<1x8x64xf32> to vector<8x64xf32>
    %487 = vector.shape_cast %483 : vector<8x64xf32> to vector<1x8x64xf32>
    tpu.vector_store %arg17[%484, %c0_246, %c0_247], %487 {strides = array<i32>} : memref<16x8x64xf32, #tpu.memory_space<vmem>>, vector<1x8x64xf32>,
    %488 = vector.extract_strided_slice %482 {offsets = [0, 64], sizes = [8, 64], strides = [1, 1]} : vector<8x128xf32> to vector<8x64xf32>
    %489 = arith.index_cast %464 : i32 to index
    %c0_248 = arith.constant 0 : index
    %c0_249 = arith.constant 0 : index
    %490 = vector.load %arg18[%489, %c0_248, %c0_249] : memref<16x8x64xf32, #tpu.memory_space<vmem>>, vector<1x8x64xf32>
    %491 = vector.shape_cast %490 : vector<1x8x64xf32> to vector<8x64xf32>
    %492 = vector.shape_cast %488 : vector<8x64xf32> to vector<1x8x64xf32>
    tpu.vector_store %arg18[%489, %c0_248, %c0_249], %492 {strides = array<i32>} : memref<16x8x64xf32, #tpu.memory_space<vmem>>, vector<1x8x64xf32>,
    %c16_i32 = arith.constant 16 : i32
    %c0_250 = arith.constant 0 : index
    %c0_251 = arith.constant 0 : index
    %c0_252 = arith.constant 0 : index
    %493 = vector.load %arg17[%c0_250, %c0_251, %c0_252] : memref<16x8x64xf32, #tpu.memory_space<vmem>>, vector<16x8x64xf32>
    %494 = vector.shape_cast %493 : vector<16x8x64xf32> to vector<128x64xf32>
    %c0_253 = arith.constant 0 : index
    %c0_254 = arith.constant 0 : index
    %c0_255 = arith.constant 0 : index
    %495 = vector.load %arg18[%c0_253, %c0_254, %c0_255] : memref<16x8x64xf32, #tpu.memory_space<vmem>>, vector<16x8x64xf32>
    %496 = vector.shape_cast %495 : vector<16x8x64xf32> to vector<128x64xf32>
    %497 = tpu.concatenate %494, %496 in 1 : vector<128x64xf32>, vector<128x64xf32> -> vector<128x128xf32>
    %c0_256 = arith.constant 0 : index
    %c0_257 = arith.constant 0 : index
    %498 = vector.load %arg6[%c0_256, %c0_257] : memref<128x128xf32, #tpu.memory_space<vmem>>, vector<128x128xf32>
    %cst_258 = arith.constant dense<0.000000e+00> : vector<128x128xf32>
    %499 = tpu.matmul %497, %498, %cst_258 {dimension_numbers = #tpu.dot_dimension_numbers<[1], [0], [0], [1], [0, 0, 1, 1], [], []>} : vector<128x128xf32>, vector<128x128xf32>, vector<128x128xf32> -> vector<128x128xf32>
    %500 = tpu.concatenate %1, %1 in 1 : vector<128x64xf32>, vector<128x64xf32> -> vector<128x128xf32>
    %c0_259 = arith.constant 0 : index
    %c0_260 = arith.constant 0 : index
    %501 = vector.load %arg7[%c0_259, %c0_260] : memref<1x128xf32, #tpu.memory_space<vmem>>, vector<1x128xf32>
    %502 = vector.broadcast %501 : vector<1x128xf32> to vector<128x128xf32>
    %503 = arith.mulf %500, %502 : vector<128x128xf32>
    %504 = arith.addf %499, %503 : vector<128x128xf32>
    %505 = vector.extract_strided_slice %504 {offsets = [0, 0], sizes = [128, 64], strides = [1, 1]} : vector<128x128xf32> to vector<128x64xf32>
    %c0_261 = arith.constant 0 : index
    %c0_262 = arith.constant 0 : index
    %506 = vector.load %arg8[%c0_261, %c0_262] : memref<1x128xf32, #tpu.memory_space<vmem>>, vector<1x64xf32>
    %c0_263 = arith.constant 0 : index
    %c0_264 = arith.constant 0 : index
    %507 = vector.load %arg9[%c0_263, %c0_264] : memref<1x128xf32, #tpu.memory_space<vmem>>, vector<1x64xf32>
    %cst_265 = arith.constant dense<0.000000e+00> : vector<128xf32>
    %508 = vector.multi_reduction <add>, %505, %cst_265 [1] : vector<128x64xf32> to vector<128xf32>
    %509 = vector.shape_cast %508 : vector<128xf32> to vector<128x1xf32>
    %cst_266 = arith.constant 6.400000e+01 : f32
    %510 = vector.broadcast %cst_266 : f32 to vector<128x1xf32>
    %511 = arith.divf %509, %510 : vector<128x1xf32>
    %512 = vector.broadcast %511 : vector<128x1xf32> to vector<128x64xf32>
    %513 = arith.subf %505, %512 : vector<128x64xf32>
    %514 = arith.mulf %513, %513 : vector<128x64xf32>
    %cst_267 = arith.constant dense<0.000000e+00> : vector<128xf32>
    %515 = vector.multi_reduction <add>, %514, %cst_267 [1] : vector<128x64xf32> to vector<128xf32>
    %516 = vector.shape_cast %515 : vector<128xf32> to vector<128x1xf32>
    %cst_268 = arith.constant 6.400000e+01 : f32
    %517 = vector.broadcast %cst_268 : f32 to vector<128x1xf32>
    %518 = arith.divf %516, %517 : vector<128x1xf32>
    %519 = vector.broadcast %511 : vector<128x1xf32> to vector<128x64xf32>
    %520 = arith.subf %505, %519 : vector<128x64xf32>
    %cst_269 = arith.constant 9.99999974E-6 : f32
    %521 = vector.broadcast %cst_269 : f32 to vector<128x1xf32>
    %522 = arith.addf %518, %521 : vector<128x1xf32>
    %523 = math.rsqrt %522 : vector<128x1xf32>
    %524 = vector.broadcast %523 : vector<128x1xf32> to vector<128x64xf32>
    %525 = arith.mulf %520, %524 : vector<128x64xf32>
    %526 = vector.broadcast %506 : vector<1x64xf32> to vector<128x64xf32>
    %527 = arith.mulf %525, %526 : vector<128x64xf32>
    %528 = vector.broadcast %507 : vector<1x64xf32> to vector<128x64xf32>
    %529 = arith.addf %527, %528 : vector<128x64xf32>
    %530 = vector.extract_strided_slice %504 {offsets = [0, 64], sizes = [128, 64], strides = [1, 1]} : vector<128x128xf32> to vector<128x64xf32>
    %c0_270 = arith.constant 0 : index
    %c64 = arith.constant 64 : index
    %531 = vector.load %arg8[%c0_270, %c64] : memref<1x128xf32, #tpu.memory_space<vmem>>, vector<1x64xf32>
    %c0_271 = arith.constant 0 : index
    %c64_272 = arith.constant 64 : index
    %532 = vector.load %arg9[%c0_271, %c64_272] : memref<1x128xf32, #tpu.memory_space<vmem>>, vector<1x64xf32>
    %cst_273 = arith.constant dense<0.000000e+00> : vector<128xf32>
    %533 = vector.multi_reduction <add>, %530, %cst_273 [1] : vector<128x64xf32> to vector<128xf32>
    %534 = vector.shape_cast %533 : vector<128xf32> to vector<128x1xf32>
    %cst_274 = arith.constant 6.400000e+01 : f32
    %535 = vector.broadcast %cst_274 : f32 to vector<128x1xf32>
    %536 = arith.divf %534, %535 : vector<128x1xf32>
    %537 = vector.broadcast %536 : vector<128x1xf32> to vector<128x64xf32>
    %538 = arith.subf %530, %537 : vector<128x64xf32>
    %539 = arith.mulf %538, %538 : vector<128x64xf32>
    %cst_275 = arith.constant dense<0.000000e+00> : vector<128xf32>
    %540 = vector.multi_reduction <add>, %539, %cst_275 [1] : vector<128x64xf32> to vector<128xf32>
    %541 = vector.shape_cast %540 : vector<128xf32> to vector<128x1xf32>
    %cst_276 = arith.constant 6.400000e+01 : f32
    %542 = vector.broadcast %cst_276 : f32 to vector<128x1xf32>
    %543 = arith.divf %541, %542 : vector<128x1xf32>
    %544 = vector.broadcast %536 : vector<128x1xf32> to vector<128x64xf32>
    %545 = arith.subf %530, %544 : vector<128x64xf32>
    %cst_277 = arith.constant 9.99999974E-6 : f32
    %546 = vector.broadcast %cst_277 : f32 to vector<128x1xf32>
    %547 = arith.addf %543, %546 : vector<128x1xf32>
    %548 = math.rsqrt %547 : vector<128x1xf32>
    %549 = vector.broadcast %548 : vector<128x1xf32> to vector<128x64xf32>
    %550 = arith.mulf %545, %549 : vector<128x64xf32>
    %551 = vector.broadcast %531 : vector<1x64xf32> to vector<128x64xf32>
    %552 = arith.mulf %550, %551 : vector<128x64xf32>
    %553 = vector.broadcast %532 : vector<1x64xf32> to vector<128x64xf32>
    %554 = arith.addf %552, %553 : vector<128x64xf32>
    %555 = tpu.concatenate %529, %554 in 1 : vector<128x64xf32>, vector<128x64xf32> -> vector<128x128xf32>
    %c0_278 = arith.constant 0 : index
    %c0_279 = arith.constant 0 : index
    %556 = vector.load %arg10[%c0_278, %c0_279] : memref<1x128xf32, #tpu.memory_space<vmem>>, vector<1x128xf32>
    %c0_280 = arith.constant 0 : index
    %c0_281 = arith.constant 0 : index
    %557 = vector.load %arg11[%c0_280, %c0_281] : memref<1x128xf32, #tpu.memory_space<vmem>>, vector<1x128xf32>
    %cst_282 = arith.constant dense<0.000000e+00> : vector<128xf32>
    %558 = vector.multi_reduction <add>, %555, %cst_282 [1] : vector<128x128xf32> to vector<128xf32>
    %559 = vector.shape_cast %558 : vector<128xf32> to vector<128x1xf32>
    %cst_283 = arith.constant 1.280000e+02 : f32
    %560 = vector.broadcast %cst_283 : f32 to vector<128x1xf32>
    %561 = arith.divf %559, %560 : vector<128x1xf32>
    %562 = vector.broadcast %561 : vector<128x1xf32> to vector<128x128xf32>
    %563 = arith.subf %555, %562 : vector<128x128xf32>
    %564 = arith.mulf %563, %563 : vector<128x128xf32>
    %cst_284 = arith.constant dense<0.000000e+00> : vector<128xf32>
    %565 = vector.multi_reduction <add>, %564, %cst_284 [1] : vector<128x128xf32> to vector<128xf32>
    %566 = vector.shape_cast %565 : vector<128xf32> to vector<128x1xf32>
    %cst_285 = arith.constant 1.280000e+02 : f32
    %567 = vector.broadcast %cst_285 : f32 to vector<128x1xf32>
    %568 = arith.divf %566, %567 : vector<128x1xf32>
    %569 = vector.broadcast %561 : vector<128x1xf32> to vector<128x128xf32>
    %570 = arith.subf %555, %569 : vector<128x128xf32>
    %cst_286 = arith.constant 9.99999974E-6 : f32
    %571 = vector.broadcast %cst_286 : f32 to vector<128x1xf32>
    %572 = arith.addf %568, %571 : vector<128x1xf32>
    %573 = math.rsqrt %572 : vector<128x1xf32>
    %574 = vector.broadcast %573 : vector<128x1xf32> to vector<128x128xf32>
    %575 = arith.mulf %570, %574 : vector<128x128xf32>
    %576 = vector.broadcast %556 : vector<1x128xf32> to vector<128x128xf32>
    %577 = arith.mulf %575, %576 : vector<128x128xf32>
    %578 = vector.broadcast %557 : vector<1x128xf32> to vector<128x128xf32>
    %579 = arith.addf %577, %578 : vector<128x128xf32>
    %580 = vector.shape_cast %579 : vector<128x128xf32> to vector<16x8x128xf32>
    %c0_287 = arith.constant 0 : index
    %c0_288 = arith.constant 0 : index
    %c0_289 = arith.constant 0 : index
    %581 = vector.load %arg12[%c0_287, %c0_288, %c0_289] : memref<16x8x128xf32, #tpu.memory_space<vmem>>, vector<16x8x128xf32>
    tpu.vector_store %arg12[%c0_287, %c0_288, %c0_289], %580 {strides = array<i32>} : memref<16x8x128xf32, #tpu.memory_space<vmem>>, vector<16x8x128xf32>,
    return
  }
  func.func @transform_0(%arg0: i32) -> (i32, i32, i32) {
    %c0_i32 = arith.constant 0 : i32
    %c0_i32_0 = arith.constant 0 : i32
    %c0_i32_1 = arith.constant 0 : i32
    return %c0_i32, %arg0, %c0_i32_0 : i32, i32, i32
  }
  func.func @transform_1(%arg0: i32) -> (i32, i32) {
    %c0_i32 = arith.constant 0 : i32
    %c0_i32_0 = arith.constant 0 : i32
    %c0_i32_1 = arith.constant 0 : i32
    return %c0_i32, %c0_i32_0 : i32, i32
  }
  func.func @transform_2(%arg0: i32) -> (i32, i32) {
    %c0_i32 = arith.constant 0 : i32
    %c0_i32_0 = arith.constant 0 : i32
    %c0_i32_1 = arith.constant 0 : i32
    return %c0_i32, %c0_i32_0 : i32, i32
  }
  func.func @transform_3(%arg0: i32) -> (i32, i32) {
    %c0_i32 = arith.constant 0 : i32
    %c0_i32_0 = arith.constant 0 : i32
    %c0_i32_1 = arith.constant 0 : i32
    return %c0_i32, %c0_i32_0 : i32, i32
  }
  func.func @transform_4(%arg0: i32) -> (i32, i32) {
    %c0_i32 = arith.constant 0 : i32
    %c0_i32_0 = arith.constant 0 : i32
    %c0_i32_1 = arith.constant 0 : i32
    return %c0_i32, %c0_i32_0 : i32, i32
  }
  func.func @transform_5(%arg0: i32) -> (i32, i32) {
    %c0_i32 = arith.constant 0 : i32
    %c0_i32_0 = arith.constant 0 : i32
    %c0_i32_1 = arith.constant 0 : i32
    return %c0_i32, %c0_i32_0 : i32, i32
  }
  func.func @transform_6(%arg0: i32) -> (i32, i32) {
    %c0_i32 = arith.constant 0 : i32
    %c0_i32_0 = arith.constant 0 : i32
    %c0_i32_1 = arith.constant 0 : i32
    return %c0_i32, %c0_i32_0 : i32, i32
  }
  func.func @transform_7(%arg0: i32) -> (i32, i32) {
    %c0_i32 = arith.constant 0 : i32
    %c0_i32_0 = arith.constant 0 : i32
    %c0_i32_1 = arith.constant 0 : i32
    return %c0_i32, %c0_i32_0 : i32, i32
  }
  func.func @transform_8(%arg0: i32) -> (i32, i32) {
    %c0_i32 = arith.constant 0 : i32
    %c0_i32_0 = arith.constant 0 : i32
    %c0_i32_1 = arith.constant 0 : i32
    return %c0_i32, %c0_i32_0 : i32, i32
  }
  func.func @transform_9(%arg0: i32) -> (i32, i32) {
    %c0_i32 = arith.constant 0 : i32
    %c0_i32_0 = arith.constant 0 : i32
    %c0_i32_1 = arith.constant 0 : i32
    return %c0_i32, %c0_i32_0 : i32, i32
  }
  func.func @transform_10(%arg0: i32) -> (i32, i32) {
    %c0_i32 = arith.constant 0 : i32
    %c0_i32_0 = arith.constant 0 : i32
    %c0_i32_1 = arith.constant 0 : i32
    return %c0_i32, %c0_i32_0 : i32, i32
  }
  func.func @transform_11(%arg0: i32) -> (i32, i32, i32) {
    %c0_i32 = arith.constant 0 : i32
    %c0_i32_0 = arith.constant 0 : i32
    %c0_i32_1 = arith.constant 0 : i32
    return %c0_i32, %arg0, %c0_i32_0 : i32, i32, i32
  }
}

</mosaic_0001>

<llo_original>
// kernel: fabis6_forward.2
$region0: #{fabis6_forward.2}
  #allocation0 [shape = 'u32[]', space=smem, size = 0x4, offset = 0x4, fixed_abs, tag = 'smem constant byte address 0x4 - core index']
  #allocation1 [shape = 'u32[144,128]{1,0:T(1,128)}', space=vmem, size = 0x12000, scoped, tag = 'internal scratch']
  %s0 = inlined_call_operand.vmem [shape: f32[80,64], index: 0, kind: input, shape index: {}, may-alias: {0,1}]
  %s1 = inlined_call_operand.vmem [shape: f32[80,64], index: 1, kind: input, shape index: {}, may-alias: {0,1}]
  %s2 = inlined_call_operand.vmem [shape: f32[512,128], index: 2, kind: input, shape index: {}]
  %s3 = inlined_call_operand.vmem [shape: f32[1,128], index: 3, kind: input, shape index: {}]
  %s4 = inlined_call_operand.vmem [shape: f32[1,64], index: 4, kind: input, shape index: {}]
  %s5 = inlined_call_operand.vmem [shape: f32[1,64], index: 5, kind: input, shape index: {}]
  %s6 = inlined_call_operand.vmem [shape: f32[1,64], index: 6, kind: input, shape index: {}]
  %s7 = inlined_call_operand.vmem [shape: f32[1,64], index: 7, kind: input, shape index: {}]
  %s8 = inlined_call_operand.vmem [shape: f32[1,64], index: 8, kind: input, shape index: {}]
  %s9 = inlined_call_operand.vmem [shape: f32[1,64], index: 9, kind: input, shape index: {}]
  %s10 = inlined_call_operand.vmem [shape: f32[64,64], index: 10, kind: output, shape index: {}]
  %s11 = sld [smem:[#allocation0]]
  $region50: #{fabis6_forward.2} parent=0
    _
  %s13 = ssub.s32 1, %s11
  %s14 = scalar_select 0, %s13, %s11
  // Predicated region
  $region2: #{fabis6_forward.2} parent=0 // pred_check
    _
  $region3: #{fabis6_forward.2} parent=0 // pred_check_branch
    %16 = sbr.rel (0) target = $region5
  $region4: #{fabis6_forward.2} parent=0 // pred_region
    _
  $region5: #{fabis6_forward.2} parent=0 // pred_fallthru
    _
  // Predicated region
  $region6: #{fabis6_forward.2} parent=0 // pred_check
    _
  $region7: #{fabis6_forward.2} parent=0 // pred_check_branch
    %18 = sbr.rel (0) target = $region9
  $region8: #{fabis6_forward.2} parent=0 // pred_region
    %s19 = sadd.s32 0, 1
    %s20 = smul.u32 %s19, 4
    %s21 = smul.u32 2, %s20
    %p22 = scmp.lt.s32.totalorder %s21, 9
    %s23 = scalar_select %p22, %s21, 9
    %s24 = smul.addr %s23, 8
    %s25 = scalar_lea.vmem %s1, %s24
    %s26 = sadd.s32 0, 1
    %s27 = smul.u32 %s26, 4
    %s28 = smul.u32 2, %s27
  $region9: #{fabis6_forward.2} parent=0 // pred_fallthru
    _
  // Predicated region
  $region10: #{fabis6_forward.2} parent=0 // pred_check
    _
  $region11: #{fabis6_forward.2} parent=0 // pred_check_branch
    %30 = sbr.rel (0) target = $region13
  $region12: #{fabis6_forward.2} parent=0 // pred_region
    _
  $region13: #{fabis6_forward.2} parent=0 // pred_fallthru
    _
  // Predicated region
  $region14: #{fabis6_forward.2} parent=0 // pred_check
    _
  $region15: #{fabis6_forward.2} parent=0 // pred_check_branch
    %32 = sbr.rel (0) target = $region17
  $region16: #{fabis6_forward.2} parent=0 // pred_region
    _
  $region17: #{fabis6_forward.2} parent=0 // pred_fallthru
    _
  // Predicated region
  $region18: #{fabis6_forward.2} parent=0 // pred_check
    _
  $region19: #{fabis6_forward.2} parent=0 // pred_check_branch
    %34 = sbr.rel (0) target = $region21
  $region20: #{fabis6_forward.2} parent=0 // pred_region
    _
  $region21: #{fabis6_forward.2} parent=0 // pred_fallthru
    _
  // Predicated region
  $region22: #{fabis6_forward.2} parent=0 // pred_check
    _
  $region23: #{fabis6_forward.2} parent=0 // pred_check_branch
    %36 = sbr.rel (0) target = $region25
  $region24: #{fabis6_forward.2} parent=0 // pred_region
    _
  $region25: #{fabis6_forward.2} parent=0 // pred_fallthru
    _
  // Predicated region
  $region26: #{fabis6_forward.2} parent=0 // pred_check
    _
  $region27: #{fabis6_forward.2} parent=0 // pred_check_branch
    %38 = sbr.rel (0) target = $region29
  $region28: #{fabis6_forward.2} parent=0 // pred_region
    _
  $region29: #{fabis6_forward.2} parent=0 // pred_fallthru
    _
  // Predicated region
  $region30: #{fabis6_forward.2} parent=0 // pred_check
    _
  $region31: #{fabis6_forward.2} parent=0 // pred_check_branch
    %40 = sbr.rel (0) target = $region33
  $region32: #{fabis6_forward.2} parent=0 // pred_region
    _
  $region33: #{fabis6_forward.2} parent=0 // pred_fallthru
    _
  // Predicated region
  $region34: #{fabis6_forward.2} parent=0 // pred_check
    _
  $region35: #{fabis6_forward.2} parent=0 // pred_check_branch
    %42 = sbr.rel (0) target = $region37
  $region36: #{fabis6_forward.2} parent=0 // pred_region
    _
  $region37: #{fabis6_forward.2} parent=0 // pred_fallthru
    _
  // Predicated region
  $region38: #{fabis6_forward.2} parent=0 // pred_check
    _
  $region39: #{fabis6_forward.2} parent=0 // pred_check_branch
    %44 = sbr.rel (0) target = $region41
  $region40: #{fabis6_forward.2} parent=0 // pred_region
    _
  $region41: #{fabis6_forward.2} parent=0 // pred_fallthru
    _
  %s45 = sadd.s32 0, 1
  %s46 = smul.u32 %s45, 4
  %s47 = smul.u32 2, %s46
  %p48 = scmp.lt.s32.totalorder %s47, 9
  %s49 = scalar_select %p48, %s47, 9
  %s50 = smul.addr %s49, 8
  %s51 = scalar_lea.vmem %s1, %s50
  %s52 = sadd.s32 0, 1
  %s53 = smul.u32 %s52, 4
  %s54 = smul.u32 2, %s53
  %p55 = scmp.lt.s32.totalorder %s54, 9
  %s56 = scalar_select %p55, %s54, 9
  %s57 = smul.addr %s56, 8
  %s58 = scalar_lea.vmem %s1, %s57
  %s59 = sadd.s32 0, 1
  %s60 = smul.u32 %s59, 4
  %s61 = smul.u32 2, %s60
  %v62 = vld [vmem:[%s0] sm:$0xff]
  %v63 = vld [vmem:[%s0 + $0x8] sm:$0xff]
  %v64 = vld [vmem:[%s0 + $0x10] sm:$0xff]
  %v65 = vld [vmem:[%s0 + $0x18] sm:$0xff]
  %v66 = vld [vmem:[%s0 + $0x20] sm:$0xff]
  %v67 = vld [vmem:[%s0 + $0x28] sm:$0xff]
  %v68 = vld [vmem:[%s0 + $0x30] sm:$0xff]
  %v69 = vld [vmem:[%s0 + $0x38] sm:$0xff]
  %v70 = vld [vmem:[%s58] sm:$0xff]
  %v71 = vld [vmem:[%s58 + $0x8] sm:$0xff]
  %vm81 = vcmask 1045504
  %v82 = vrot.slane %v62, 2
  %v83 = vrot.slane %v63, 2
  %v84 = vsel %vm81, %v82, %v83
  %v85 = vrot.slane %v64, 2
  %v86 = vsel %vm81, %v83, %v85
  %v87 = vrot.slane %v65, 2
  %v88 = vsel %vm81, %v85, %v87
  %v89 = vrot.slane %v66, 2
  %v90 = vsel %vm81, %v87, %v89
  %v91 = vrot.slane %v67, 2
  %v92 = vsel %vm81, %v89, %v91
  %v93 = vrot.slane %v68, 2
  %v94 = vsel %vm81, %v91, %v93
  %v95 = vrot.slane %v69, 2
  %v96 = vsel %vm81, %v93, %v95
  %v97 = vrot.slane %v70, 2
  %v98 = vsel %vm81, %v95, %v97
  %99 = vrot.lane.b32.xlu0 %v84, 64
  %v100 = vpop.permute.xlu0 %99
  %101 = vrot.lane.b32.xlu0 %v86, 64
  %v102 = vpop.permute.xlu0 %101
  %103 = vrot.lane.b32.xlu0 %v88, 64
  %v104 = vpop.permute.xlu0 %103
  %105 = vrot.lane.b32.xlu0 %v90, 64
  %v106 = vpop.permute.xlu0 %105
  %107 = vrot.lane.b32.xlu0 %v92, 64
  %v108 = vpop.permute.xlu0 %107
  %109 = vrot.lane.b32.xlu0 %v94, 64
  %v110 = vpop.permute.xlu0 %109
  %111 = vrot.lane.b32.xlu0 %v96, 64
  %v112 = vpop.permute.xlu0 %111
  %113 = vrot.lane.b32.xlu0 %v98, 64
  %v114 = vpop.permute.xlu0 %113
  %vm123 = vcmask 1043456
  %v124 = vrot.slane %v62, 4
  %v125 = vrot.slane %v63, 4
  %v126 = vsel %vm123, %v124, %v125
  %v127 = vrot.slane %v64, 4
  %v128 = vsel %vm123, %v125, %v127
  %v129 = vrot.slane %v65, 4
  %v130 = vsel %vm123, %v127, %v129
  %v131 = vrot.slane %v66, 4
  %v132 = vsel %vm123, %v129, %v131
  %v133 = vrot.slane %v67, 4
  %v134 = vsel %vm123, %v131, %v133
  %v135 = vrot.slane %v68, 4
  %v136 = vsel %vm123, %v133, %v135
  %v137 = vrot.slane %v69, 4
  %v138 = vsel %vm123, %v135, %v137
  %v139 = vrot.slane %v70, 4
  %v140 = vsel %vm123, %v137, %v139
  %vm149 = vcmask 1041408
  %v150 = vrot.slane %v62, 6
  %v151 = vrot.slane %v63, 6
  %v152 = vsel %vm149, %v150, %v151
  %v153 = vrot.slane %v64, 6
  %v154 = vsel %vm149, %v151, %v153
  %v155 = vrot.slane %v65, 6
  %v156 = vsel %vm149, %v153, %v155
  %v157 = vrot.slane %v66, 6
  %v158 = vsel %vm149, %v155, %v157
  %v159 = vrot.slane %v67, 6
  %v160 = vsel %vm149, %v157, %v159
  %v161 = vrot.slane %v68, 6
  %v162 = vsel %vm149, %v159, %v161
  %v163 = vrot.slane %v69, 6
  %v164 = vsel %vm149, %v161, %v163
  %v165 = vrot.slane %v70, 6
  %v166 = vsel %vm149, %v163, %v165
  %167 = vrot.lane.b32.xlu0 %v152, 64
  %v168 = vpop.permute.xlu0 %167
  %169 = vrot.lane.b32.xlu0 %v154, 64
  %v170 = vpop.permute.xlu0 %169
  %171 = vrot.lane.b32.xlu0 %v156, 64
  %v172 = vpop.permute.xlu0 %171
  %173 = vrot.lane.b32.xlu0 %v158, 64
  %v174 = vpop.permute.xlu0 %173
  %175 = vrot.lane.b32.xlu0 %v160, 64
  %v176 = vpop.permute.xlu0 %175
  %177 = vrot.lane.b32.xlu0 %v162, 64
  %v178 = vpop.permute.xlu0 %177
  %179 = vrot.lane.b32.xlu0 %v164, 64
  %v180 = vpop.permute.xlu0 %179
  %181 = vrot.lane.b32.xlu0 %v166, 64
  %v182 = vpop.permute.xlu0 %181
  %v192 = vrot.slane %v71, 2
  %v193 = vsel %vm81, %v97, %v192
  %194 = vrot.lane.b32.xlu0 %v193, 64
  %v195 = vpop.permute.xlu0 %194
  %v197 = vrot.slane %v71, 4
  %v198 = vsel %vm123, %v139, %v197
  %v200 = vrot.slane %v71, 6
  %v201 = vsel %vm149, %v165, %v200
  %202 = vrot.lane.b32.xlu0 %v201, 64
  %v203 = vpop.permute.xlu0 %202
  %vm205 = vcmask 523264
  %v206 = vsel %vm205, %v62, %v100
  %v207 = vsel %vm205, %v63, %v102
  %v208 = vsel %vm205, %v64, %v104
  %v209 = vsel %vm205, %v65, %v106
  %v210 = vsel %vm205, %v66, %v108
  %v211 = vsel %vm205, %v67, %v110
  %v212 = vsel %vm205, %v68, %v112
  %v213 = vsel %vm205, %v69, %v114
  %v214 = vsel %vm205, %v126, %v168
  %v215 = vsel %vm205, %v128, %v170
  %v216 = vsel %vm205, %v130, %v172
  %v217 = vsel %vm205, %v132, %v174
  %v218 = vsel %vm205, %v134, %v176
  %v219 = vsel %vm205, %v136, %v178
  %v220 = vsel %vm205, %v138, %v180
  %v221 = vsel %vm205, %v140, %v182
  %v222 = vsel %vm205, %v70, %v195
  %v223 = vsel %vm205, %v198, %v203
  %v224 = vld [vmem:[%s2] sm:$0xff]
  %v225 = vld [vmem:[%s2 + $0x8] sm:$0xff]
  %v226 = vld [vmem:[%s2 + $0x10] sm:$0xff]
  %v227 = vld [vmem:[%s2 + $0x18] sm:$0xff]
  %v228 = vld [vmem:[%s2 + $0x20] sm:$0xff]
  %v229 = vld [vmem:[%s2 + $0x28] sm:$0xff]
  %v230 = vld [vmem:[%s2 + $0x30] sm:$0xff]
  %v231 = vld [vmem:[%s2 + $0x38] sm:$0xff]
  %v232 = vld [vmem:[%s2 + $0x40] sm:$0xff]
  %v233 = vld [vmem:[%s2 + $0x48] sm:$0xff]
  %v234 = vld [vmem:[%s2 + $0x50] sm:$0xff]
  %v235 = vld [vmem:[%s2 + $0x58] sm:$0xff]
  %v236 = vld [vmem:[%s2 + $0x60] sm:$0xff]
  %v237 = vld [vmem:[%s2 + $0x68] sm:$0xff]
  %v238 = vld [vmem:[%s2 + $0x70] sm:$0xff]
  %v239 = vld [vmem:[%s2 + $0x78] sm:$0xff]
  %v240 = vld [vmem:[%s2 + $0x80] sm:$0xff]
  %v241 = vld [vmem:[%s2 + $0x88] sm:$0xff]
  %v242 = vld [vmem:[%s2 + $0x90] sm:$0xff]
  %v243 = vld [vmem:[%s2 + $0x98] sm:$0xff]
  %v244 = vld [vmem:[%s2 + $0xa0] sm:$0xff]
  %v245 = vld [vmem:[%s2 + $0xa8] sm:$0xff]
  %v246 = vld [vmem:[%s2 + $0xb0] sm:$0xff]
  %v247 = vld [vmem:[%s2 + $0xb8] sm:$0xff]
  %v248 = vld [vmem:[%s2 + $0xc0] sm:$0xff]
  %v249 = vld [vmem:[%s2 + $0xc8] sm:$0xff]
  %v250 = vld [vmem:[%s2 + $0xd0] sm:$0xff]
  %v251 = vld [vmem:[%s2 + $0xd8] sm:$0xff]
  %v252 = vld [vmem:[%s2 + $0xe0] sm:$0xff]
  %v253 = vld [vmem:[%s2 + $0xe8] sm:$0xff]
  %v254 = vld [vmem:[%s2 + $0xf0] sm:$0xff]
  %v255 = vld [vmem:[%s2 + $0xf8] sm:$0xff]
  %v256 = vld [vmem:[%s2 + $0x100] sm:$0xff]
  %v257 = vld [vmem:[%s2 + $0x108] sm:$0xff]
  %v258 = vld [vmem:[%s2 + $0x110] sm:$0xff]
  %v259 = vld [vmem:[%s2 + $0x118] sm:$0xff]
  %v260 = vld [vmem:[%s2 + $0x120] sm:$0xff]
  %v261 = vld [vmem:[%s2 + $0x128] sm:$0xff]
  %v262 = vld [vmem:[%s2 + $0x130] sm:$0xff]
  %v263 = vld [vmem:[%s2 + $0x138] sm:$0xff]
  %v264 = vld [vmem:[%s2 + $0x140] sm:$0xff]
  %v265 = vld [vmem:[%s2 + $0x148] sm:$0xff]
  %v266 = vld [vmem:[%s2 + $0x150] sm:$0xff]
  %v267 = vld [vmem:[%s2 + $0x158] sm:$0xff]
  %v268 = vld [vmem:[%s2 + $0x160] sm:$0xff]
  %v269 = vld [vmem:[%s2 + $0x168] sm:$0xff]
  %v270 = vld [vmem:[%s2 + $0x170] sm:$0xff]
  %v271 = vld [vmem:[%s2 + $0x178] sm:$0xff]
  %v272 = vld [vmem:[%s2 + $0x180] sm:$0xff]
  %v273 = vld [vmem:[%s2 + $0x188] sm:$0xff]
  %v274 = vld [vmem:[%s2 + $0x190] sm:$0xff]
  %v275 = vld [vmem:[%s2 + $0x198] sm:$0xff]
  %v276 = vld [vmem:[%s2 + $0x1a0] sm:$0xff]
  %v277 = vld [vmem:[%s2 + $0x1a8] sm:$0xff]
  %v278 = vld [vmem:[%s2 + $0x1b0] sm:$0xff]
  %v279 = vld [vmem:[%s2 + $0x1b8] sm:$0xff]
  %v280 = vld [vmem:[%s2 + $0x1c0] sm:$0xff]
  %v281 = vld [vmem:[%s2 + $0x1c8] sm:$0xff]
  %v282 = vld [vmem:[%s2 + $0x1d0] sm:$0xff]
  %v283 = vld [vmem:[%s2 + $0x1d8] sm:$0xff]
  %v284 = vld [vmem:[%s2 + $0x1e0] sm:$0xff]
  %v285 = vld [vmem:[%s2 + $0x1e8] sm:$0xff]
  %v286 = vld [vmem:[%s2 + $0x1f0] sm:$0xff]
  %v287 = vld [vmem:[%s2 + $0x1f8] sm:$0xff]
  %v288 = vld [vmem:[%s3] sm:$0x1]
  %v290 = vlaneseq
  %v291 = vshrl.u32 %v290, 7
  %v292 = vsub.s32 0, %v291
  %v293 = vrot.slane %v288, %v292
  %295 = vmatprep.subr.mxu0 0.0
  %296 = vmatpush1.msra.mxu0 %v239
  %297 = vmatprep.subr.mxu0 0.0
  %298 = vmatpush1.msra.mxu0 %v238
  %299 = vmatprep.subr.mxu0 0.0
  %300 = vmatpush1.msra.mxu0 %v237
  %301 = vmatprep.subr.mxu0 0.0
  %302 = vmatpush1.msra.mxu0 %v236
  %303 = vmatprep.subr.mxu0 0.0
  %304 = vmatpush1.msra.mxu0 %v235
  %305 = vmatprep.subr.mxu0 0.0
  %306 = vmatpush1.msra.mxu0 %v234
  %307 = vmatprep.subr.mxu0 0.0
  %308 = vmatpush1.msra.mxu0 %v233
  %309 = vmatprep.subr.mxu0 0.0
  %310 = vmatpush1.msra.mxu0 %v232
  %311 = vmatprep.subr.mxu0 0.0
  %312 = vmatpush1.msra.mxu0 %v231
  %313 = vmatprep.subr.mxu0 0.0
  %314 = vmatpush1.msra.mxu0 %v230
  %315 = vmatprep.subr.mxu0 0.0
  %316 = vmatpush1.msra.mxu0 %v229
  %317 = vmatprep.subr.mxu0 0.0
  %318 = vmatpush1.msra.mxu0 %v228
  %319 = vmatprep.subr.mxu0 0.0
  %320 = vmatpush1.msra.mxu0 %v227
  %321 = vmatprep.subr.mxu0 0.0
  %322 = vmatpush1.msra.mxu0 %v226
  %323 = vmatprep.subr.mxu0 0.0
  %324 = vmatpush1.msra.mxu0 %v225
  %325 = vmatprep.subr.mxu0 0.0
  %326 = vmatpush1.msra.mxu0 %v224
  %327 = vmatprep.subr.mxu0 0.0
  %328 = vmatpush2.msra.mxu0 %v255
  %329 = vmatprep.subr.mxu0 0.0
  %330 = vmatpush2.msra.mxu0 %v254
  %331 = vmatprep.subr.mxu0 0.0
  %332 = vmatpush2.msra.mxu0 %v253
  %333 = vmatprep.subr.mxu0 0.0
  %334 = vmatpush2.msra.mxu0 %v252
  %335 = vmatprep.subr.mxu0 0.0
  %336 = vmatpush2.msra.mxu0 %v251
  %337 = vmatprep.subr.mxu0 0.0
  %338 = vmatpush2.msra.mxu0 %v250
  %339 = vmatprep.subr.mxu0 0.0
  %340 = vmatpush2.msra.mxu0 %v249
  %341 = vmatprep.subr.mxu0 0.0
  %342 = vmatpush2.msra.mxu0 %v248
  %343 = vmatprep.subr.mxu0 0.0
  %344 = vmatpush2.msra.mxu0 %v247
  %345 = vmatprep.subr.mxu0 0.0
  %346 = vmatpush2.msra.mxu0 %v246
  %347 = vmatprep.subr.mxu0 0.0
  %348 = vmatpush2.msra.mxu0 %v245
  %349 = vmatprep.subr.mxu0 0.0
  %350 = vmatpush2.msra.mxu0 %v244
  %351 = vmatprep.subr.mxu0 0.0
  %352 = vmatpush2.msra.mxu0 %v243
  %353 = vmatprep.subr.mxu0 0.0
  %354 = vmatpush2.msra.mxu0 %v242
  %355 = vmatprep.subr.mxu0 0.0
  %356 = vmatpush2.msra.mxu0 %v241
  %357 = vmatprep.subr.mxu0 0.0
  %358 = vmatpush2.msra.mxu0 %v240
  %359 = vmatprep.mubr.f32.mxu0 %v214
  %360 = vmatmul.mubr.f32.gmra.mxu0 %v206
  %v361 = vpop.f32.mrf.mxu0
  %v362 = vadd.f32 %v293, %v361
  %v363 = vpop.f32.mrf.mxu0
  %364 = vmatprep.mubr.f32.mxu0 %v215
  %365 = vmatmul.mubr.f32.gmra.mxu0 %v207
  %v366 = vpop.f32.mrf.mxu0
  %v367 = vadd.f32 %v293, %v366
  %v368 = vpop.f32.mrf.mxu0
  %369 = vmatprep.mubr.f32.mxu0 %v216
  %370 = vmatmul.mubr.f32.gmra.mxu0 %v208
  %v371 = vpop.f32.mrf.mxu0
  %v372 = vadd.f32 %v293, %v371
  %v373 = vpop.f32.mrf.mxu0
  %374 = vmatprep.mubr.f32.mxu0 %v217
  %375 = vmatmul.mubr.f32.gmra.mxu0 %v209
  %v376 = vpop.f32.mrf.mxu0
  %v377 = vadd.f32 %v293, %v376
  %v378 = vpop.f32.mrf.mxu0
  %379 = vmatprep.mubr.f32.mxu0 %v218
  %380 = vmatmul.mubr.f32.gmra.mxu0 %v210
  %v381 = vpop.f32.mrf.mxu0
  %v382 = vadd.f32 %v293, %v381
  %v383 = vpop.f32.mrf.mxu0
  %384 = vmatprep.mubr.f32.mxu0 %v219
  %385 = vmatmul.mubr.f32.gmra.mxu0 %v211
  %v386 = vpop.f32.mrf.mxu0
  %v387 = vadd.f32 %v293, %v386
  %v388 = vpop.f32.mrf.mxu0
  %389 = vmatprep.mubr.f32.mxu0 %v220
  %390 = vmatmul.mubr.f32.gmra.mxu0 %v212
  %v391 = vpop.f32.mrf.mxu0
  %v392 = vadd.f32 %v293, %v391
  %v393 = vpop.f32.mrf.mxu0
  %394 = vmatprep.mubr.f32.mxu0 %v221
  %395 = vmatmul.mubr.f32.gmra.mxu0 %v213
  %v396 = vpop.f32.mrf.mxu0
  %v397 = vadd.f32 %v293, %v396
  %v398 = vpop.f32.mrf.mxu0
  %399 = vdwg.mxu0
  %400 = vmatprep.subr.mxu0 0.0
  %401 = vmatpush1.msra.mxu0 %v271
  %402 = vmatprep.subr.mxu0 0.0
  %403 = vmatpush1.msra.mxu0 %v270
  %404 = vmatprep.subr.mxu0 0.0
  %405 = vmatpush1.msra.mxu0 %v269
  %406 = vmatprep.subr.mxu0 0.0
  %407 = vmatpush1.msra.mxu0 %v268
  %408 = vmatprep.subr.mxu0 0.0
  %409 = vmatpush1.msra.mxu0 %v267
  %410 = vmatprep.subr.mxu0 0.0
  %411 = vmatpush1.msra.mxu0 %v266
  %412 = vmatprep.subr.mxu0 0.0
  %413 = vmatpush1.msra.mxu0 %v265
  %414 = vmatprep.subr.mxu0 0.0
  %415 = vmatpush1.msra.mxu0 %v264
  %416 = vmatprep.subr.mxu0 0.0
  %417 = vmatpush1.msra.mxu0 %v263
  %418 = vmatprep.subr.mxu0 0.0
  %419 = vmatpush1.msra.mxu0 %v262
  %420 = vmatprep.subr.mxu0 0.0
  %421 = vmatpush1.msra.mxu0 %v261
  %422 = vmatprep.subr.mxu0 0.0
  %423 = vmatpush1.msra.mxu0 %v260
  %424 = vmatprep.subr.mxu0 0.0
  %425 = vmatpush1.msra.mxu0 %v259
  %426 = vmatprep.subr.mxu0 0.0
  %427 = vmatpush1.msra.mxu0 %v258
  %428 = vmatprep.subr.mxu0 0.0
  %429 = vmatpush1.msra.mxu0 %v257
  %430 = vmatprep.subr.mxu0 0.0
  %431 = vmatpush1.msra.mxu0 %v256
  %432 = vmatprep.subr.mxu0 0.0
  %433 = vmatpush2.msra.mxu0 %v287
  %434 = vmatprep.subr.mxu0 0.0
  %435 = vmatpush2.msra.mxu0 %v286
  %436 = vmatprep.subr.mxu0 0.0
  %437 = vmatpush2.msra.mxu0 %v285
  %438 = vmatprep.subr.mxu0 0.0
  %439 = vmatpush2.msra.mxu0 %v284
  %440 = vmatprep.subr.mxu0 0.0
  %441 = vmatpush2.msra.mxu0 %v283
  %442 = vmatprep.subr.mxu0 0.0
  %443 = vmatpush2.msra.mxu0 %v282
  %444 = vmatprep.subr.mxu0 0.0
  %445 = vmatpush2.msra.mxu0 %v281
  %446 = vmatprep.subr.mxu0 0.0
  %447 = vmatpush2.msra.mxu0 %v280
  %448 = vmatprep.subr.mxu0 0.0
  %449 = vmatpush2.msra.mxu0 %v279
  %450 = vmatprep.subr.mxu0 0.0
  %451 = vmatpush2.msra.mxu0 %v278
  %452 = vmatprep.subr.mxu0 0.0
  %453 = vmatpush2.msra.mxu0 %v277
  %454 = vmatprep.subr.mxu0 0.0
  %455 = vmatpush2.msra.mxu0 %v276
  %456 = vmatprep.subr.mxu0 0.0
  %457 = vmatpush2.msra.mxu0 %v275
  %458 = vmatprep.subr.mxu0 0.0
  %459 = vmatpush2.msra.mxu0 %v274
  %460 = vmatprep.subr.mxu0 0.0
  %461 = vmatpush2.msra.mxu0 %v273
  %462 = vmatprep.subr.mxu0 0.0
  %463 = vmatpush2.msra.mxu0 %v272
  %464 = vmatprep.mubr.f32.mxu0 %v215
  %465 = vmatmul.mubr.f32.gmra.mxu0 %v207
  %v466 = vpop.f32.mrf.mxu0
  %v467 = vadd.f32 %v362, %v466
  %v468 = vpop.f32.mrf.mxu0
  %469 = vmatprep.mubr.f32.mxu0 %v216
  %470 = vmatmul.mubr.f32.gmra.mxu0 %v208
  %v471 = vpop.f32.mrf.mxu0
  %v472 = vadd.f32 %v367, %v471
  %v473 = vpop.f32.mrf.mxu0
  %474 = vmatprep.mubr.f32.mxu0 %v217
  %475 = vmatmul.mubr.f32.gmra.mxu0 %v209
  %v476 = vpop.f32.mrf.mxu0
  %v477 = vadd.f32 %v372, %v476
  %v478 = vpop.f32.mrf.mxu0
  %479 = vmatprep.mubr.f32.mxu0 %v218
  %480 = vmatmul.mubr.f32.gmra.mxu0 %v210
  %v481 = vpop.f32.mrf.mxu0
  %v482 = vadd.f32 %v377, %v481
  %v483 = vpop.f32.mrf.mxu0
  %484 = vmatprep.mubr.f32.mxu0 %v219
  %485 = vmatmul.mubr.f32.gmra.mxu0 %v211
  %v486 = vpop.f32.mrf.mxu0
  %v487 = vadd.f32 %v382, %v486
  %v488 = vpop.f32.mrf.mxu0
  %489 = vmatprep.mubr.f32.mxu0 %v220
  %490 = vmatmul.mubr.f32.gmra.mxu0 %v212
  %v491 = vpop.f32.mrf.mxu0
  %v492 = vadd.f32 %v387, %v491
  %v493 = vpop.f32.mrf.mxu0
  %494 = vmatprep.mubr.f32.mxu0 %v221
  %495 = vmatmul.mubr.f32.gmra.mxu0 %v213
  %v496 = vpop.f32.mrf.mxu0
  %v497 = vadd.f32 %v392, %v496
  %v498 = vpop.f32.mrf.mxu0
  %499 = vmatprep.mubr.f32.mxu0 %v223
  %500 = vmatmul.mubr.f32.gmra.mxu0 %v222
  %v501 = vpop.f32.mrf.mxu0
  %v502 = vadd.f32 %v397, %v501
  %v503 = vpop.f32.mrf.mxu0
  %504 = vdwg.mxu0
  %v505 = vld [vmem:[%s4] sm:$0x1]
  %v506 = vld [vmem:[%s5] sm:$0x1]
  %v507 = vsel %vm205, %v467, 0.0
  %508 = vadd.xlane.f32.xlu0 %v507
  %v509 = vpop.xlane.xlu0 %508
  %v510 = vsel %vm205, %v472, 0.0
  %511 = vadd.xlane.f32.xlu0 %v510
  %v512 = vpop.xlane.xlu0 %511
  %v513 = vsel %vm205, %v477, 0.0
  %514 = vadd.xlane.f32.xlu0 %v513
  %v515 = vpop.xlane.xlu0 %514
  %v516 = vsel %vm205, %v482, 0.0
  %517 = vadd.xlane.f32.xlu0 %v516
  %v518 = vpop.xlane.xlu0 %517
  %v519 = vsel %vm205, %v487, 0.0
  %520 = vadd.xlane.f32.xlu0 %v519
  %v521 = vpop.xlane.xlu0 %520
  %v522 = vsel %vm205, %v492, 0.0
  %523 = vadd.xlane.f32.xlu0 %v522
  %v524 = vpop.xlane.xlu0 %523
  %v525 = vsel %vm205, %v497, 0.0
  %526 = vadd.xlane.f32.xlu0 %v525
  %v527 = vpop.xlane.xlu0 %526
  %v528 = vsel %vm205, %v502, 0.0
  %529 = vadd.xlane.f32.xlu0 %v528
  %v530 = vpop.xlane.xlu0 %529
  %v531 = vrcp.pop 64.0
  %v532 = vmul.f32 %v509, %v531
  %v533 = vmul.f32 %v512, %v531
  %v534 = vmul.f32 %v515, %v531
  %v535 = vmul.f32 %v518, %v531
  %v536 = vmul.f32 %v521, %v531
  %v537 = vmul.f32 %v524, %v531
  %v538 = vmul.f32 %v527, %v531
  %v539 = vmul.f32 %v530, %v531
  %v540 = vsub.f32 %v467, %v532
  %v541 = vsub.f32 %v472, %v533
  %v542 = vsub.f32 %v477, %v534
  %v543 = vsub.f32 %v482, %v535
  %v544 = vsub.f32 %v487, %v536
  %v545 = vsub.f32 %v492, %v537
  %v546 = vsub.f32 %v497, %v538
  %v547 = vsub.f32 %v502, %v539
  %v548 = vmul.f32 %v540, %v540
  %v549 = vmul.f32 %v541, %v541
  %v550 = vmul.f32 %v542, %v542
  %v551 = vmul.f32 %v543, %v543
  %v552 = vmul.f32 %v544, %v544
  %v553 = vmul.f32 %v545, %v545
  %v554 = vmul.f32 %v546, %v546
  %v555 = vmul.f32 %v547, %v547
  %v556 = vsel %vm205, %v548, 0.0
  %557 = vadd.xlane.f32.xlu0 %v556
  %v558 = vpop.xlane.xlu0 %557
  %v559 = vsel %vm205, %v549, 0.0
  %560 = vadd.xlane.f32.xlu0 %v559
  %v561 = vpop.xlane.xlu0 %560
  %v562 = vsel %vm205, %v550, 0.0
  %563 = vadd.xlane.f32.xlu0 %v562
  %v564 = vpop.xlane.xlu0 %563
  %v565 = vsel %vm205, %v551, 0.0
  %566 = vadd.xlane.f32.xlu0 %v565
  %v567 = vpop.xlane.xlu0 %566
  %v568 = vsel %vm205, %v552, 0.0
  %569 = vadd.xlane.f32.xlu0 %v568
  %v570 = vpop.xlane.xlu0 %569
  %v571 = vsel %vm205, %v553, 0.0
  %572 = vadd.xlane.f32.xlu0 %v571
  %v573 = vpop.xlane.xlu0 %572
  %v574 = vsel %vm205, %v554, 0.0
  %575 = vadd.xlane.f32.xlu0 %v574
  %v576 = vpop.xlane.xlu0 %575
  %v577 = vsel %vm205, %v555, 0.0
  %578 = vadd.xlane.f32.xlu0 %v577
  %v579 = vpop.xlane.xlu0 %578
  %v580 = vmul.f32 %v558, %v531
  %v581 = vmul.f32 %v561, %v531
  %v582 = vmul.f32 %v564, %v531
  %v583 = vmul.f32 %v567, %v531
  %v584 = vmul.f32 %v570, %v531
  %v585 = vmul.f32 %v573, %v531
  %v586 = vmul.f32 %v576, %v531
  %v587 = vmul.f32 %v579, %v531
  %v588 = vadd.f32 %v580, 1e-05
  %v589 = vadd.f32 %v581, 1e-05
  %v590 = vadd.f32 %v582, 1e-05
  %v591 = vadd.f32 %v583, 1e-05
  %v592 = vadd.f32 %v584, 1e-05
  %v593 = vadd.f32 %v585, 1e-05
  %v594 = vadd.f32 %v586, 1e-05
  %v595 = vadd.f32 %v587, 1e-05
  %v596 = vrsqrt.pop %v588
  %v597 = vrsqrt.pop %v589
  %v598 = vrsqrt.pop %v590
  %v599 = vrsqrt.pop %v591
  %v600 = vrsqrt.pop %v592
  %v601 = vrsqrt.pop %v593
  %v602 = vrsqrt.pop %v594
  %v603 = vrsqrt.pop %v595
  %v604 = vmul.f32 %v540, %v596
  %v605 = vmul.f32 %v541, %v597
  %v606 = vmul.f32 %v542, %v598
  %v607 = vmul.f32 %v543, %v599
  %v608 = vmul.f32 %v544, %v600
  %v609 = vmul.f32 %v545, %v601
  %v610 = vmul.f32 %v546, %v602
  %v611 = vmul.f32 %v547, %v603
  %v613 = vlaneseq
  %v614 = vshrl.u32 %v613, 7
  %v615 = vsub.s32 0, %v614
  %v616 = vrot.slane %v505, %v615
  %v618 = vmul.f32 %v604, %v616
  %v619 = vmul.f32 %v605, %v616
  %v620 = vmul.f32 %v606, %v616
  %v621 = vmul.f32 %v607, %v616
  %v622 = vmul.f32 %v608, %v616
  %v623 = vmul.f32 %v609, %v616
  %v624 = vmul.f32 %v610, %v616
  %v625 = vmul.f32 %v611, %v616
  %v627 = vlaneseq
  %v628 = vshrl.u32 %v627, 7
  %v629 = vsub.s32 0, %v628
  %v630 = vrot.slane %v506, %v629
  %v632 = vadd.f32 %v618, %v630
  %v633 = vadd.f32 %v619, %v630
  %v634 = vadd.f32 %v620, %v630
  %v635 = vadd.f32 %v621, %v630
  %v636 = vadd.f32 %v622, %v630
  %v637 = vadd.f32 %v623, %v630
  %v638 = vadd.f32 %v624, %v630
  %v639 = vadd.f32 %v625, %v630
  %v640 = vld [vmem:[%s6] sm:$0x1]
  %v641 = vld [vmem:[%s7] sm:$0x1]
  %650 = vrot.lane.b32.xlu0 %v467, 64
  %v651 = vpop.permute.xlu0 %650
  %652 = vrot.lane.b32.xlu0 %v472, 64
  %v653 = vpop.permute.xlu0 %652
  %654 = vrot.lane.b32.xlu0 %v477, 64
  %v655 = vpop.permute.xlu0 %654
  %656 = vrot.lane.b32.xlu0 %v482, 64
  %v657 = vpop.permute.xlu0 %656
  %658 = vrot.lane.b32.xlu0 %v487, 64
  %v659 = vpop.permute.xlu0 %658
  %660 = vrot.lane.b32.xlu0 %v492, 64
  %v661 = vpop.permute.xlu0 %660
  %662 = vrot.lane.b32.xlu0 %v497, 64
  %v663 = vpop.permute.xlu0 %662
  %664 = vrot.lane.b32.xlu0 %v502, 64
  %v665 = vpop.permute.xlu0 %664
  %v674 = vsel %vm205, %v651, 0.0
  %675 = vadd.xlane.f32.xlu0 %v674
  %v676 = vpop.xlane.xlu0 %675
  %v677 = vsel %vm205, %v653, 0.0
  %678 = vadd.xlane.f32.xlu0 %v677
  %v679 = vpop.xlane.xlu0 %678
  %v680 = vsel %vm205, %v655, 0.0
  %681 = vadd.xlane.f32.xlu0 %v680
  %v682 = vpop.xlane.xlu0 %681
  %v683 = vsel %vm205, %v657, 0.0
  %684 = vadd.xlane.f32.xlu0 %v683
  %v685 = vpop.xlane.xlu0 %684
  %v686 = vsel %vm205, %v659, 0.0
  %687 = vadd.xlane.f32.xlu0 %v686
  %v688 = vpop.xlane.xlu0 %687
  %v689 = vsel %vm205, %v661, 0.0
  %690 = vadd.xlane.f32.xlu0 %v689
  %v691 = vpop.xlane.xlu0 %690
  %v692 = vsel %vm205, %v663, 0.0
  %693 = vadd.xlane.f32.xlu0 %v692
  %v694 = vpop.xlane.xlu0 %693
  %v695 = vsel %vm205, %v665, 0.0
  %696 = vadd.xlane.f32.xlu0 %v695
  %v697 = vpop.xlane.xlu0 %696
  %v698 = vmul.f32 %v676, %v531
  %v699 = vmul.f32 %v679, %v531
  %v700 = vmul.f32 %v682, %v531
  %v701 = vmul.f32 %v685, %v531
  %v702 = vmul.f32 %v688, %v531
  %v703 = vmul.f32 %v691, %v531
  %v704 = vmul.f32 %v694, %v531
  %v705 = vmul.f32 %v697, %v531
  %v706 = vsub.f32 %v467, %v698
  %v707 = vsub.f32 %v472, %v699
  %v708 = vsub.f32 %v477, %v700
  %v709 = vsub.f32 %v482, %v701
  %v710 = vsub.f32 %v487, %v702
  %v711 = vsub.f32 %v492, %v703
  %v712 = vsub.f32 %v497, %v704
  %v713 = vsub.f32 %v502, %v705
  %v714 = vmul.f32 %v706, %v706
  %v715 = vmul.f32 %v707, %v707
  %v716 = vmul.f32 %v708, %v708
  %v717 = vmul.f32 %v709, %v709
  %v718 = vmul.f32 %v710, %v710
  %v719 = vmul.f32 %v711, %v711
  %v720 = vmul.f32 %v712, %v712
  %v721 = vmul.f32 %v713, %v713
  %730 = vrot.lane.b32.xlu0 %v714, 64
  %v731 = vpop.permute.xlu0 %730
  %732 = vrot.lane.b32.xlu0 %v715, 64
  %v733 = vpop.permute.xlu0 %732
  %734 = vrot.lane.b32.xlu0 %v716, 64
  %v735 = vpop.permute.xlu0 %734
  %736 = vrot.lane.b32.xlu0 %v717, 64
  %v737 = vpop.permute.xlu0 %736
  %738 = vrot.lane.b32.xlu0 %v718, 64
  %v739 = vpop.permute.xlu0 %738
  %740 = vrot.lane.b32.xlu0 %v719, 64
  %v741 = vpop.permute.xlu0 %740
  %742 = vrot.lane.b32.xlu0 %v720, 64
  %v743 = vpop.permute.xlu0 %742
  %744 = vrot.lane.b32.xlu0 %v721, 64
  %v745 = vpop.permute.xlu0 %744
  %v754 = vsel %vm205, %v731, 0.0
  %755 = vadd.xlane.f32.xlu0 %v754
  %v756 = vpop.xlane.xlu0 %755
  %v757 = vsel %vm205, %v733, 0.0
  %758 = vadd.xlane.f32.xlu0 %v757
  %v759 = vpop.xlane.xlu0 %758
  %v760 = vsel %vm205, %v735, 0.0
  %761 = vadd.xlane.f32.xlu0 %v760
  %v762 = vpop.xlane.xlu0 %761
  %v763 = vsel %vm205, %v737, 0.0
  %764 = vadd.xlane.f32.xlu0 %v763
  %v765 = vpop.xlane.xlu0 %764
  %v766 = vsel %vm205, %v739, 0.0
  %767 = vadd.xlane.f32.xlu0 %v766
  %v768 = vpop.xlane.xlu0 %767
  %v769 = vsel %vm205, %v741, 0.0
  %770 = vadd.xlane.f32.xlu0 %v769
  %v771 = vpop.xlane.xlu0 %770
  %v772 = vsel %vm205, %v743, 0.0
  %773 = vadd.xlane.f32.xlu0 %v772
  %v774 = vpop.xlane.xlu0 %773
  %v775 = vsel %vm205, %v745, 0.0
  %776 = vadd.xlane.f32.xlu0 %v775
  %v777 = vpop.xlane.xlu0 %776
  %v778 = vmul.f32 %v756, %v531
  %v779 = vmul.f32 %v759, %v531
  %v780 = vmul.f32 %v762, %v531
  %v781 = vmul.f32 %v765, %v531
  %v782 = vmul.f32 %v768, %v531
  %v783 = vmul.f32 %v771, %v531
  %v784 = vmul.f32 %v774, %v531
  %v785 = vmul.f32 %v777, %v531
  %v786 = vadd.f32 %v778, 1e-05
  %v787 = vadd.f32 %v779, 1e-05
  %v788 = vadd.f32 %v780, 1e-05
  %v789 = vadd.f32 %v781, 1e-05
  %v790 = vadd.f32 %v782, 1e-05
  %v791 = vadd.f32 %v783, 1e-05
  %v792 = vadd.f32 %v784, 1e-05
  %v793 = vadd.f32 %v785, 1e-05
  %v794 = vrsqrt.pop %v786
  %v795 = vrsqrt.pop %v787
  %v796 = vrsqrt.pop %v788
  %v797 = vrsqrt.pop %v789
  %v798 = vrsqrt.pop %v790
  %v799 = vrsqrt.pop %v791
  %v800 = vrsqrt.pop %v792
  %v801 = vrsqrt.pop %v793
  %v802 = vmul.f32 %v706, %v794
  %v803 = vmul.f32 %v707, %v795
  %v804 = vmul.f32 %v708, %v796
  %v805 = vmul.f32 %v709, %v797
  %v806 = vmul.f32 %v710, %v798
  %v807 = vmul.f32 %v711, %v799
  %v808 = vmul.f32 %v712, %v800
  %v809 = vmul.f32 %v713, %v801
  %v811 = vlaneseq
  %v812 = vshrl.u32 %v811, 7
  %v813 = vsub.s32 0, %v812
  %v814 = vrot.slane %v640, %v813
  %815 = vrot.lane.b32.xlu0 %v814, 64
  %v816 = vpop.permute.xlu0 %815
  %v818 = vmul.f32 %v802, %v816
  %v819 = vmul.f32 %v803, %v816
  %v820 = vmul.f32 %v804, %v816
  %v821 = vmul.f32 %v805, %v816
  %v822 = vmul.f32 %v806, %v816
  %v823 = vmul.f32 %v807, %v816
  %v824 = vmul.f32 %v808, %v816
  %v825 = vmul.f32 %v809, %v816
  %v827 = vlaneseq
  %v828 = vshrl.u32 %v827, 7
  %v829 = vsub.s32 0, %v828
  %v830 = vrot.slane %v641, %v829
  %831 = vrot.lane.b32.xlu0 %v830, 64
  %v832 = vpop.permute.xlu0 %831
  %v834 = vadd.f32 %v818, %v832
  %v835 = vadd.f32 %v819, %v832
  %v836 = vadd.f32 %v820, %v832
  %v837 = vadd.f32 %v821, %v832
  %v838 = vadd.f32 %v822, %v832
  %v839 = vadd.f32 %v823, %v832
  %v840 = vadd.f32 %v824, %v832
  %v841 = vadd.f32 %v825, %v832
  %850 = vrot.lane.b32.xlu0 %v834, 64
  %v851 = vpop.permute.xlu0 %850
  %852 = vrot.lane.b32.xlu0 %v835, 64
  %v853 = vpop.permute.xlu0 %852
  %854 = vrot.lane.b32.xlu0 %v836, 64
  %v855 = vpop.permute.xlu0 %854
  %856 = vrot.lane.b32.xlu0 %v837, 64
  %v857 = vpop.permute.xlu0 %856
  %858 = vrot.lane.b32.xlu0 %v838, 64
  %v859 = vpop.permute.xlu0 %858
  %860 = vrot.lane.b32.xlu0 %v839, 64
  %v861 = vpop.permute.xlu0 %860
  %862 = vrot.lane.b32.xlu0 %v840, 64
  %v863 = vpop.permute.xlu0 %862
  %864 = vrot.lane.b32.xlu0 %v841, 64
  %v865 = vpop.permute.xlu0 %864
  %v874 = vadd.f32 %v632, %v851
  %v875 = vadd.f32 %v633, %v853
  %v876 = vadd.f32 %v634, %v855
  %v877 = vadd.f32 %v635, %v857
  %v878 = vadd.f32 %v636, %v859
  %v879 = vadd.f32 %v637, %v861
  %v880 = vadd.f32 %v638, %v863
  %v881 = vadd.f32 %v639, %v865
  %v882 = vld [vmem:[%s8] sm:$0x1]
  %v883 = vld [vmem:[%s9] sm:$0x1]
  %v884 = vsel %vm205, %v874, 0.0
  %885 = vadd.xlane.f32.xlu0 %v884
  %v886 = vpop.xlane.xlu0 %885
  %v887 = vsel %vm205, %v875, 0.0
  %888 = vadd.xlane.f32.xlu0 %v887
  %v889 = vpop.xlane.xlu0 %888
  %v890 = vsel %vm205, %v876, 0.0
  %891 = vadd.xlane.f32.xlu0 %v890
  %v892 = vpop.xlane.xlu0 %891
  %v893 = vsel %vm205, %v877, 0.0
  %894 = vadd.xlane.f32.xlu0 %v893
  %v895 = vpop.xlane.xlu0 %894
  %v896 = vsel %vm205, %v878, 0.0
  %897 = vadd.xlane.f32.xlu0 %v896
  %v898 = vpop.xlane.xlu0 %897
  %v899 = vsel %vm205, %v879, 0.0
  %900 = vadd.xlane.f32.xlu0 %v899
  %v901 = vpop.xlane.xlu0 %900
  %v902 = vsel %vm205, %v880, 0.0
  %903 = vadd.xlane.f32.xlu0 %v902
  %v904 = vpop.xlane.xlu0 %903
  %v905 = vsel %vm205, %v881, 0.0
  %906 = vadd.xlane.f32.xlu0 %v905
  %v907 = vpop.xlane.xlu0 %906
  %v908 = vmul.f32 %v886, %v531
  %v909 = vmul.f32 %v889, %v531
  %v910 = vmul.f32 %v892, %v531
  %v911 = vmul.f32 %v895, %v531
  %v912 = vmul.f32 %v898, %v531
  %v913 = vmul.f32 %v901, %v531
  %v914 = vmul.f32 %v904, %v531
  %v915 = vmul.f32 %v907, %v531
  %v916 = vsub.f32 %v874, %v908
  %v917 = vsub.f32 %v875, %v909
  %v918 = vsub.f32 %v876, %v910
  %v919 = vsub.f32 %v877, %v911
  %v920 = vsub.f32 %v878, %v912
  %v921 = vsub.f32 %v879, %v913
  %v922 = vsub.f32 %v880, %v914
  %v923 = vsub.f32 %v881, %v915
  %v924 = vmul.f32 %v916, %v916
  %v925 = vmul.f32 %v917, %v917
  %v926 = vmul.f32 %v918, %v918
  %v927 = vmul.f32 %v919, %v919
  %v928 = vmul.f32 %v920, %v920
  %v929 = vmul.f32 %v921, %v921
  %v930 = vmul.f32 %v922, %v922
  %v931 = vmul.f32 %v923, %v923
  %v932 = vsel %vm205, %v924, 0.0
  %933 = vadd.xlane.f32.xlu0 %v932
  %v934 = vpop.xlane.xlu0 %933
  %v935 = vsel %vm205, %v925, 0.0
  %936 = vadd.xlane.f32.xlu0 %v935
  %v937 = vpop.xlane.xlu0 %936
  %v938 = vsel %vm205, %v926, 0.0
  %939 = vadd.xlane.f32.xlu0 %v938
  %v940 = vpop.xlane.xlu0 %939
  %v941 = vsel %vm205, %v927, 0.0
  %942 = vadd.xlane.f32.xlu0 %v941
  %v943 = vpop.xlane.xlu0 %942
  %v944 = vsel %vm205, %v928, 0.0
  %945 = vadd.xlane.f32.xlu0 %v944
  %v946 = vpop.xlane.xlu0 %945
  %v947 = vsel %vm205, %v929, 0.0
  %948 = vadd.xlane.f32.xlu0 %v947
  %v949 = vpop.xlane.xlu0 %948
  %v950 = vsel %vm205, %v930, 0.0
  %951 = vadd.xlane.f32.xlu0 %v950
  %v952 = vpop.xlane.xlu0 %951
  %v953 = vsel %vm205, %v931, 0.0
  %954 = vadd.xlane.f32.xlu0 %v953
  %v955 = vpop.xlane.xlu0 %954
  %v956 = vmul.f32 %v934, %v531
  %v957 = vmul.f32 %v937, %v531
  %v958 = vmul.f32 %v940, %v531
  %v959 = vmul.f32 %v943, %v531
  %v960 = vmul.f32 %v946, %v531
  %v961 = vmul.f32 %v949, %v531
  %v962 = vmul.f32 %v952, %v531
  %v963 = vmul.f32 %v955, %v531
  %v964 = vadd.f32 %v956, 1e-05
  %v965 = vadd.f32 %v957, 1e-05
  %v966 = vadd.f32 %v958, 1e-05
  %v967 = vadd.f32 %v959, 1e-05
  %v968 = vadd.f32 %v960, 1e-05
  %v969 = vadd.f32 %v961, 1e-05
  %v970 = vadd.f32 %v962, 1e-05
  %v971 = vadd.f32 %v963, 1e-05
  %v972 = vrsqrt.pop %v964
  %v973 = vrsqrt.pop %v965
  %v974 = vrsqrt.pop %v966
  %v975 = vrsqrt.pop %v967
  %v976 = vrsqrt.pop %v968
  %v977 = vrsqrt.pop %v969
  %v978 = vrsqrt.pop %v970
  %v979 = vrsqrt.pop %v971
  %v980 = vmul.f32 %v916, %v972
  %v981 = vmul.f32 %v917, %v973
  %v982 = vmul.f32 %v918, %v974
  %v983 = vmul.f32 %v919, %v975
  %v984 = vmul.f32 %v920, %v976
  %v985 = vmul.f32 %v921, %v977
  %v986 = vmul.f32 %v922, %v978
  %v987 = vmul.f32 %v923, %v979
  %v989 = vlaneseq
  %v990 = vshrl.u32 %v989, 7
  %v991 = vsub.s32 0, %v990
  %v992 = vrot.slane %v882, %v991
  %v994 = vmul.f32 %v980, %v992
  %v995 = vmul.f32 %v981, %v992
  %v996 = vmul.f32 %v982, %v992
  %v997 = vmul.f32 %v983, %v992
  %v998 = vmul.f32 %v984, %v992
  %v999 = vmul.f32 %v985, %v992
  %v1000 = vmul.f32 %v986, %v992
  %v1001 = vmul.f32 %v987, %v992
  %v1003 = vlaneseq
  %v1004 = vshrl.u32 %v1003, 7
  %v1005 = vsub.s32 0, %v1004
  %v1006 = vrot.slane %v883, %v1005
  %v1008 = vadd.f32 %v994, %v1006
  %v1009 = vadd.f32 %v995, %v1006
  %v1010 = vadd.f32 %v996, %v1006
  %v1011 = vadd.f32 %v997, %v1006
  %v1012 = vadd.f32 %v998, %v1006
  %v1013 = vadd.f32 %v999, %v1006
  %v1014 = vadd.f32 %v1000, %v1006
  %v1015 = vadd.f32 %v1001, %v1006
  %1016 = vst.msk [vmem:[%s10] sm:$0xff] %vm205, %v1008
  %1017 = vst.msk [vmem:[%s10 + $0x8] sm:$0xff] %vm205, %v1009
  %1018 = vst.msk [vmem:[%s10 + $0x10] sm:$0xff] %vm205, %v1010
  %1019 = vst.msk [vmem:[%s10 + $0x18] sm:$0xff] %vm205, %v1011
  %1020 = vst.msk [vmem:[%s10 + $0x20] sm:$0xff] %vm205, %v1012
  %1021 = vst.msk [vmem:[%s10 + $0x28] sm:$0xff] %vm205, %v1013
  %1022 = vst.msk [vmem:[%s10 + $0x30] sm:$0xff] %vm205, %v1014
  %1023 = vst.msk [vmem:[%s10 + $0x38] sm:$0xff] %vm205, %v1015
  // Predicated region
  $region42: #{fabis6_forward.2} parent=0 // pred_check
    _
  $region43: #{fabis6_forward.2} parent=0 // pred_check_branch
    %1025 = sbr.rel (0) target = $region45
  $region44: #{fabis6_forward.2} parent=0 // pred_region
    _
  $region45: #{fabis6_forward.2} parent=0 // pred_fallthru
    _
  // Predicated region
  $region46: #{fabis6_forward.2} parent=0 // pred_check
    _
  $region47: #{fabis6_forward.2} parent=0 // pred_check_branch
    %1027 = sbr.rel (0) target = $region49
  $region48: #{fabis6_forward.2} parent=0 // pred_region
    _
  $region49: #{fabis6_forward.2} parent=0 // pred_fallthru
    _

// kernel: fabis6_forward.3
$region0: #{fabis6_forward.3}
  #allocation0 [shape = 'u32[]', space=smem, size = 0x4, offset = 0x4, fixed_abs, tag = 'smem constant byte address 0x4 - core index']
  #allocation1 [shape = 'u32[144,128]{1,0:T(1,128)}', space=vmem, size = 0x12000, scoped, tag = 'internal scratch']
  #allocation2 [shape = 'f32[16,8,64]{2,1,0:T(8,128)}', space=vmem, size = 0x10000, scoped, tag = 'scratch operand']
  #allocation3 [shape = 'f32[16,8,64]{2,1,0:T(8,128)}', space=vmem, size = 0x10000, scoped, tag = 'scratch operand']
  #allocation4 [shape = 'f32[16,8,64]{2,1,0:T(8,128)}', space=vmem, size = 0x10000, scoped, tag = 'scratch operand']
  #allocation5 [shape = 'f32[16,8,64]{2,1,0:T(8,128)}', space=vmem, size = 0x10000, scoped, tag = 'scratch operand']
  #allocation6 [shape = 'f32[16,8,64]{2,1,0:T(8,128)}', space=vmem, size = 0x10000, scoped, tag = 'scratch operand']
  #allocation7 [shape = 'f32[16,8,64]{2,1,0:T(8,128)}', space=vmem, size = 0x10000, scoped, tag = 'scratch operand']
  %s0 = inlined_call_operand.vmem [shape: f32[16,8,64], index: 0, kind: input, shape index: {}]
  %s1 = inlined_call_operand.vmem [shape: f32[64,128], index: 1, kind: input, shape index: {}]
  %s2 = inlined_call_operand.vmem [shape: f32[1,128], index: 2, kind: input, shape index: {}]
  %s3 = inlined_call_operand.vmem [shape: f32[64,128], index: 3, kind: input, shape index: {}]
  %s4 = inlined_call_operand.vmem [shape: f32[128,128], index: 4, kind: input, shape index: {}]
  %s5 = inlined_call_operand.vmem [shape: f32[128,128], index: 5, kind: input, shape index: {}]
  %s6 = inlined_call_operand.vmem [shape: f32[1,128], index: 6, kind: input, shape index: {}]
  %s7 = inlined_call_operand.vmem [shape: f32[1,128], index: 7, kind: input, shape index: {}]
  %s8 = inlined_call_operand.vmem [shape: f32[1,128], index: 8, kind: input, shape index: {}]
  %s9 = inlined_call_operand.vmem [shape: f32[1,128], index: 9, kind: input, shape index: {}]
  %s10 = inlined_call_operand.vmem [shape: f32[1,128], index: 10, kind: input, shape index: {}]
  %s11 = inlined_call_operand.vmem [shape: f32[16,8,128], index: 11, kind: output, shape index: {}]
  %s12 = sld [smem:[#allocation0]]
  $region54: #{fabis6_forward.3} parent=0
    _
  %s14 = ssub.s32 1, %s12
  %s15 = scalar_select 0, %s14, %s12
  // Predicated region
  $region2: #{fabis6_forward.3} parent=0 // pred_check
    _
  $region3: #{fabis6_forward.3} parent=0 // pred_check_branch
    %17 = sbr.rel (0) target = $region5
  $region4: #{fabis6_forward.3} parent=0 // pred_region
    _
  $region5: #{fabis6_forward.3} parent=0 // pred_fallthru
    _
  // Predicated region
  $region6: #{fabis6_forward.3} parent=0 // pred_check
    _
  $region7: #{fabis6_forward.3} parent=0 // pred_check_branch
    %19 = sbr.rel (0) target = $region9
  $region8: #{fabis6_forward.3} parent=0 // pred_region
    _
  $region9: #{fabis6_forward.3} parent=0 // pred_fallthru
    _
  // Predicated region
  $region10: #{fabis6_forward.3} parent=0 // pred_check
    _
  $region11: #{fabis6_forward.3} parent=0 // pred_check_branch
    %21 = sbr.rel (0) target = $region13
  $region12: #{fabis6_forward.3} parent=0 // pred_region
    _
  $region13: #{fabis6_forward.3} parent=0 // pred_fallthru
    _
  // Predicated region
  $region14: #{fabis6_forward.3} parent=0 // pred_check
    _
  $region15: #{fabis6_forward.3} parent=0 // pred_check_branch
    %23 = sbr.rel (0) target = $region17
  $region16: #{fabis6_forward.3} parent=0 // pred_region
    _
  $region17: #{fabis6_forward.3} parent=0 // pred_fallthru
    _
  // Predicated region
  $region18: #{fabis6_forward.3} parent=0 // pred_check
    _
  $region19: #{fabis6_forward.3} parent=0 // pred_check_branch
    %25 = sbr.rel (0) target = $region21
  $region20: #{fabis6_forward.3} parent=0 // pred_region
    _
  $region21: #{fabis6_forward.3} parent=0 // pred_fallthru
    _
  // Predicated region
  $region22: #{fabis6_forward.3} parent=0 // pred_check
    _
  $region23: #{fabis6_forward.3} parent=0 // pred_check_branch
    %27 = sbr.rel (0) target = $region25
  $region24: #{fabis6_forward.3} parent=0 // pred_region
    _
  $region25: #{fabis6_forward.3} parent=0 // pred_fallthru
    _
  // Predicated region
  $region26: #{fabis6_forward.3} parent=0 // pred_check
    _
  $region27: #{fabis6_forward.3} parent=0 // pred_check_branch
    %29 = sbr.rel (0) target = $region29
  $region28: #{fabis6_forward.3} parent=0 // pred_region
    _
  $region29: #{fabis6_forward.3} parent=0 // pred_fallthru
    _
  // Predicated region
  $region30: #{fabis6_forward.3} parent=0 // pred_check
    _
  $region31: #{fabis6_forward.3} parent=0 // pred_check_branch
    %31 = sbr.rel (0) target = $region33
  $region32: #{fabis6_forward.3} parent=0 // pred_region
    _
  $region33: #{fabis6_forward.3} parent=0 // pred_fallthru
    _
  // Predicated region
  $region34: #{fabis6_forward.3} parent=0 // pred_check
    _
  $region35: #{fabis6_forward.3} parent=0 // pred_check_branch
    %33 = sbr.rel (0) target = $region37
  $region36: #{fabis6_forward.3} parent=0 // pred_region
    _
  $region37: #{fabis6_forward.3} parent=0 // pred_fallthru
    _
  // Predicated region
  $region38: #{fabis6_forward.3} parent=0 // pred_check
    _
  $region39: #{fabis6_forward.3} parent=0 // pred_check_branch
    %35 = sbr.rel (0) target = $region41
  $region40: #{fabis6_forward.3} parent=0 // pred_region
    _
  $region41: #{fabis6_forward.3} parent=0 // pred_fallthru
    _
  // Predicated region
  $region42: #{fabis6_forward.3} parent=0 // pred_check
    _
  $region43: #{fabis6_forward.3} parent=0 // pred_check_branch
    %37 = sbr.rel (0) target = $region45
  $region44: #{fabis6_forward.3} parent=0 // pred_region
    _
  $region45: #{fabis6_forward.3} parent=0 // pred_fallthru
    _
  %v38 = vld [vmem:[%s0] sm:$0xff]
  %v39 = vld [vmem:[%s0 + $0x8] sm:$0xff]
  %v40 = vld [vmem:[%s0 + $0x10] sm:$0xff]
  %v41 = vld [vmem:[%s0 + $0x18] sm:$0xff]
  %v42 = vld [vmem:[%s0 + $0x20] sm:$0xff]
  %v43 = vld [vmem:[%s0 + $0x28] sm:$0xff]
  %v44 = vld [vmem:[%s0 + $0x30] sm:$0xff]
  %v45 = vld [vmem:[%s0 + $0x38] sm:$0xff]
  %v46 = vld [vmem:[%s0 + $0x40] sm:$0xff]
  %v47 = vld [vmem:[%s0 + $0x48] sm:$0xff]
  %v48 = vld [vmem:[%s0 + $0x50] sm:$0xff]
  %v49 = vld [vmem:[%s0 + $0x58] sm:$0xff]
  %v50 = vld [vmem:[%s0 + $0x60] sm:$0xff]
  %v51 = vld [vmem:[%s0 + $0x68] sm:$0xff]
  %v52 = vld [vmem:[%s0 + $0x70] sm:$0xff]
  %v53 = vld [vmem:[%s0 + $0x78] sm:$0xff]
  %v54 = vld [vmem:[%s1] sm:$0xff]
  %v55 = vld [vmem:[%s1 + $0x8] sm:$0xff]
  %v56 = vld [vmem:[%s1 + $0x10] sm:$0xff]
  %v57 = vld [vmem:[%s1 + $0x18] sm:$0xff]
  %v58 = vld [vmem:[%s1 + $0x20] sm:$0xff]
  %v59 = vld [vmem:[%s1 + $0x28] sm:$0xff]
  %v60 = vld [vmem:[%s1 + $0x30] sm:$0xff]
  %v61 = vld [vmem:[%s1 + $0x38] sm:$0xff]
  %v62 = vld [vmem:[%s2] sm:$0x1]
  %v64 = vlaneseq
  %v65 = vshrl.u32 %v64, 7
  %v66 = vsub.s32 0, %v65
  %v67 = vrot.slane %v62, %v66
  %vm69 = vcmask 523264
  %v71 = vsel %vm69, %v38, 0
  %v74 = vsel %vm69, %v39, 0
  %v77 = vsel %vm69, %v40, 0
  %v80 = vsel %vm69, %v41, 0
  %v83 = vsel %vm69, %v42, 0
  %v86 = vsel %vm69, %v43, 0
  %v89 = vsel %vm69, %v44, 0
  %v92 = vsel %vm69, %v45, 0
  %v95 = vsel %vm69, %v46, 0
  %v98 = vsel %vm69, %v47, 0
  %v101 = vsel %vm69, %v48, 0
  %v104 = vsel %vm69, %v49, 0
  %v107 = vsel %vm69, %v50, 0
  %v110 = vsel %vm69, %v51, 0
  %v113 = vsel %vm69, %v52, 0
  %v116 = vsel %vm69, %v53, 0
  %118 = vmatprep.subr.mxu0 0.0
  %119 = vmatpush1.msra.mxu0 0.0
  %120 = vmatprep.subr.mxu0 0.0
  %121 = vmatpush1.msra.mxu0 0.0
  %122 = vmatprep.subr.mxu0 0.0
  %123 = vmatpush1.msra.mxu0 0.0
  %124 = vmatprep.subr.mxu0 0.0
  %125 = vmatpush1.msra.mxu0 0.0
  %126 = vmatprep.subr.mxu0 0.0
  %127 = vmatpush1.msra.mxu0 0.0
  %128 = vmatprep.subr.mxu0 0.0
  %129 = vmatpush1.msra.mxu0 0.0
  %130 = vmatprep.subr.mxu0 0.0
  %131 = vmatpush1.msra.mxu0 0.0
  %132 = vmatprep.subr.mxu0 0.0
  %133 = vmatpush1.msra.mxu0 0.0
  %134 = vmatprep.subr.mxu0 0.0
  %135 = vmatpush1.msra.mxu0 %v61
  %136 = vmatprep.subr.mxu0 0.0
  %137 = vmatpush1.msra.mxu0 %v60
  %138 = vmatprep.subr.mxu0 0.0
  %139 = vmatpush1.msra.mxu0 %v59
  %140 = vmatprep.subr.mxu0 0.0
  %141 = vmatpush1.msra.mxu0 %v58
  %142 = vmatprep.subr.mxu0 0.0
  %143 = vmatpush1.msra.mxu0 %v57
  %144 = vmatprep.subr.mxu0 0.0
  %145 = vmatpush1.msra.mxu0 %v56
  %146 = vmatprep.subr.mxu0 0.0
  %147 = vmatpush1.msra.mxu0 %v55
  %148 = vmatprep.subr.mxu0 0.0
  %149 = vmatpush1.msra.mxu0 %v54
  %150 = vmatprep.subr.mxu0 0.0
  %151 = vmatpush2.msra.mxu0 0.0
  %152 = vmatprep.subr.mxu0 0.0
  %153 = vmatpush2.msra.mxu0 0.0
  %154 = vmatprep.subr.mxu0 0.0
  %155 = vmatpush2.msra.mxu0 0.0
  %156 = vmatprep.subr.mxu0 0.0
  %157 = vmatpush2.msra.mxu0 0.0
  %158 = vmatprep.subr.mxu0 0.0
  %159 = vmatpush2.msra.mxu0 0.0
  %160 = vmatprep.subr.mxu0 0.0
  %161 = vmatpush2.msra.mxu0 0.0
  %162 = vmatprep.subr.mxu0 0.0
  %163 = vmatpush2.msra.mxu0 0.0
  %164 = vmatprep.subr.mxu0 0.0
  %165 = vmatpush2.msra.mxu0 0.0
  %166 = vmatprep.subr.mxu0 0.0
  %167 = vmatpush2.msra.mxu0 0.0
  %168 = vmatprep.subr.mxu0 0.0
  %169 = vmatpush2.msra.mxu0 0.0
  %170 = vmatprep.subr.mxu0 0.0
  %171 = vmatpush2.msra.mxu0 0.0
  %172 = vmatprep.subr.mxu0 0.0
  %173 = vmatpush2.msra.mxu0 0.0
  %174 = vmatprep.subr.mxu0 0.0
  %175 = vmatpush2.msra.mxu0 0.0
  %176 = vmatprep.subr.mxu0 0.0
  %177 = vmatpush2.msra.mxu0 0.0
  %178 = vmatprep.subr.mxu0 0.0
  %179 = vmatpush2.msra.mxu0 0.0
  %180 = vmatprep.subr.mxu0 0.0
  %181 = vmatpush2.msra.mxu0 0.0
  %182 = vmatprep.mubr.f32.mxu0 0.0
  %183 = vmatmul.mubr.f32.gmra.mxu0 %v71
  %v184 = vpop.f32.mrf.mxu0
  %v185 = vadd.f32 %v67, %v184
  %v186 = vpop.f32.mrf.mxu0
  %187 = vmatprep.mubr.f32.mxu0 0.0
  %188 = vmatmul.mubr.f32.gmra.mxu0 %v74
  %v189 = vpop.f32.mrf.mxu0
  %v190 = vadd.f32 %v67, %v189
  %v191 = vpop.f32.mrf.mxu0
  %192 = vmatprep.mubr.f32.mxu0 0.0
  %193 = vmatmul.mubr.f32.gmra.mxu0 %v77
  %v194 = vpop.f32.mrf.mxu0
  %v195 = vadd.f32 %v67, %v194
  %v196 = vpop.f32.mrf.mxu0
  %197 = vmatprep.mubr.f32.mxu0 0.0
  %198 = vmatmul.mubr.f32.gmra.mxu0 %v80
  %v199 = vpop.f32.mrf.mxu0
  %v200 = vadd.f32 %v67, %v199
  %v201 = vpop.f32.mrf.mxu0
  %202 = vmatprep.mubr.f32.mxu0 0.0
  %203 = vmatmul.mubr.f32.gmra.mxu0 %v83
  %v204 = vpop.f32.mrf.mxu0
  %v205 = vadd.f32 %v67, %v204
  %v206 = vpop.f32.mrf.mxu0
  %207 = vmatprep.mubr.f32.mxu0 0.0
  %208 = vmatmul.mubr.f32.gmra.mxu0 %v86
  %v209 = vpop.f32.mrf.mxu0
  %v210 = vadd.f32 %v67, %v209
  %v211 = vpop.f32.mrf.mxu0
  %212 = vmatprep.mubr.f32.mxu0 0.0
  %213 = vmatmul.mubr.f32.gmra.mxu0 %v89
  %v214 = vpop.f32.mrf.mxu0
  %v215 = vadd.f32 %v67, %v214
  %v216 = vpop.f32.mrf.mxu0
  %217 = vmatprep.mubr.f32.mxu0 0.0
  %218 = vmatmul.mubr.f32.gmra.mxu0 %v92
  %v219 = vpop.f32.mrf.mxu0
  %v220 = vadd.f32 %v67, %v219
  %v221 = vpop.f32.mrf.mxu0
  %222 = vmatprep.mubr.f32.mxu0 0.0
  %223 = vmatmul.mubr.f32.gmra.mxu0 %v95
  %v224 = vpop.f32.mrf.mxu0
  %v225 = vadd.f32 %v67, %v224
  %v226 = vpop.f32.mrf.mxu0
  %227 = vmatprep.mubr.f32.mxu0 0.0
  %228 = vmatmul.mubr.f32.gmra.mxu0 %v98
  %v229 = vpop.f32.mrf.mxu0
  %v230 = vadd.f32 %v67, %v229
  %v231 = vpop.f32.mrf.mxu0
  %232 = vmatprep.mubr.f32.mxu0 0.0
  %233 = vmatmul.mubr.f32.gmra.mxu0 %v101
  %v234 = vpop.f32.mrf.mxu0
  %v235 = vadd.f32 %v67, %v234
  %v236 = vpop.f32.mrf.mxu0
  %237 = vmatprep.mubr.f32.mxu0 0.0
  %238 = vmatmul.mubr.f32.gmra.mxu0 %v104
  %v239 = vpop.f32.mrf.mxu0
  %v240 = vadd.f32 %v67, %v239
  %v241 = vpop.f32.mrf.mxu0
  %242 = vmatprep.mubr.f32.mxu0 0.0
  %243 = vmatmul.mubr.f32.gmra.mxu0 %v107
  %v244 = vpop.f32.mrf.mxu0
  %v245 = vadd.f32 %v67, %v244
  %v246 = vpop.f32.mrf.mxu0
  %247 = vmatprep.mubr.f32.mxu0 0.0
  %248 = vmatmul.mubr.f32.gmra.mxu0 %v110
  %v249 = vpop.f32.mrf.mxu0
  %v250 = vadd.f32 %v67, %v249
  %v251 = vpop.f32.mrf.mxu0
  %252 = vmatprep.mubr.f32.mxu0 0.0
  %253 = vmatmul.mubr.f32.gmra.mxu0 %v113
  %v254 = vpop.f32.mrf.mxu0
  %v255 = vadd.f32 %v67, %v254
  %v256 = vpop.f32.mrf.mxu0
  %257 = vmatprep.mubr.f32.mxu0 0.0
  %258 = vmatmul.mubr.f32.gmra.mxu0 %v116
  %v259 = vpop.f32.mrf.mxu0
  %v260 = vadd.f32 %v67, %v259
  %v261 = vpop.f32.mrf.mxu0
  %262 = vdwg.mxu0
  %v263 = vsub.f32 0.0, %v185
  %v264 = vsub.f32 0.0, %v190
  %v265 = vsub.f32 0.0, %v195
  %v266 = vsub.f32 0.0, %v200
  %v267 = vsub.f32 0.0, %v205
  %v268 = vsub.f32 0.0, %v210
  %v269 = vsub.f32 0.0, %v215
  %v270 = vsub.f32 0.0, %v220
  %v271 = vsub.f32 0.0, %v225
  %v272 = vsub.f32 0.0, %v230
  %v273 = vsub.f32 0.0, %v235
  %v274 = vsub.f32 0.0, %v240
  %v275 = vsub.f32 0.0, %v245
  %v276 = vsub.f32 0.0, %v250
  %v277 = vsub.f32 0.0, %v255
  %v278 = vsub.f32 0.0, %v260
  %v279 = vmul.f32 %v263, 1.442695
  %v280 = vpow.pop %v279
  %v281 = vmul.f32 %v264, 1.442695
  %v282 = vpow.pop %v281
  %v283 = vmul.f32 %v265, 1.442695
  %v284 = vpow.pop %v283
  %v285 = vmul.f32 %v266, 1.442695
  %v286 = vpow.pop %v285
  %v287 = vmul.f32 %v267, 1.442695
  %v288 = vpow.pop %v287
  %v289 = vmul.f32 %v268, 1.442695
  %v290 = vpow.pop %v289
  %v291 = vmul.f32 %v269, 1.442695
  %v292 = vpow.pop %v291
  %v293 = vmul.f32 %v270, 1.442695
  %v294 = vpow.pop %v293
  %v295 = vmul.f32 %v271, 1.442695
  %v296 = vpow.pop %v295
  %v297 = vmul.f32 %v272, 1.442695
  %v298 = vpow.pop %v297
  %v299 = vmul.f32 %v273, 1.442695
  %v300 = vpow.pop %v299
  %v301 = vmul.f32 %v274, 1.442695
  %v302 = vpow.pop %v301
  %v303 = vmul.f32 %v275, 1.442695
  %v304 = vpow.pop %v303
  %v305 = vmul.f32 %v276, 1.442695
  %v306 = vpow.pop %v305
  %v307 = vmul.f32 %v277, 1.442695
  %v308 = vpow.pop %v307
  %v309 = vmul.f32 %v278, 1.442695
  %v310 = vpow.pop %v309
  %v311 = vadd.f32 %v280, 1.0
  %v312 = vadd.f32 %v282, 1.0
  %v313 = vadd.f32 %v284, 1.0
  %v314 = vadd.f32 %v286, 1.0
  %v315 = vadd.f32 %v288, 1.0
  %v316 = vadd.f32 %v290, 1.0
  %v317 = vadd.f32 %v292, 1.0
  %v318 = vadd.f32 %v294, 1.0
  %v319 = vadd.f32 %v296, 1.0
  %v320 = vadd.f32 %v298, 1.0
  %v321 = vadd.f32 %v300, 1.0
  %v322 = vadd.f32 %v302, 1.0
  %v323 = vadd.f32 %v304, 1.0
  %v324 = vadd.f32 %v306, 1.0
  %v325 = vadd.f32 %v308, 1.0
  %v326 = vadd.f32 %v310, 1.0
  %v327 = vrcp.pop %v311
  %v328 = vrcp.pop %v312
  %v329 = vrcp.pop %v313
  %v330 = vrcp.pop %v314
  %v331 = vrcp.pop %v315
  %v332 = vrcp.pop %v316
  %v333 = vrcp.pop %v317
  %v334 = vrcp.pop %v318
  %v335 = vrcp.pop %v319
  %v336 = vrcp.pop %v320
  %v337 = vrcp.pop %v321
  %v338 = vrcp.pop %v322
  %v339 = vrcp.pop %v323
  %v340 = vrcp.pop %v324
  %v341 = vrcp.pop %v325
  %v342 = vrcp.pop %v326
  %v343 = vld [vmem:[%s3] sm:$0xff]
  %v344 = vld [vmem:[%s3 + $0x8] sm:$0xff]
  %v345 = vld [vmem:[%s3 + $0x10] sm:$0xff]
  %v346 = vld [vmem:[%s3 + $0x18] sm:$0xff]
  %v347 = vld [vmem:[%s3 + $0x20] sm:$0xff]
  %v348 = vld [vmem:[%s3 + $0x28] sm:$0xff]
  %v349 = vld [vmem:[%s3 + $0x30] sm:$0xff]
  %v350 = vld [vmem:[%s3 + $0x38] sm:$0xff]
  %351 = vmatprep.subr.mxu0 0.0
  %352 = vmatpush1.msra.mxu0 0.0
  %353 = vmatprep.subr.mxu0 0.0
  %354 = vmatpush1.msra.mxu0 0.0
  %355 = vmatprep.subr.mxu0 0.0
  %356 = vmatpush1.msra.mxu0 0.0
  %357 = vmatprep.subr.mxu0 0.0
  %358 = vmatpush1.msra.mxu0 0.0
  %359 = vmatprep.subr.mxu0 0.0
  %360 = vmatpush1.msra.mxu0 0.0
  %361 = vmatprep.subr.mxu0 0.0
  %362 = vmatpush1.msra.mxu0 0.0
  %363 = vmatprep.subr.mxu0 0.0
  %364 = vmatpush1.msra.mxu0 0.0
  %365 = vmatprep.subr.mxu0 0.0
  %366 = vmatpush1.msra.mxu0 0.0
  %367 = vmatprep.subr.mxu0 0.0
  %368 = vmatpush1.msra.mxu0 %v350
  %369 = vmatprep.subr.mxu0 0.0
  %370 = vmatpush1.msra.mxu0 %v349
  %371 = vmatprep.subr.mxu0 0.0
  %372 = vmatpush1.msra.mxu0 %v348
  %373 = vmatprep.subr.mxu0 0.0
  %374 = vmatpush1.msra.mxu0 %v347
  %375 = vmatprep.subr.mxu0 0.0
  %376 = vmatpush1.msra.mxu0 %v346
  %377 = vmatprep.subr.mxu0 0.0
  %378 = vmatpush1.msra.mxu0 %v345
  %379 = vmatprep.subr.mxu0 0.0
  %380 = vmatpush1.msra.mxu0 %v344
  %381 = vmatprep.subr.mxu0 0.0
  %382 = vmatpush1.msra.mxu0 %v343
  %383 = vmatprep.subr.mxu0 0.0
  %384 = vmatpush2.msra.mxu0 0.0
  %385 = vmatprep.subr.mxu0 0.0
  %386 = vmatpush2.msra.mxu0 0.0
  %387 = vmatprep.subr.mxu0 0.0
  %388 = vmatpush2.msra.mxu0 0.0
  %389 = vmatprep.subr.mxu0 0.0
  %390 = vmatpush2.msra.mxu0 0.0
  %391 = vmatprep.subr.mxu0 0.0
  %392 = vmatpush2.msra.mxu0 0.0
  %393 = vmatprep.subr.mxu0 0.0
  %394 = vmatpush2.msra.mxu0 0.0
  %395 = vmatprep.subr.mxu0 0.0
  %396 = vmatpush2.msra.mxu0 0.0
  %397 = vmatprep.subr.mxu0 0.0
  %398 = vmatpush2.msra.mxu0 0.0
  %399 = vmatprep.subr.mxu0 0.0
  %400 = vmatpush2.msra.mxu0 0.0
  %401 = vmatprep.subr.mxu0 0.0
  %402 = vmatpush2.msra.mxu0 0.0
  %403 = vmatprep.subr.mxu0 0.0
  %404 = vmatpush2.msra.mxu0 0.0
  %405 = vmatprep.subr.mxu0 0.0
  %406 = vmatpush2.msra.mxu0 0.0
  %407 = vmatprep.subr.mxu0 0.0
  %408 = vmatpush2.msra.mxu0 0.0
  %409 = vmatprep.subr.mxu0 0.0
  %410 = vmatpush2.msra.mxu0 0.0
  %411 = vmatprep.subr.mxu0 0.0
  %412 = vmatpush2.msra.mxu0 0.0
  %413 = vmatprep.subr.mxu0 0.0
  %414 = vmatpush2.msra.mxu0 0.0
  %415 = vmatprep.mubr.f32.mxu0 0.0
  %416 = vmatmul.mubr.f32.gmra.mxu0 %v71
  %v417 = vpop.f32.mrf.mxu0
  %v418 = vadd.f32 0.0, %v417
  %v419 = vpop.f32.mrf.mxu0
  %420 = vmatprep.mubr.f32.mxu0 0.0
  %421 = vmatmul.mubr.f32.gmra.mxu0 %v74
  %v422 = vpop.f32.mrf.mxu0
  %v423 = vadd.f32 0.0, %v422
  %v424 = vpop.f32.mrf.mxu0
  %425 = vmatprep.mubr.f32.mxu0 0.0
  %426 = vmatmul.mubr.f32.gmra.mxu0 %v77
  %v427 = vpop.f32.mrf.mxu0
  %v428 = vadd.f32 0.0, %v427
  %v429 = vpop.f32.mrf.mxu0
  %430 = vmatprep.mubr.f32.mxu0 0.0
  %431 = vmatmul.mubr.f32.gmra.mxu0 %v80
  %v432 = vpop.f32.mrf.mxu0
  %v433 = vadd.f32 0.0, %v432
  %v434 = vpop.f32.mrf.mxu0
  %435 = vmatprep.mubr.f32.mxu0 0.0
  %436 = vmatmul.mubr.f32.gmra.mxu0 %v83
  %v437 = vpop.f32.mrf.mxu0
  %v438 = vadd.f32 0.0, %v437
  %v439 = vpop.f32.mrf.mxu0
  %440 = vmatprep.mubr.f32.mxu0 0.0
  %441 = vmatmul.mubr.f32.gmra.mxu0 %v86
  %v442 = vpop.f32.mrf.mxu0
  %v443 = vadd.f32 0.0, %v442
  %v444 = vpop.f32.mrf.mxu0
  %445 = vmatprep.mubr.f32.mxu0 0.0
  %446 = vmatmul.mubr.f32.gmra.mxu0 %v89
  %v447 = vpop.f32.mrf.mxu0
  %v448 = vadd.f32 0.0, %v447
  %v449 = vpop.f32.mrf.mxu0
  %450 = vmatprep.mubr.f32.mxu0 0.0
  %451 = vmatmul.mubr.f32.gmra.mxu0 %v92
  %v452 = vpop.f32.mrf.mxu0
  %v453 = vadd.f32 0.0, %v452
  %v454 = vpop.f32.mrf.mxu0
  %455 = vmatprep.mubr.f32.mxu0 0.0
  %456 = vmatmul.mubr.f32.gmra.mxu0 %v95
  %v457 = vpop.f32.mrf.mxu0
  %v458 = vadd.f32 0.0, %v457
  %v459 = vpop.f32.mrf.mxu0
  %460 = vmatprep.mubr.f32.mxu0 0.0
  %461 = vmatmul.mubr.f32.gmra.mxu0 %v98
  %v462 = vpop.f32.mrf.mxu0
  %v463 = vadd.f32 0.0, %v462
  %v464 = vpop.f32.mrf.mxu0
  %465 = vmatprep.mubr.f32.mxu0 0.0
  %466 = vmatmul.mubr.f32.gmra.mxu0 %v101
  %v467 = vpop.f32.mrf.mxu0
  %v468 = vadd.f32 0.0, %v467
  %v469 = vpop.f32.mrf.mxu0
  %470 = vmatprep.mubr.f32.mxu0 0.0
  %471 = vmatmul.mubr.f32.gmra.mxu0 %v104
  %v472 = vpop.f32.mrf.mxu0
  %v473 = vadd.f32 0.0, %v472
  %v474 = vpop.f32.mrf.mxu0
  %475 = vmatprep.mubr.f32.mxu0 0.0
  %476 = vmatmul.mubr.f32.gmra.mxu0 %v107
  %v477 = vpop.f32.mrf.mxu0
  %v478 = vadd.f32 0.0, %v477
  %v479 = vpop.f32.mrf.mxu0
  %480 = vmatprep.mubr.f32.mxu0 0.0
  %481 = vmatmul.mubr.f32.gmra.mxu0 %v110
  %v482 = vpop.f32.mrf.mxu0
  %v483 = vadd.f32 0.0, %v482
  %v484 = vpop.f32.mrf.mxu0
  %485 = vmatprep.mubr.f32.mxu0 0.0
  %486 = vmatmul.mubr.f32.gmra.mxu0 %v113
  %v487 = vpop.f32.mrf.mxu0
  %v488 = vadd.f32 0.0, %v487
  %v489 = vpop.f32.mrf.mxu0
  %490 = vmatprep.mubr.f32.mxu0 0.0
  %491 = vmatmul.mubr.f32.gmra.mxu0 %v116
  %v492 = vpop.f32.mrf.mxu0
  %v493 = vadd.f32 0.0, %v492
  %v494 = vpop.f32.mrf.mxu0
  %495 = vdwg.mxu0
  %496 = vst.msk [vmem:[#allocation2] sm:$0xff] %vm69, %v327
  %497 = vst.msk [vmem:[#allocation2 + $0x8] sm:$0xff] %vm69, %v328
  %498 = vst.msk [vmem:[#allocation2 + $0x10] sm:$0xff] %vm69, %v329
  %499 = vst.msk [vmem:[#allocation2 + $0x18] sm:$0xff] %vm69, %v330
  %500 = vst.msk [vmem:[#allocation2 + $0x20] sm:$0xff] %vm69, %v331
  %501 = vst.msk [vmem:[#allocation2 + $0x28] sm:$0xff] %vm69, %v332
  %502 = vst.msk [vmem:[#allocation2 + $0x30] sm:$0xff] %vm69, %v333
  %503 = vst.msk [vmem:[#allocation2 + $0x38] sm:$0xff] %vm69, %v334
  %504 = vst.msk [vmem:[#allocation2 + $0x40] sm:$0xff] %vm69, %v335
  %505 = vst.msk [vmem:[#allocation2 + $0x48] sm:$0xff] %vm69, %v336
  %506 = vst.msk [vmem:[#allocation2 + $0x50] sm:$0xff] %vm69, %v337
  %507 = vst.msk [vmem:[#allocation2 + $0x58] sm:$0xff] %vm69, %v338
  %508 = vst.msk [vmem:[#allocation2 + $0x60] sm:$0xff] %vm69, %v339
  %509 = vst.msk [vmem:[#allocation2 + $0x68] sm:$0xff] %vm69, %v340
  %510 = vst.msk [vmem:[#allocation2 + $0x70] sm:$0xff] %vm69, %v341
  %511 = vst.msk [vmem:[#allocation2 + $0x78] sm:$0xff] %vm69, %v342
  %528 = vrot.lane.b32.xlu0 %v327, 64
  %v529 = vpop.permute.xlu0 %528
  %530 = vrot.lane.b32.xlu0 %v328, 64
  %v531 = vpop.permute.xlu0 %530
  %532 = vrot.lane.b32.xlu0 %v329, 64
  %v533 = vpop.permute.xlu0 %532
  %534 = vrot.lane.b32.xlu0 %v330, 64
  %v535 = vpop.permute.xlu0 %534
  %536 = vrot.lane.b32.xlu0 %v331, 64
  %v537 = vpop.permute.xlu0 %536
  %538 = vrot.lane.b32.xlu0 %v332, 64
  %v539 = vpop.permute.xlu0 %538
  %540 = vrot.lane.b32.xlu0 %v333, 64
  %v541 = vpop.permute.xlu0 %540
  %542 = vrot.lane.b32.xlu0 %v334, 64
  %v543 = vpop.permute.xlu0 %542
  %544 = vrot.lane.b32.xlu0 %v335, 64
  %v545 = vpop.permute.xlu0 %544
  %546 = vrot.lane.b32.xlu0 %v336, 64
  %v547 = vpop.permute.xlu0 %546
  %548 = vrot.lane.b32.xlu0 %v337, 64
  %v549 = vpop.permute.xlu0 %548
  %550 = vrot.lane.b32.xlu0 %v338, 64
  %v551 = vpop.permute.xlu0 %550
  %552 = vrot.lane.b32.xlu0 %v339, 64
  %v553 = vpop.permute.xlu0 %552
  %554 = vrot.lane.b32.xlu0 %v340, 64
  %v555 = vpop.permute.xlu0 %554
  %556 = vrot.lane.b32.xlu0 %v341, 64
  %v557 = vpop.permute.xlu0 %556
  %558 = vrot.lane.b32.xlu0 %v342, 64
  %v559 = vpop.permute.xlu0 %558
  %576 = vst.msk [vmem:[#allocation3] sm:$0xff] %vm69, %v529
  %577 = vst.msk [vmem:[#allocation3 + $0x8] sm:$0xff] %vm69, %v531
  %578 = vst.msk [vmem:[#allocation3 + $0x10] sm:$0xff] %vm69, %v533
  %579 = vst.msk [vmem:[#allocation3 + $0x18] sm:$0xff] %vm69, %v535
  %580 = vst.msk [vmem:[#allocation3 + $0x20] sm:$0xff] %vm69, %v537
  %581 = vst.msk [vmem:[#allocation3 + $0x28] sm:$0xff] %vm69, %v539
  %582 = vst.msk [vmem:[#allocation3 + $0x30] sm:$0xff] %vm69, %v541
  %583 = vst.msk [vmem:[#allocation3 + $0x38] sm:$0xff] %vm69, %v543
  %584 = vst.msk [vmem:[#allocation3 + $0x40] sm:$0xff] %vm69, %v545
  %585 = vst.msk [vmem:[#allocation3 + $0x48] sm:$0xff] %vm69, %v547
  %586 = vst.msk [vmem:[#allocation3 + $0x50] sm:$0xff] %vm69, %v549
  %587 = vst.msk [vmem:[#allocation3 + $0x58] sm:$0xff] %vm69, %v551
  %588 = vst.msk [vmem:[#allocation3 + $0x60] sm:$0xff] %vm69, %v553
  %589 = vst.msk [vmem:[#allocation3 + $0x68] sm:$0xff] %vm69, %v555
  %590 = vst.msk [vmem:[#allocation3 + $0x70] sm:$0xff] %vm69, %v557
  %591 = vst.msk [vmem:[#allocation3 + $0x78] sm:$0xff] %vm69, %v559
  %592 = vst.msk [vmem:[#allocation4] sm:$0xff] %vm69, %v418
  %593 = vst.msk [vmem:[#allocation4 + $0x8] sm:$0xff] %vm69, %v423
  %594 = vst.msk [vmem:[#allocation4 + $0x10] sm:$0xff] %vm69, %v428
  %595 = vst.msk [vmem:[#allocation4 + $0x18] sm:$0xff] %vm69, %v433
  %596 = vst.msk [vmem:[#allocation4 + $0x20] sm:$0xff] %vm69, %v438
  %597 = vst.msk [vmem:[#allocation4 + $0x28] sm:$0xff] %vm69, %v443
  %598 = vst.msk [vmem:[#allocation4 + $0x30] sm:$0xff] %vm69, %v448
  %599 = vst.msk [vmem:[#allocation4 + $0x38] sm:$0xff] %vm69, %v453
  %600 = vst.msk [vmem:[#allocation4 + $0x40] sm:$0xff] %vm69, %v458
  %601 = vst.msk [vmem:[#allocation4 + $0x48] sm:$0xff] %vm69, %v463
  %602 = vst.msk [vmem:[#allocation4 + $0x50] sm:$0xff] %vm69, %v468
  %603 = vst.msk [vmem:[#allocation4 + $0x58] sm:$0xff] %vm69, %v473
  %604 = vst.msk [vmem:[#allocation4 + $0x60] sm:$0xff] %vm69, %v478
  %605 = vst.msk [vmem:[#allocation4 + $0x68] sm:$0xff] %vm69, %v483
  %606 = vst.msk [vmem:[#allocation4 + $0x70] sm:$0xff] %vm69, %v488
  %607 = vst.msk [vmem:[#allocation4 + $0x78] sm:$0xff] %vm69, %v493
  %624 = vrot.lane.b32.xlu0 %v418, 64
  %v625 = vpop.permute.xlu0 %624
  %626 = vrot.lane.b32.xlu0 %v423, 64
  %v627 = vpop.permute.xlu0 %626
  %628 = vrot.lane.b32.xlu0 %v428, 64
  %v629 = vpop.permute.xlu0 %628
  %630 = vrot.lane.b32.xlu0 %v433, 64
  %v631 = vpop.permute.xlu0 %630
  %632 = vrot.lane.b32.xlu0 %v438, 64
  %v633 = vpop.permute.xlu0 %632
  %634 = vrot.lane.b32.xlu0 %v443, 64
  %v635 = vpop.permute.xlu0 %634
  %636 = vrot.lane.b32.xlu0 %v448, 64
  %v637 = vpop.permute.xlu0 %636
  %638 = vrot.lane.b32.xlu0 %v453, 64
  %v639 = vpop.permute.xlu0 %638
  %640 = vrot.lane.b32.xlu0 %v458, 64
  %v641 = vpop.permute.xlu0 %640
  %642 = vrot.lane.b32.xlu0 %v463, 64
  %v643 = vpop.permute.xlu0 %642
  %644 = vrot.lane.b32.xlu0 %v468, 64
  %v645 = vpop.permute.xlu0 %644
  %646 = vrot.lane.b32.xlu0 %v473, 64
  %v647 = vpop.permute.xlu0 %646
  %648 = vrot.lane.b32.xlu0 %v478, 64
  %v649 = vpop.permute.xlu0 %648
  %650 = vrot.lane.b32.xlu0 %v483, 64
  %v651 = vpop.permute.xlu0 %650
  %652 = vrot.lane.b32.xlu0 %v488, 64
  %v653 = vpop.permute.xlu0 %652
  %654 = vrot.lane.b32.xlu0 %v493, 64
  %v655 = vpop.permute.xlu0 %654
  %672 = vst.msk [vmem:[#allocation5] sm:$0xff] %vm69, %v625
  %673 = vst.msk [vmem:[#allocation5 + $0x8] sm:$0xff] %vm69, %v627
  %674 = vst.msk [vmem:[#allocation5 + $0x10] sm:$0xff] %vm69, %v629
  %675 = vst.msk [vmem:[#allocation5 + $0x18] sm:$0xff] %vm69, %v631
  %676 = vst.msk [vmem:[#allocation5 + $0x20] sm:$0xff] %vm69, %v633
  %677 = vst.msk [vmem:[#allocation5 + $0x28] sm:$0xff] %vm69, %v635
  %678 = vst.msk [vmem:[#allocation5 + $0x30] sm:$0xff] %vm69, %v637
  %679 = vst.msk [vmem:[#allocation5 + $0x38] sm:$0xff] %vm69, %v639
  %680 = vst.msk [vmem:[#allocation5 + $0x40] sm:$0xff] %vm69, %v641
  %681 = vst.msk [vmem:[#allocation5 + $0x48] sm:$0xff] %vm69, %v643
  %682 = vst.msk [vmem:[#allocation5 + $0x50] sm:$0xff] %vm69, %v645
  %683 = vst.msk [vmem:[#allocation5 + $0x58] sm:$0xff] %vm69, %v647
  %684 = vst.msk [vmem:[#allocation5 + $0x60] sm:$0xff] %vm69, %v649
  %685 = vst.msk [vmem:[#allocation5 + $0x68] sm:$0xff] %vm69, %v651
  %686 = vst.msk [vmem:[#allocation5 + $0x70] sm:$0xff] %vm69, %v653
  %687 = vst.msk [vmem:[#allocation5 + $0x78] sm:$0xff] %vm69, %v655
  %v688 = vld [vmem:[%s4] sm:$0xff]
  %v689 = vld [vmem:[%s4 + $0x8] sm:$0xff]
  %v690 = vld [vmem:[%s4 + $0x10] sm:$0xff]
  %v691 = vld [vmem:[%s4 + $0x18] sm:$0xff]
  %v692 = vld [vmem:[%s4 + $0x20] sm:$0xff]
  %v693 = vld [vmem:[%s4 + $0x28] sm:$0xff]
  %v694 = vld [vmem:[%s4 + $0x30] sm:$0xff]
  %v695 = vld [vmem:[%s4 + $0x38] sm:$0xff]
  %v696 = vld [vmem:[%s4 + $0x40] sm:$0xff]
  %v697 = vld [vmem:[%s4 + $0x48] sm:$0xff]
  %v698 = vld [vmem:[%s4 + $0x50] sm:$0xff]
  %v699 = vld [vmem:[%s4 + $0x58] sm:$0xff]
  %v700 = vld [vmem:[%s4 + $0x60] sm:$0xff]
  %v701 = vld [vmem:[%s4 + $0x68] sm:$0xff]
  %v702 = vld [vmem:[%s4 + $0x70] sm:$0xff]
  %v703 = vld [vmem:[%s4 + $0x78] sm:$0xff]
  %v704 = vld [vmem:[#allocation4] sm:$0xff]
  %s705 = scalar_lea.vmem [#allocation5], 120
  %v706 = vld [vmem:[%s705] sm:$0xff]
  %708 = vrot.lane.b32.xlu0 %v706, 64
  %v709 = vpop.permute.xlu0 %708
  %v711 = vsel %vm69, %v704, %v709
  %v712 = vld [vmem:[#allocation2] sm:$0xff]
  %s713 = scalar_lea.vmem [#allocation3], 120
  %v714 = vld [vmem:[%s713] sm:$0xff]
  %716 = vrot.lane.b32.xlu0 %v714, 64
  %v717 = vpop.permute.xlu0 %716
  %v719 = vsel %vm69, %v712, %v717
  %720 = vmatprep.subr.mxu0 0.0
  %721 = vmatpush1.msra.mxu0 %v703
  %722 = vmatprep.subr.mxu0 0.0
  %723 = vmatpush1.msra.mxu0 %v702
  %724 = vmatprep.subr.mxu0 0.0
  %725 = vmatpush1.msra.mxu0 %v701
  %726 = vmatprep.subr.mxu0 0.0
  %727 = vmatpush1.msra.mxu0 %v700
  %728 = vmatprep.subr.mxu0 0.0
  %729 = vmatpush1.msra.mxu0 %v699
  %730 = vmatprep.subr.mxu0 0.0
  %731 = vmatpush1.msra.mxu0 %v698
  %732 = vmatprep.subr.mxu0 0.0
  %733 = vmatpush1.msra.mxu0 %v697
  %734 = vmatprep.subr.mxu0 0.0
  %735 = vmatpush1.msra.mxu0 %v696
  %736 = vmatprep.subr.mxu0 0.0
  %737 = vmatpush1.msra.mxu0 %v695
  %738 = vmatprep.subr.mxu0 0.0
  %739 = vmatpush1.msra.mxu0 %v694
  %740 = vmatprep.subr.mxu0 0.0
  %741 = vmatpush1.msra.mxu0 %v693
  %742 = vmatprep.subr.mxu0 0.0
  %743 = vmatpush1.msra.mxu0 %v692
  %744 = vmatprep.subr.mxu0 0.0
  %745 = vmatpush1.msra.mxu0 %v691
  %746 = vmatprep.subr.mxu0 0.0
  %747 = vmatpush1.msra.mxu0 %v690
  %748 = vmatprep.subr.mxu0 0.0
  %749 = vmatpush1.msra.mxu0 %v689
  %750 = vmatprep.subr.mxu0 0.0
  %751 = vmatpush1.msra.mxu0 %v688
  %752 = vmatprep.subr.mxu0 0.0
  %753 = vmatpush2.msra.mxu0 0.0
  %754 = vmatprep.subr.mxu0 0.0
  %755 = vmatpush2.msra.mxu0 0.0
  %756 = vmatprep.subr.mxu0 0.0
  %757 = vmatpush2.msra.mxu0 0.0
  %758 = vmatprep.subr.mxu0 0.0
  %759 = vmatpush2.msra.mxu0 0.0
  %760 = vmatprep.subr.mxu0 0.0
  %761 = vmatpush2.msra.mxu0 0.0
  %762 = vmatprep.subr.mxu0 0.0
  %763 = vmatpush2.msra.mxu0 0.0
  %764 = vmatprep.subr.mxu0 0.0
  %765 = vmatpush2.msra.mxu0 0.0
  %766 = vmatprep.subr.mxu0 0.0
  %767 = vmatpush2.msra.mxu0 0.0
  %768 = vmatprep.subr.mxu0 0.0
  %769 = vmatpush2.msra.mxu0 0.0
  %770 = vmatprep.subr.mxu0 0.0
  %771 = vmatpush2.msra.mxu0 0.0
  %772 = vmatprep.subr.mxu0 0.0
  %773 = vmatpush2.msra.mxu0 0.0
  %774 = vmatprep.subr.mxu0 0.0
  %775 = vmatpush2.msra.mxu0 0.0
  %776 = vmatprep.subr.mxu0 0.0
  %777 = vmatpush2.msra.mxu0 0.0
  %778 = vmatprep.subr.mxu0 0.0
  %779 = vmatpush2.msra.mxu0 0.0
  %780 = vmatprep.subr.mxu0 0.0
  %781 = vmatpush2.msra.mxu0 0.0
  %782 = vmatprep.subr.mxu0 0.0
  %783 = vmatpush2.msra.mxu0 0.0
  %784 = vmatprep.mubr.f32.mxu0 0.0
  %785 = vmatmul.mubr.f32.gmra.mxu0 0.0
  %v786 = vpop.f32.mrf.mxu0
  %v787 = vadd.f32 0.0, %v786
  %v788 = vpop.f32.mrf.mxu0
  %789 = vdwg.mxu0
  %v790 = vadd.f32 %v711, %v787
  %v791 = vtanh.pop %v790
  %v792 = vmul.f32 %v791, %v719
  %793 = vst.msk [vmem:[#allocation6] sm:$0xff] %vm69, %v792
  %795 = vrot.lane.b32.xlu0 %v792, 64
  %v796 = vpop.permute.xlu0 %795
  %s798 = scalar_lea.vmem [#allocation7], 120
  %799 = vst.msk [vmem:[%s798] sm:$0xff] %vm69, %v796
  %s800 = scalar_lea.vmem [#allocation4], 8
  %v801 = vld [vmem:[%s800] sm:$0xff]
  %s802 = scalar_lea.vmem [#allocation5], 112
  %v803 = vld [vmem:[%s802] sm:$0xff]
  %805 = vrot.lane.b32.xlu0 %v803, 64
  %v806 = vpop.permute.xlu0 %805
  %v808 = vsel %vm69, %v801, %v806
  %s809 = scalar_lea.vmem [#allocation2], 8
  %v810 = vld [vmem:[%s809] sm:$0xff]
  %s811 = scalar_lea.vmem [#allocation3], 112
  %v812 = vld [vmem:[%s811] sm:$0xff]
  %814 = vrot.lane.b32.xlu0 %v812, 64
  %v815 = vpop.permute.xlu0 %814
  %v817 = vsel %vm69, %v810, %v815
  %818 = vmatprep.subr.mxu0 0.0
  %819 = vmatpush1.msra.mxu0 %v703
  %820 = vmatprep.subr.mxu0 0.0
  %821 = vmatpush1.msra.mxu0 %v702
  %822 = vmatprep.subr.mxu0 0.0
  %823 = vmatpush1.msra.mxu0 %v701
  %824 = vmatprep.subr.mxu0 0.0
  %825 = vmatpush1.msra.mxu0 %v700
  %826 = vmatprep.subr.mxu0 0.0
  %827 = vmatpush1.msra.mxu0 %v699
  %828 = vmatprep.subr.mxu0 0.0
  %829 = vmatpush1.msra.mxu0 %v698
  %830 = vmatprep.subr.mxu0 0.0
  %831 = vmatpush1.msra.mxu0 %v697
  %832 = vmatprep.subr.mxu0 0.0
  %833 = vmatpush1.msra.mxu0 %v696
  %834 = vmatprep.subr.mxu0 0.0
  %835 = vmatpush1.msra.mxu0 %v695
  %836 = vmatprep.subr.mxu0 0.0
  %837 = vmatpush1.msra.mxu0 %v694
  %838 = vmatprep.subr.mxu0 0.0
  %839 = vmatpush1.msra.mxu0 %v693
  %840 = vmatprep.subr.mxu0 0.0
  %841 = vmatpush1.msra.mxu0 %v692
  %842 = vmatprep.subr.mxu0 0.0
  %843 = vmatpush1.msra.mxu0 %v691
  %844 = vmatprep.subr.mxu0 0.0
  %845 = vmatpush1.msra.mxu0 %v690
  %846 = vmatprep.subr.mxu0 0.0
  %847 = vmatpush1.msra.mxu0 %v689
  %848 = vmatprep.subr.mxu0 0.0
  %849 = vmatpush1.msra.mxu0 %v688
  %850 = vmatprep.subr.mxu0 0.0
  %851 = vmatpush2.msra.mxu0 0.0
  %852 = vmatprep.subr.mxu0 0.0
  %853 = vmatpush2.msra.mxu0 0.0
  %854 = vmatprep.subr.mxu0 0.0
  %855 = vmatpush2.msra.mxu0 0.0
  %856 = vmatprep.subr.mxu0 0.0
  %857 = vmatpush2.msra.mxu0 0.0
  %858 = vmatprep.subr.mxu0 0.0
  %859 = vmatpush2.msra.mxu0 0.0
  %860 = vmatprep.subr.mxu0 0.0
  %861 = vmatpush2.msra.mxu0 0.0
  %862 = vmatprep.subr.mxu0 0.0
  %863 = vmatpush2.msra.mxu0 0.0
  %864 = vmatprep.subr.mxu0 0.0
  %865 = vmatpush2.msra.mxu0 0.0
  %866 = vmatprep.subr.mxu0 0.0
  %867 = vmatpush2.msra.mxu0 0.0
  %868 = vmatprep.subr.mxu0 0.0
  %869 = vmatpush2.msra.mxu0 0.0
  %870 = vmatprep.subr.mxu0 0.0
  %871 = vmatpush2.msra.mxu0 0.0
  %872 = vmatprep.subr.mxu0 0.0
  %873 = vmatpush2.msra.mxu0 0.0
  %874 = vmatprep.subr.mxu0 0.0
  %875 = vmatpush2.msra.mxu0 0.0
  %876 = vmatprep.subr.mxu0 0.0
  %877 = vmatpush2.msra.mxu0 0.0
  %878 = vmatprep.subr.mxu0 0.0
  %879 = vmatpush2.msra.mxu0 0.0
  %880 = vmatprep.subr.mxu0 0.0
  %881 = vmatpush2.msra.mxu0 0.0
  %882 = vmatprep.mubr.f32.mxu0 0.0
  %883 = vmatmul.mubr.f32.gmra.mxu0 %v792
  %v884 = vpop.f32.mrf.mxu0
  %v885 = vadd.f32 0.0, %v884
  %v886 = vpop.f32.mrf.mxu0
  %887 = vdwg.mxu0
  %v888 = vadd.f32 %v808, %v885
  %v889 = vtanh.pop %v888
  %v890 = vmul.f32 %v889, %v817
  %s891 = scalar_lea.vmem [#allocation6], 8
  %892 = vst.msk [vmem:[%s891] sm:$0xff] %vm69, %v890
  %894 = vrot.lane.b32.xlu0 %v890, 64
  %v895 = vpop.permute.xlu0 %894
  %s897 = scalar_lea.vmem [#allocation7], 112
  %898 = vst.msk [vmem:[%s897] sm:$0xff] %vm69, %v895
  %s899 = scalar_lea.vmem [#allocation4], 16
  %v900 = vld [vmem:[%s899] sm:$0xff]
  %s901 = scalar_lea.vmem [#allocation5], 104
  %v902 = vld [vmem:[%s901] sm:$0xff]
  %904 = vrot.lane.b32.xlu0 %v902, 64
  %v905 = vpop.permute.xlu0 %904
  %v907 = vsel %vm69, %v900, %v905
  %s908 = scalar_lea.vmem [#allocation2], 16
  %v909 = vld [vmem:[%s908] sm:$0xff]
  %s910 = scalar_lea.vmem [#allocation3], 104
  %v911 = vld [vmem:[%s910] sm:$0xff]
  %913 = vrot.lane.b32.xlu0 %v911, 64
  %v914 = vpop.permute.xlu0 %913
  %v916 = vsel %vm69, %v909, %v914
  %917 = vmatprep.subr.mxu0 0.0
  %918 = vmatpush1.msra.mxu0 %v703
  %919 = vmatprep.subr.mxu0 0.0
  %920 = vmatpush1.msra.mxu0 %v702
  %921 = vmatprep.subr.mxu0 0.0
  %922 = vmatpush1.msra.mxu0 %v701
  %923 = vmatprep.subr.mxu0 0.0
  %924 = vmatpush1.msra.mxu0 %v700
  %925 = vmatprep.subr.mxu0 0.0
  %926 = vmatpush1.msra.mxu0 %v699
  %927 = vmatprep.subr.mxu0 0.0
  %928 = vmatpush1.msra.mxu0 %v698
  %929 = vmatprep.subr.mxu0 0.0
  %930 = vmatpush1.msra.mxu0 %v697
  %931 = vmatprep.subr.mxu0 0.0
  %932 = vmatpush1.msra.mxu0 %v696
  %933 = vmatprep.subr.mxu0 0.0
  %934 = vmatpush1.msra.mxu0 %v695
  %935 = vmatprep.subr.mxu0 0.0
  %936 = vmatpush1.msra.mxu0 %v694
  %937 = vmatprep.subr.mxu0 0.0
  %938 = vmatpush1.msra.mxu0 %v693
  %939 = vmatprep.subr.mxu0 0.0
  %940 = vmatpush1.msra.mxu0 %v692
  %941 = vmatprep.subr.mxu0 0.0
  %942 = vmatpush1.msra.mxu0 %v691
  %943 = vmatprep.subr.mxu0 0.0
  %944 = vmatpush1.msra.mxu0 %v690
  %945 = vmatprep.subr.mxu0 0.0
  %946 = vmatpush1.msra.mxu0 %v689
  %947 = vmatprep.subr.mxu0 0.0
  %948 = vmatpush1.msra.mxu0 %v688
  %949 = vmatprep.subr.mxu0 0.0
  %950 = vmatpush2.msra.mxu0 0.0
  %951 = vmatprep.subr.mxu0 0.0
  %952 = vmatpush2.msra.mxu0 0.0
  %953 = vmatprep.subr.mxu0 0.0
  %954 = vmatpush2.msra.mxu0 0.0
  %955 = vmatprep.subr.mxu0 0.0
  %956 = vmatpush2.msra.mxu0 0.0
  %957 = vmatprep.subr.mxu0 0.0
  %958 = vmatpush2.msra.mxu0 0.0
  %959 = vmatprep.subr.mxu0 0.0
  %960 = vmatpush2.msra.mxu0 0.0
  %961 = vmatprep.subr.mxu0 0.0
  %962 = vmatpush2.msra.mxu0 0.0
  %963 = vmatprep.subr.mxu0 0.0
  %964 = vmatpush2.msra.mxu0 0.0
  %965 = vmatprep.subr.mxu0 0.0
  %966 = vmatpush2.msra.mxu0 0.0
  %967 = vmatprep.subr.mxu0 0.0
  %968 = vmatpush2.msra.mxu0 0.0
  %969 = vmatprep.subr.mxu0 0.0
  %970 = vmatpush2.msra.mxu0 0.0
  %971 = vmatprep.subr.mxu0 0.0
  %972 = vmatpush2.msra.mxu0 0.0
  %973 = vmatprep.subr.mxu0 0.0
  %974 = vmatpush2.msra.mxu0 0.0
  %975 = vmatprep.subr.mxu0 0.0
  %976 = vmatpush2.msra.mxu0 0.0
  %977 = vmatprep.subr.mxu0 0.0
  %978 = vmatpush2.msra.mxu0 0.0
  %979 = vmatprep.subr.mxu0 0.0
  %980 = vmatpush2.msra.mxu0 0.0
  %981 = vmatprep.mubr.f32.mxu0 0.0
  %982 = vmatmul.mubr.f32.gmra.mxu0 %v890
  %v983 = vpop.f32.mrf.mxu0
  %v984 = vadd.f32 0.0, %v983
  %v985 = vpop.f32.mrf.mxu0
  %986 = vdwg.mxu0
  %v987 = vadd.f32 %v907, %v984
  %v988 = vtanh.pop %v987
  %v989 = vmul.f32 %v988, %v916
  %s990 = scalar_lea.vmem [#allocation6], 16
  %991 = vst.msk [vmem:[%s990] sm:$0xff] %vm69, %v989
  %993 = vrot.lane.b32.xlu0 %v989, 64
  %v994 = vpop.permute.xlu0 %993
  %s996 = scalar_lea.vmem [#allocation7], 104
  %997 = vst.msk [vmem:[%s996] sm:$0xff] %vm69, %v994
  %s998 = scalar_lea.vmem [#allocation4], 24
  %v999 = vld [vmem:[%s998] sm:$0xff]
  %s1000 = scalar_lea.vmem [#allocation5], 96
  %v1001 = vld [vmem:[%s1000] sm:$0xff]
  %1003 = vrot.lane.b32.xlu0 %v1001, 64
  %v1004 = vpop.permute.xlu0 %1003
  %v1006 = vsel %vm69, %v999, %v1004
  %s1007 = scalar_lea.vmem [#allocation2], 24
  %v1008 = vld [vmem:[%s1007] sm:$0xff]
  %s1009 = scalar_lea.vmem [#allocation3], 96
  %v1010 = vld [vmem:[%s1009] sm:$0xff]
  %1012 = vrot.lane.b32.xlu0 %v1010, 64
  %v1013 = vpop.permute.xlu0 %1012
  %v1015 = vsel %vm69, %v1008, %v1013
  %1016 = vmatprep.subr.mxu0 0.0
  %1017 = vmatpush1.msra.mxu0 %v703
  %1018 = vmatprep.subr.mxu0 0.0
  %1019 = vmatpush1.msra.mxu0 %v702
  %1020 = vmatprep.subr.mxu0 0.0
  %1021 = vmatpush1.msra.mxu0 %v701
  %1022 = vmatprep.subr.mxu0 0.0
  %1023 = vmatpush1.msra.mxu0 %v700
  %1024 = vmatprep.subr.mxu0 0.0
  %1025 = vmatpush1.msra.mxu0 %v699
  %1026 = vmatprep.subr.mxu0 0.0
  %1027 = vmatpush1.msra.mxu0 %v698
  %1028 = vmatprep.subr.mxu0 0.0
  %1029 = vmatpush1.msra.mxu0 %v697
  %1030 = vmatprep.subr.mxu0 0.0
  %1031 = vmatpush1.msra.mxu0 %v696
  %1032 = vmatprep.subr.mxu0 0.0
  %1033 = vmatpush1.msra.mxu0 %v695
  %1034 = vmatprep.subr.mxu0 0.0
  %1035 = vmatpush1.msra.mxu0 %v694
  %1036 = vmatprep.subr.mxu0 0.0
  %1037 = vmatpush1.msra.mxu0 %v693
  %1038 = vmatprep.subr.mxu0 0.0
  %1039 = vmatpush1.msra.mxu0 %v692
  %1040 = vmatprep.subr.mxu0 0.0
  %1041 = vmatpush1.msra.mxu0 %v691
  %1042 = vmatprep.subr.mxu0 0.0
  %1043 = vmatpush1.msra.mxu0 %v690
  %1044 = vmatprep.subr.mxu0 0.0
  %1045 = vmatpush1.msra.mxu0 %v689
  %1046 = vmatprep.subr.mxu0 0.0
  %1047 = vmatpush1.msra.mxu0 %v688
  %1048 = vmatprep.subr.mxu0 0.0
  %1049 = vmatpush2.msra.mxu0 0.0
  %1050 = vmatprep.subr.mxu0 0.0
  %1051 = vmatpush2.msra.mxu0 0.0
  %1052 = vmatprep.subr.mxu0 0.0
  %1053 = vmatpush2.msra.mxu0 0.0
  %1054 = vmatprep.subr.mxu0 0.0
  %1055 = vmatpush2.msra.mxu0 0.0
  %1056 = vmatprep.subr.mxu0 0.0
  %1057 = vmatpush2.msra.mxu0 0.0
  %1058 = vmatprep.subr.mxu0 0.0
  %1059 = vmatpush2.msra.mxu0 0.0
  %1060 = vmatprep.subr.mxu0 0.0
  %1061 = vmatpush2.msra.mxu0 0.0
  %1062 = vmatprep.subr.mxu0 0.0
  %1063 = vmatpush2.msra.mxu0 0.0
  %1064 = vmatprep.subr.mxu0 0.0
  %1065 = vmatpush2.msra.mxu0 0.0
  %1066 = vmatprep.subr.mxu0 0.0
  %1067 = vmatpush2.msra.mxu0 0.0
  %1068 = vmatprep.subr.mxu0 0.0
  %1069 = vmatpush2.msra.mxu0 0.0
  %1070 = vmatprep.subr.mxu0 0.0
  %1071 = vmatpush2.msra.mxu0 0.0
  %1072 = vmatprep.subr.mxu0 0.0
  %1073 = vmatpush2.msra.mxu0 0.0
  %1074 = vmatprep.subr.mxu0 0.0
  %1075 = vmatpush2.msra.mxu0 0.0
  %1076 = vmatprep.subr.mxu0 0.0
  %1077 = vmatpush2.msra.mxu0 0.0
  %1078 = vmatprep.subr.mxu0 0.0
  %1079 = vmatpush2.msra.mxu0 0.0
  %1080 = vmatprep.mubr.f32.mxu0 0.0
  %1081 = vmatmul.mubr.f32.gmra.mxu0 %v989
  %v1082 = vpop.f32.mrf.mxu0
  %v1083 = vadd.f32 0.0, %v1082
  %v1084 = vpop.f32.mrf.mxu0
  %1085 = vdwg.mxu0
  %v1086 = vadd.f32 %v1006, %v1083
  %v1087 = vtanh.pop %v1086
  %v1088 = vmul.f32 %v1087, %v1015
  %s1089 = scalar_lea.vmem [#allocation6], 24
  %1090 = vst.msk [vmem:[%s1089] sm:$0xff] %vm69, %v1088
  %1092 = vrot.lane.b32.xlu0 %v1088, 64
  %v1093 = vpop.permute.xlu0 %1092
  %s1095 = scalar_lea.vmem [#allocation7], 96
  %1096 = vst.msk [vmem:[%s1095] sm:$0xff] %vm69, %v1093
  %s1097 = scalar_lea.vmem [#allocation4], 32
  %v1098 = vld [vmem:[%s1097] sm:$0xff]
  %s1099 = scalar_lea.vmem [#allocation5], 88
  %v1100 = vld [vmem:[%s1099] sm:$0xff]
  %1102 = vrot.lane.b32.xlu0 %v1100, 64
  %v1103 = vpop.permute.xlu0 %1102
  %v1105 = vsel %vm69, %v1098, %v1103
  %s1106 = scalar_lea.vmem [#allocation2], 32
  %v1107 = vld [vmem:[%s1106] sm:$0xff]
  %s1108 = scalar_lea.vmem [#allocation3], 88
  %v1109 = vld [vmem:[%s1108] sm:$0xff]
  %1111 = vrot.lane.b32.xlu0 %v1109, 64
  %v1112 = vpop.permute.xlu0 %1111
  %v1114 = vsel %vm69, %v1107, %v1112
  %1115 = vmatprep.subr.mxu0 0.0
  %1116 = vmatpush1.msra.mxu0 %v703
  %1117 = vmatprep.subr.mxu0 0.0
  %1118 = vmatpush1.msra.mxu0 %v702
  %1119 = vmatprep.subr.mxu0 0.0
  %1120 = vmatpush1.msra.mxu0 %v701
  %1121 = vmatprep.subr.mxu0 0.0
  %1122 = vmatpush1.msra.mxu0 %v700
  %1123 = vmatprep.subr.mxu0 0.0
  %1124 = vmatpush1.msra.mxu0 %v699
  %1125 = vmatprep.subr.mxu0 0.0
  %1126 = vmatpush1.msra.mxu0 %v698
  %1127 = vmatprep.subr.mxu0 0.0
  %1128 = vmatpush1.msra.mxu0 %v697
  %1129 = vmatprep.subr.mxu0 0.0
  %1130 = vmatpush1.msra.mxu0 %v696
  %1131 = vmatprep.subr.mxu0 0.0
  %1132 = vmatpush1.msra.mxu0 %v695
  %1133 = vmatprep.subr.mxu0 0.0
  %1134 = vmatpush1.msra.mxu0 %v694
  %1135 = vmatprep.subr.mxu0 0.0
  %1136 = vmatpush1.msra.mxu0 %v693
  %1137 = vmatprep.subr.mxu0 0.0
  %1138 = vmatpush1.msra.mxu0 %v692
  %1139 = vmatprep.subr.mxu0 0.0
  %1140 = vmatpush1.msra.mxu0 %v691
  %1141 = vmatprep.subr.mxu0 0.0
  %1142 = vmatpush1.msra.mxu0 %v690
  %1143 = vmatprep.subr.mxu0 0.0
  %1144 = vmatpush1.msra.mxu0 %v689
  %1145 = vmatprep.subr.mxu0 0.0
  %1146 = vmatpush1.msra.mxu0 %v688
  %1147 = vmatprep.subr.mxu0 0.0
  %1148 = vmatpush2.msra.mxu0 0.0
  %1149 = vmatprep.subr.mxu0 0.0
  %1150 = vmatpush2.msra.mxu0 0.0
  %1151 = vmatprep.subr.mxu0 0.0
  %1152 = vmatpush2.msra.mxu0 0.0
  %1153 = vmatprep.subr.mxu0 0.0
  %1154 = vmatpush2.msra.mxu0 0.0
  %1155 = vmatprep.subr.mxu0 0.0
  %1156 = vmatpush2.msra.mxu0 0.0
  %1157 = vmatprep.subr.mxu0 0.0
  %1158 = vmatpush2.msra.mxu0 0.0
  %1159 = vmatprep.subr.mxu0 0.0
  %1160 = vmatpush2.msra.mxu0 0.0
  %1161 = vmatprep.subr.mxu0 0.0
  %1162 = vmatpush2.msra.mxu0 0.0
  %1163 = vmatprep.subr.mxu0 0.0
  %1164 = vmatpush2.msra.mxu0 0.0
  %1165 = vmatprep.subr.mxu0 0.0
  %1166 = vmatpush2.msra.mxu0 0.0
  %1167 = vmatprep.subr.mxu0 0.0
  %1168 = vmatpush2.msra.mxu0 0.0
  %1169 = vmatprep.subr.mxu0 0.0
  %1170 = vmatpush2.msra.mxu0 0.0
  %1171 = vmatprep.subr.mxu0 0.0
  %1172 = vmatpush2.msra.mxu0 0.0
  %1173 = vmatprep.subr.mxu0 0.0
  %1174 = vmatpush2.msra.mxu0 0.0
  %1175 = vmatprep.subr.mxu0 0.0
  %1176 = vmatpush2.msra.mxu0 0.0
  %1177 = vmatprep.subr.mxu0 0.0
  %1178 = vmatpush2.msra.mxu0 0.0
  %1179 = vmatprep.mubr.f32.mxu0 0.0
  %1180 = vmatmul.mubr.f32.gmra.mxu0 %v1088
  %v1181 = vpop.f32.mrf.mxu0
  %v1182 = vadd.f32 0.0, %v1181
  %v1183 = vpop.f32.mrf.mxu0
  %1184 = vdwg.mxu0
  %v1185 = vadd.f32 %v1105, %v1182
  %v1186 = vtanh.pop %v1185
  %v1187 = vmul.f32 %v1186, %v1114
  %s1188 = scalar_lea.vmem [#allocation6], 32
  %1189 = vst.msk [vmem:[%s1188] sm:$0xff] %vm69, %v1187
  %1191 = vrot.lane.b32.xlu0 %v1187, 64
  %v1192 = vpop.permute.xlu0 %1191
  %s1194 = scalar_lea.vmem [#allocation7], 88
  %1195 = vst.msk [vmem:[%s1194] sm:$0xff] %vm69, %v1192
  %s1196 = scalar_lea.vmem [#allocation4], 40
  %v1197 = vld [vmem:[%s1196] sm:$0xff]
  %s1198 = scalar_lea.vmem [#allocation5], 80
  %v1199 = vld [vmem:[%s1198] sm:$0xff]
  %1201 = vrot.lane.b32.xlu0 %v1199, 64
  %v1202 = vpop.permute.xlu0 %1201
  %v1204 = vsel %vm69, %v1197, %v1202
  %s1205 = scalar_lea.vmem [#allocation2], 40
  %v1206 = vld [vmem:[%s1205] sm:$0xff]
  %s1207 = scalar_lea.vmem [#allocation3], 80
  %v1208 = vld [vmem:[%s1207] sm:$0xff]
  %1210 = vrot.lane.b32.xlu0 %v1208, 64
  %v1211 = vpop.permute.xlu0 %1210
  %v1213 = vsel %vm69, %v1206, %v1211
  %1214 = vmatprep.subr.mxu0 0.0
  %1215 = vmatpush1.msra.mxu0 %v703
  %1216 = vmatprep.subr.mxu0 0.0
  %1217 = vmatpush1.msra.mxu0 %v702
  %1218 = vmatprep.subr.mxu0 0.0
  %1219 = vmatpush1.msra.mxu0 %v701
  %1220 = vmatprep.subr.mxu0 0.0
  %1221 = vmatpush1.msra.mxu0 %v700
  %1222 = vmatprep.subr.mxu0 0.0
  %1223 = vmatpush1.msra.mxu0 %v699
  %1224 = vmatprep.subr.mxu0 0.0
  %1225 = vmatpush1.msra.mxu0 %v698
  %1226 = vmatprep.subr.mxu0 0.0
  %1227 = vmatpush1.msra.mxu0 %v697
  %1228 = vmatprep.subr.mxu0 0.0
  %1229 = vmatpush1.msra.mxu0 %v696
  %1230 = vmatprep.subr.mxu0 0.0
  %1231 = vmatpush1.msra.mxu0 %v695
  %1232 = vmatprep.subr.mxu0 0.0
  %1233 = vmatpush1.msra.mxu0 %v694
  %1234 = vmatprep.subr.mxu0 0.0
  %1235 = vmatpush1.msra.mxu0 %v693
  %1236 = vmatprep.subr.mxu0 0.0
  %1237 = vmatpush1.msra.mxu0 %v692
  %1238 = vmatprep.subr.mxu0 0.0
  %1239 = vmatpush1.msra.mxu0 %v691
  %1240 = vmatprep.subr.mxu0 0.0
  %1241 = vmatpush1.msra.mxu0 %v690
  %1242 = vmatprep.subr.mxu0 0.0
  %1243 = vmatpush1.msra.mxu0 %v689
  %1244 = vmatprep.subr.mxu0 0.0
  %1245 = vmatpush1.msra.mxu0 %v688
  %1246 = vmatprep.subr.mxu0 0.0
  %1247 = vmatpush2.msra.mxu0 0.0
  %1248 = vmatprep.subr.mxu0 0.0
  %1249 = vmatpush2.msra.mxu0 0.0
  %1250 = vmatprep.subr.mxu0 0.0
  %1251 = vmatpush2.msra.mxu0 0.0
  %1252 = vmatprep.subr.mxu0 0.0
  %1253 = vmatpush2.msra.mxu0 0.0
  %1254 = vmatprep.subr.mxu0 0.0
  %1255 = vmatpush2.msra.mxu0 0.0
  %1256 = vmatprep.subr.mxu0 0.0
  %1257 = vmatpush2.msra.mxu0 0.0
  %1258 = vmatprep.subr.mxu0 0.0
  %1259 = vmatpush2.msra.mxu0 0.0
  %1260 = vmatprep.subr.mxu0 0.0
  %1261 = vmatpush2.msra.mxu0 0.0
  %1262 = vmatprep.subr.mxu0 0.0
  %1263 = vmatpush2.msra.mxu0 0.0
  %1264 = vmatprep.subr.mxu0 0.0
  %1265 = vmatpush2.msra.mxu0 0.0
  %1266 = vmatprep.subr.mxu0 0.0
  %1267 = vmatpush2.msra.mxu0 0.0
  %1268 = vmatprep.subr.mxu0 0.0
  %1269 = vmatpush2.msra.mxu0 0.0
  %1270 = vmatprep.subr.mxu0 0.0
  %1271 = vmatpush2.msra.mxu0 0.0
  %1272 = vmatprep.subr.mxu0 0.0
  %1273 = vmatpush2.msra.mxu0 0.0
  %1274 = vmatprep.subr.mxu0 0.0
  %1275 = vmatpush2.msra.mxu0 0.0
  %1276 = vmatprep.subr.mxu0 0.0
  %1277 = vmatpush2.msra.mxu0 0.0
  %1278 = vmatprep.mubr.f32.mxu0 0.0
  %1279 = vmatmul.mubr.f32.gmra.mxu0 %v1187
  %v1280 = vpop.f32.mrf.mxu0
  %v1281 = vadd.f32 0.0, %v1280
  %v1282 = vpop.f32.mrf.mxu0
  %1283 = vdwg.mxu0
  %v1284 = vadd.f32 %v1204, %v1281
  %v1285 = vtanh.pop %v1284
  %v1286 = vmul.f32 %v1285, %v1213
  %s1287 = scalar_lea.vmem [#allocation6], 40
  %1288 = vst.msk [vmem:[%s1287] sm:$0xff] %vm69, %v1286
  %1290 = vrot.lane.b32.xlu0 %v1286, 64
  %v1291 = vpop.permute.xlu0 %1290
  %s1293 = scalar_lea.vmem [#allocation7], 80
  %1294 = vst.msk [vmem:[%s1293] sm:$0xff] %vm69, %v1291
  %s1295 = scalar_lea.vmem [#allocation4], 48
  %v1296 = vld [vmem:[%s1295] sm:$0xff]
  %s1297 = scalar_lea.vmem [#allocation5], 72
  %v1298 = vld [vmem:[%s1297] sm:$0xff]
  %1300 = vrot.lane.b32.xlu0 %v1298, 64
  %v1301 = vpop.permute.xlu0 %1300
  %v1303 = vsel %vm69, %v1296, %v1301
  %s1304 = scalar_lea.vmem [#allocation2], 48
  %v1305 = vld [vmem:[%s1304] sm:$0xff]
  %s1306 = scalar_lea.vmem [#allocation3], 72
  %v1307 = vld [vmem:[%s1306] sm:$0xff]
  %1309 = vrot.lane.b32.xlu0 %v1307, 64
  %v1310 = vpop.permute.xlu0 %1309
  %v1312 = vsel %vm69, %v1305, %v1310
  %1313 = vmatprep.subr.mxu0 0.0
  %1314 = vmatpush1.msra.mxu0 %v703
  %1315 = vmatprep.subr.mxu0 0.0
  %1316 = vmatpush1.msra.mxu0 %v702
  %1317 = vmatprep.subr.mxu0 0.0
  %1318 = vmatpush1.msra.mxu0 %v701
  %1319 = vmatprep.subr.mxu0 0.0
  %1320 = vmatpush1.msra.mxu0 %v700
  %1321 = vmatprep.subr.mxu0 0.0
  %1322 = vmatpush1.msra.mxu0 %v699
  %1323 = vmatprep.subr.mxu0 0.0
  %1324 = vmatpush1.msra.mxu0 %v698
  %1325 = vmatprep.subr.mxu0 0.0
  %1326 = vmatpush1.msra.mxu0 %v697
  %1327 = vmatprep.subr.mxu0 0.0
  %1328 = vmatpush1.msra.mxu0 %v696
  %1329 = vmatprep.subr.mxu0 0.0
  %1330 = vmatpush1.msra.mxu0 %v695
  %1331 = vmatprep.subr.mxu0 0.0
  %1332 = vmatpush1.msra.mxu0 %v694
  %1333 = vmatprep.subr.mxu0 0.0
  %1334 = vmatpush1.msra.mxu0 %v693
  %1335 = vmatprep.subr.mxu0 0.0
  %1336 = vmatpush1.msra.mxu0 %v692
  %1337 = vmatprep.subr.mxu0 0.0
  %1338 = vmatpush1.msra.mxu0 %v691
  %1339 = vmatprep.subr.mxu0 0.0
  %1340 = vmatpush1.msra.mxu0 %v690
  %1341 = vmatprep.subr.mxu0 0.0
  %1342 = vmatpush1.msra.mxu0 %v689
  %1343 = vmatprep.subr.mxu0 0.0
  %1344 = vmatpush1.msra.mxu0 %v688
  %1345 = vmatprep.subr.mxu0 0.0
  %1346 = vmatpush2.msra.mxu0 0.0
  %1347 = vmatprep.subr.mxu0 0.0
  %1348 = vmatpush2.msra.mxu0 0.0
  %1349 = vmatprep.subr.mxu0 0.0
  %1350 = vmatpush2.msra.mxu0 0.0
  %1351 = vmatprep.subr.mxu0 0.0
  %1352 = vmatpush2.msra.mxu0 0.0
  %1353 = vmatprep.subr.mxu0 0.0
  %1354 = vmatpush2.msra.mxu0 0.0
  %1355 = vmatprep.subr.mxu0 0.0
  %1356 = vmatpush2.msra.mxu0 0.0
  %1357 = vmatprep.subr.mxu0 0.0
  %1358 = vmatpush2.msra.mxu0 0.0
  %1359 = vmatprep.subr.mxu0 0.0
  %1360 = vmatpush2.msra.mxu0 0.0
  %1361 = vmatprep.subr.mxu0 0.0
  %1362 = vmatpush2.msra.mxu0 0.0
  %1363 = vmatprep.subr.mxu0 0.0
  %1364 = vmatpush2.msra.mxu0 0.0
  %1365 = vmatprep.subr.mxu0 0.0
  %1366 = vmatpush2.msra.mxu0 0.0
  %1367 = vmatprep.subr.mxu0 0.0
  %1368 = vmatpush2.msra.mxu0 0.0
  %1369 = vmatprep.subr.mxu0 0.0
  %1370 = vmatpush2.msra.mxu0 0.0
  %1371 = vmatprep.subr.mxu0 0.0
  %1372 = vmatpush2.msra.mxu0 0.0
  %1373 = vmatprep.subr.mxu0 0.0
  %1374 = vmatpush2.msra.mxu0 0.0
  %1375 = vmatprep.subr.mxu0 0.0
  %1376 = vmatpush2.msra.mxu0 0.0
  %1377 = vmatprep.mubr.f32.mxu0 0.0
  %1378 = vmatmul.mubr.f32.gmra.mxu0 %v1286
  %v1379 = vpop.f32.mrf.mxu0
  %v1380 = vadd.f32 0.0, %v1379
  %v1381 = vpop.f32.mrf.mxu0
  %1382 = vdwg.mxu0
  %v1383 = vadd.f32 %v1303, %v1380
  %v1384 = vtanh.pop %v1383
  %v1385 = vmul.f32 %v1384, %v1312
  %s1386 = scalar_lea.vmem [#allocation6], 48
  %1387 = vst.msk [vmem:[%s1386] sm:$0xff] %vm69, %v1385
  %1389 = vrot.lane.b32.xlu0 %v1385, 64
  %v1390 = vpop.permute.xlu0 %1389
  %s1392 = scalar_lea.vmem [#allocation7], 72
  %1393 = vst.msk [vmem:[%s1392] sm:$0xff] %vm69, %v1390
  %s1394 = scalar_lea.vmem [#allocation4], 56
  %v1395 = vld [vmem:[%s1394] sm:$0xff]
  %s1396 = scalar_lea.vmem [#allocation5], 64
  %v1397 = vld [vmem:[%s1396] sm:$0xff]
  %1399 = vrot.lane.b32.xlu0 %v1397, 64
  %v1400 = vpop.permute.xlu0 %1399
  %v1402 = vsel %vm69, %v1395, %v1400
  %s1403 = scalar_lea.vmem [#allocation2], 56
  %v1404 = vld [vmem:[%s1403] sm:$0xff]
  %s1405 = scalar_lea.vmem [#allocation3], 64
  %v1406 = vld [vmem:[%s1405] sm:$0xff]
  %1408 = vrot.lane.b32.xlu0 %v1406, 64
  %v1409 = vpop.permute.xlu0 %1408
  %v1411 = vsel %vm69, %v1404, %v1409
  %1412 = vmatprep.subr.mxu0 0.0
  %1413 = vmatpush1.msra.mxu0 %v703
  %1414 = vmatprep.subr.mxu0 0.0
  %1415 = vmatpush1.msra.mxu0 %v702
  %1416 = vmatprep.subr.mxu0 0.0
  %1417 = vmatpush1.msra.mxu0 %v701
  %1418 = vmatprep.subr.mxu0 0.0
  %1419 = vmatpush1.msra.mxu0 %v700
  %1420 = vmatprep.subr.mxu0 0.0
  %1421 = vmatpush1.msra.mxu0 %v699
  %1422 = vmatprep.subr.mxu0 0.0
  %1423 = vmatpush1.msra.mxu0 %v698
  %1424 = vmatprep.subr.mxu0 0.0
  %1425 = vmatpush1.msra.mxu0 %v697
  %1426 = vmatprep.subr.mxu0 0.0
  %1427 = vmatpush1.msra.mxu0 %v696
  %1428 = vmatprep.subr.mxu0 0.0
  %1429 = vmatpush1.msra.mxu0 %v695
  %1430 = vmatprep.subr.mxu0 0.0
  %1431 = vmatpush1.msra.mxu0 %v694
  %1432 = vmatprep.subr.mxu0 0.0
  %1433 = vmatpush1.msra.mxu0 %v693
  %1434 = vmatprep.subr.mxu0 0.0
  %1435 = vmatpush1.msra.mxu0 %v692
  %1436 = vmatprep.subr.mxu0 0.0
  %1437 = vmatpush1.msra.mxu0 %v691
  %1438 = vmatprep.subr.mxu0 0.0
  %1439 = vmatpush1.msra.mxu0 %v690
  %1440 = vmatprep.subr.mxu0 0.0
  %1441 = vmatpush1.msra.mxu0 %v689
  %1442 = vmatprep.subr.mxu0 0.0
  %1443 = vmatpush1.msra.mxu0 %v688
  %1444 = vmatprep.subr.mxu0 0.0
  %1445 = vmatpush2.msra.mxu0 0.0
  %1446 = vmatprep.subr.mxu0 0.0
  %1447 = vmatpush2.msra.mxu0 0.0
  %1448 = vmatprep.subr.mxu0 0.0
  %1449 = vmatpush2.msra.mxu0 0.0
  %1450 = vmatprep.subr.mxu0 0.0
  %1451 = vmatpush2.msra.mxu0 0.0
  %1452 = vmatprep.subr.mxu0 0.0
  %1453 = vmatpush2.msra.mxu0 0.0
  %1454 = vmatprep.subr.mxu0 0.0
  %1455 = vmatpush2.msra.mxu0 0.0
  %1456 = vmatprep.subr.mxu0 0.0
  %1457 = vmatpush2.msra.mxu0 0.0
  %1458 = vmatprep.subr.mxu0 0.0
  %1459 = vmatpush2.msra.mxu0 0.0
  %1460 = vmatprep.subr.mxu0 0.0
  %1461 = vmatpush2.msra.mxu0 0.0
  %1462 = vmatprep.subr.mxu0 0.0
  %1463 = vmatpush2.msra.mxu0 0.0
  %1464 = vmatprep.subr.mxu0 0.0
  %1465 = vmatpush2.msra.mxu0 0.0
  %1466 = vmatprep.subr.mxu0 0.0
  %1467 = vmatpush2.msra.mxu0 0.0
  %1468 = vmatprep.subr.mxu0 0.0
  %1469 = vmatpush2.msra.mxu0 0.0
  %1470 = vmatprep.subr.mxu0 0.0
  %1471 = vmatpush2.msra.mxu0 0.0
  %1472 = vmatprep.subr.mxu0 0.0
  %1473 = vmatpush2.msra.mxu0 0.0
  %1474 = vmatprep.subr.mxu0 0.0
  %1475 = vmatpush2.msra.mxu0 0.0
  %1476 = vmatprep.mubr.f32.mxu0 0.0
  %1477 = vmatmul.mubr.f32.gmra.mxu0 %v1385
  %v1478 = vpop.f32.mrf.mxu0
  %v1479 = vadd.f32 0.0, %v1478
  %v1480 = vpop.f32.mrf.mxu0
  %1481 = vdwg.mxu0
  %v1482 = vadd.f32 %v1402, %v1479
  %v1483 = vtanh.pop %v1482
  %v1484 = vmul.f32 %v1483, %v1411
  %s1485 = scalar_lea.vmem [#allocation6], 56
  %1486 = vst.msk [vmem:[%s1485] sm:$0xff] %vm69, %v1484
  %1488 = vrot.lane.b32.xlu0 %v1484, 64
  %v1489 = vpop.permute.xlu0 %1488
  %s1491 = scalar_lea.vmem [#allocation7], 64
  %1492 = vst.msk [vmem:[%s1491] sm:$0xff] %vm69, %v1489
  %s1493 = scalar_lea.vmem [#allocation4], 64
  %v1494 = vld [vmem:[%s1493] sm:$0xff]
  %s1495 = scalar_lea.vmem [#allocation5], 56
  %v1496 = vld [vmem:[%s1495] sm:$0xff]
  %1498 = vrot.lane.b32.xlu0 %v1496, 64
  %v1499 = vpop.permute.xlu0 %1498
  %v1501 = vsel %vm69, %v1494, %v1499
  %s1502 = scalar_lea.vmem [#allocation2], 64
  %v1503 = vld [vmem:[%s1502] sm:$0xff]
  %s1504 = scalar_lea.vmem [#allocation3], 56
  %v1505 = vld [vmem:[%s1504] sm:$0xff]
  %1507 = vrot.lane.b32.xlu0 %v1505, 64
  %v1508 = vpop.permute.xlu0 %1507
  %v1510 = vsel %vm69, %v1503, %v1508
  %1511 = vmatprep.subr.mxu0 0.0
  %1512 = vmatpush1.msra.mxu0 %v703
  %1513 = vmatprep.subr.mxu0 0.0
  %1514 = vmatpush1.msra.mxu0 %v702
  %1515 = vmatprep.subr.mxu0 0.0
  %1516 = vmatpush1.msra.mxu0 %v701
  %1517 = vmatprep.subr.mxu0 0.0
  %1518 = vmatpush1.msra.mxu0 %v700
  %1519 = vmatprep.subr.mxu0 0.0
  %1520 = vmatpush1.msra.mxu0 %v699
  %1521 = vmatprep.subr.mxu0 0.0
  %1522 = vmatpush1.msra.mxu0 %v698
  %1523 = vmatprep.subr.mxu0 0.0
  %1524 = vmatpush1.msra.mxu0 %v697
  %1525 = vmatprep.subr.mxu0 0.0
  %1526 = vmatpush1.msra.mxu0 %v696
  %1527 = vmatprep.subr.mxu0 0.0
  %1528 = vmatpush1.msra.mxu0 %v695
  %1529 = vmatprep.subr.mxu0 0.0
  %1530 = vmatpush1.msra.mxu0 %v694
  %1531 = vmatprep.subr.mxu0 0.0
  %1532 = vmatpush1.msra.mxu0 %v693
  %1533 = vmatprep.subr.mxu0 0.0
  %1534 = vmatpush1.msra.mxu0 %v692
  %1535 = vmatprep.subr.mxu0 0.0
  %1536 = vmatpush1.msra.mxu0 %v691
  %1537 = vmatprep.subr.mxu0 0.0
  %1538 = vmatpush1.msra.mxu0 %v690
  %1539 = vmatprep.subr.mxu0 0.0
  %1540 = vmatpush1.msra.mxu0 %v689
  %1541 = vmatprep.subr.mxu0 0.0
  %1542 = vmatpush1.msra.mxu0 %v688
  %1543 = vmatprep.subr.mxu0 0.0
  %1544 = vmatpush2.msra.mxu0 0.0
  %1545 = vmatprep.subr.mxu0 0.0
  %1546 = vmatpush2.msra.mxu0 0.0
  %1547 = vmatprep.subr.mxu0 0.0
  %1548 = vmatpush2.msra.mxu0 0.0
  %1549 = vmatprep.subr.mxu0 0.0
  %1550 = vmatpush2.msra.mxu0 0.0
  %1551 = vmatprep.subr.mxu0 0.0
  %1552 = vmatpush2.msra.mxu0 0.0
  %1553 = vmatprep.subr.mxu0 0.0
  %1554 = vmatpush2.msra.mxu0 0.0
  %1555 = vmatprep.subr.mxu0 0.0
  %1556 = vmatpush2.msra.mxu0 0.0
  %1557 = vmatprep.subr.mxu0 0.0
  %1558 = vmatpush2.msra.mxu0 0.0
  %1559 = vmatprep.subr.mxu0 0.0
  %1560 = vmatpush2.msra.mxu0 0.0
  %1561 = vmatprep.subr.mxu0 0.0
  %1562 = vmatpush2.msra.mxu0 0.0
  %1563 = vmatprep.subr.mxu0 0.0
  %1564 = vmatpush2.msra.mxu0 0.0
  %1565 = vmatprep.subr.mxu0 0.0
  %1566 = vmatpush2.msra.mxu0 0.0
  %1567 = vmatprep.subr.mxu0 0.0
  %1568 = vmatpush2.msra.mxu0 0.0
  %1569 = vmatprep.subr.mxu0 0.0
  %1570 = vmatpush2.msra.mxu0 0.0
  %1571 = vmatprep.subr.mxu0 0.0
  %1572 = vmatpush2.msra.mxu0 0.0
  %1573 = vmatprep.subr.mxu0 0.0
  %1574 = vmatpush2.msra.mxu0 0.0
  %1575 = vmatprep.mubr.f32.mxu0 0.0
  %1576 = vmatmul.mubr.f32.gmra.mxu0 %v1484
  %v1577 = vpop.f32.mrf.mxu0
  %v1578 = vadd.f32 0.0, %v1577
  %v1579 = vpop.f32.mrf.mxu0
  %1580 = vdwg.mxu0
  %v1581 = vadd.f32 %v1501, %v1578
  %v1582 = vtanh.pop %v1581
  %v1583 = vmul.f32 %v1582, %v1510
  %s1584 = scalar_lea.vmem [#allocation6], 64
  %1585 = vst.msk [vmem:[%s1584] sm:$0xff] %vm69, %v1583
  %1587 = vrot.lane.b32.xlu0 %v1583, 64
  %v1588 = vpop.permute.xlu0 %1587
  %s1590 = scalar_lea.vmem [#allocation7], 56
  %1591 = vst.msk [vmem:[%s1590] sm:$0xff] %vm69, %v1588
  %s1592 = scalar_lea.vmem [#allocation4], 72
  %v1593 = vld [vmem:[%s1592] sm:$0xff]
  %s1594 = scalar_lea.vmem [#allocation5], 48
  %v1595 = vld [vmem:[%s1594] sm:$0xff]
  %1597 = vrot.lane.b32.xlu0 %v1595, 64
  %v1598 = vpop.permute.xlu0 %1597
  %v1600 = vsel %vm69, %v1593, %v1598
  %s1601 = scalar_lea.vmem [#allocation2], 72
  %v1602 = vld [vmem:[%s1601] sm:$0xff]
  %s1603 = scalar_lea.vmem [#allocation3], 48
  %v1604 = vld [vmem:[%s1603] sm:$0xff]
  %1606 = vrot.lane.b32.xlu0 %v1604, 64
  %v1607 = vpop.permute.xlu0 %1606
  %v1609 = vsel %vm69, %v1602, %v1607
  %1610 = vmatprep.subr.mxu0 0.0
  %1611 = vmatpush1.msra.mxu0 %v703
  %1612 = vmatprep.subr.mxu0 0.0
  %1613 = vmatpush1.msra.mxu0 %v702
  %1614 = vmatprep.subr.mxu0 0.0
  %1615 = vmatpush1.msra.mxu0 %v701
  %1616 = vmatprep.subr.mxu0 0.0
  %1617 = vmatpush1.msra.mxu0 %v700
  %1618 = vmatprep.subr.mxu0 0.0
  %1619 = vmatpush1.msra.mxu0 %v699
  %1620 = vmatprep.subr.mxu0 0.0
  %1621 = vmatpush1.msra.mxu0 %v698
  %1622 = vmatprep.subr.mxu0 0.0
  %1623 = vmatpush1.msra.mxu0 %v697
  %1624 = vmatprep.subr.mxu0 0.0
  %1625 = vmatpush1.msra.mxu0 %v696
  %1626 = vmatprep.subr.mxu0 0.0
  %1627 = vmatpush1.msra.mxu0 %v695
  %1628 = vmatprep.subr.mxu0 0.0
  %1629 = vmatpush1.msra.mxu0 %v694
  %1630 = vmatprep.subr.mxu0 0.0
  %1631 = vmatpush1.msra.mxu0 %v693
  %1632 = vmatprep.subr.mxu0 0.0
  %1633 = vmatpush1.msra.mxu0 %v692
  %1634 = vmatprep.subr.mxu0 0.0
  %1635 = vmatpush1.msra.mxu0 %v691
  %1636 = vmatprep.subr.mxu0 0.0
  %1637 = vmatpush1.msra.mxu0 %v690
  %1638 = vmatprep.subr.mxu0 0.0
  %1639 = vmatpush1.msra.mxu0 %v689
  %1640 = vmatprep.subr.mxu0 0.0
  %1641 = vmatpush1.msra.mxu0 %v688
  %1642 = vmatprep.subr.mxu0 0.0
  %1643 = vmatpush2.msra.mxu0 0.0
  %1644 = vmatprep.subr.mxu0 0.0
  %1645 = vmatpush2.msra.mxu0 0.0
  %1646 = vmatprep.subr.mxu0 0.0
  %1647 = vmatpush2.msra.mxu0 0.0
  %1648 = vmatprep.subr.mxu0 0.0
  %1649 = vmatpush2.msra.mxu0 0.0
  %1650 = vmatprep.subr.mxu0 0.0
  %1651 = vmatpush2.msra.mxu0 0.0
  %1652 = vmatprep.subr.mxu0 0.0
  %1653 = vmatpush2.msra.mxu0 0.0
  %1654 = vmatprep.subr.mxu0 0.0
  %1655 = vmatpush2.msra.mxu0 0.0
  %1656 = vmatprep.subr.mxu0 0.0
  %1657 = vmatpush2.msra.mxu0 0.0
  %1658 = vmatprep.subr.mxu0 0.0
  %1659 = vmatpush2.msra.mxu0 0.0
  %1660 = vmatprep.subr.mxu0 0.0
  %1661 = vmatpush2.msra.mxu0 0.0
  %1662 = vmatprep.subr.mxu0 0.0
  %1663 = vmatpush2.msra.mxu0 0.0
  %1664 = vmatprep.subr.mxu0 0.0
  %1665 = vmatpush2.msra.mxu0 0.0
  %1666 = vmatprep.subr.mxu0 0.0
  %1667 = vmatpush2.msra.mxu0 0.0
  %1668 = vmatprep.subr.mxu0 0.0
  %1669 = vmatpush2.msra.mxu0 0.0
  %1670 = vmatprep.subr.mxu0 0.0
  %1671 = vmatpush2.msra.mxu0 0.0
  %1672 = vmatprep.subr.mxu0 0.0
  %1673 = vmatpush2.msra.mxu0 0.0
  %1674 = vmatprep.mubr.f32.mxu0 0.0
  %1675 = vmatmul.mubr.f32.gmra.mxu0 %v1583
  %v1676 = vpop.f32.mrf.mxu0
  %v1677 = vadd.f32 0.0, %v1676
  %v1678 = vpop.f32.mrf.mxu0
  %1679 = vdwg.mxu0
  %v1680 = vadd.f32 %v1600, %v1677
  %v1681 = vtanh.pop %v1680
  %v1682 = vmul.f32 %v1681, %v1609
  %s1683 = scalar_lea.vmem [#allocation6], 72
  %1684 = vst.msk [vmem:[%s1683] sm:$0xff] %vm69, %v1682
  %1686 = vrot.lane.b32.xlu0 %v1682, 64
  %v1687 = vpop.permute.xlu0 %1686
  %s1689 = scalar_lea.vmem [#allocation7], 48
  %1690 = vst.msk [vmem:[%s1689] sm:$0xff] %vm69, %v1687
  %s1691 = scalar_lea.vmem [#allocation4], 80
  %v1692 = vld [vmem:[%s1691] sm:$0xff]
  %s1693 = scalar_lea.vmem [#allocation5], 40
  %v1694 = vld [vmem:[%s1693] sm:$0xff]
  %1696 = vrot.lane.b32.xlu0 %v1694, 64
  %v1697 = vpop.permute.xlu0 %1696
  %v1699 = vsel %vm69, %v1692, %v1697
  %s1700 = scalar_lea.vmem [#allocation2], 80
  %v1701 = vld [vmem:[%s1700] sm:$0xff]
  %s1702 = scalar_lea.vmem [#allocation3], 40
  %v1703 = vld [vmem:[%s1702] sm:$0xff]
  %1705 = vrot.lane.b32.xlu0 %v1703, 64
  %v1706 = vpop.permute.xlu0 %1705
  %v1708 = vsel %vm69, %v1701, %v1706
  %1709 = vmatprep.subr.mxu0 0.0
  %1710 = vmatpush1.msra.mxu0 %v703
  %1711 = vmatprep.subr.mxu0 0.0
  %1712 = vmatpush1.msra.mxu0 %v702
  %1713 = vmatprep.subr.mxu0 0.0
  %1714 = vmatpush1.msra.mxu0 %v701
  %1715 = vmatprep.subr.mxu0 0.0
  %1716 = vmatpush1.msra.mxu0 %v700
  %1717 = vmatprep.subr.mxu0 0.0
  %1718 = vmatpush1.msra.mxu0 %v699
  %1719 = vmatprep.subr.mxu0 0.0
  %1720 = vmatpush1.msra.mxu0 %v698
  %1721 = vmatprep.subr.mxu0 0.0
  %1722 = vmatpush1.msra.mxu0 %v697
  %1723 = vmatprep.subr.mxu0 0.0
  %1724 = vmatpush1.msra.mxu0 %v696
  %1725 = vmatprep.subr.mxu0 0.0
  %1726 = vmatpush1.msra.mxu0 %v695
  %1727 = vmatprep.subr.mxu0 0.0
  %1728 = vmatpush1.msra.mxu0 %v694
  %1729 = vmatprep.subr.mxu0 0.0
  %1730 = vmatpush1.msra.mxu0 %v693
  %1731 = vmatprep.subr.mxu0 0.0
  %1732 = vmatpush1.msra.mxu0 %v692
  %1733 = vmatprep.subr.mxu0 0.0
  %1734 = vmatpush1.msra.mxu0 %v691
  %1735 = vmatprep.subr.mxu0 0.0
  %1736 = vmatpush1.msra.mxu0 %v690
  %1737 = vmatprep.subr.mxu0 0.0
  %1738 = vmatpush1.msra.mxu0 %v689
  %1739 = vmatprep.subr.mxu0 0.0
  %1740 = vmatpush1.msra.mxu0 %v688
  %1741 = vmatprep.subr.mxu0 0.0
  %1742 = vmatpush2.msra.mxu0 0.0
  %1743 = vmatprep.subr.mxu0 0.0
  %1744 = vmatpush2.msra.mxu0 0.0
  %1745 = vmatprep.subr.mxu0 0.0
  %1746 = vmatpush2.msra.mxu0 0.0
  %1747 = vmatprep.subr.mxu0 0.0
  %1748 = vmatpush2.msra.mxu0 0.0
  %1749 = vmatprep.subr.mxu0 0.0
  %1750 = vmatpush2.msra.mxu0 0.0
  %1751 = vmatprep.subr.mxu0 0.0
  %1752 = vmatpush2.msra.mxu0 0.0
  %1753 = vmatprep.subr.mxu0 0.0
  %1754 = vmatpush2.msra.mxu0 0.0
  %1755 = vmatprep.subr.mxu0 0.0
  %1756 = vmatpush2.msra.mxu0 0.0
  %1757 = vmatprep.subr.mxu0 0.0
  %1758 = vmatpush2.msra.mxu0 0.0
  %1759 = vmatprep.subr.mxu0 0.0
  %1760 = vmatpush2.msra.mxu0 0.0
  %1761 = vmatprep.subr.mxu0 0.0
  %1762 = vmatpush2.msra.mxu0 0.0
  %1763 = vmatprep.subr.mxu0 0.0
  %1764 = vmatpush2.msra.mxu0 0.0
  %1765 = vmatprep.subr.mxu0 0.0
  %1766 = vmatpush2.msra.mxu0 0.0
  %1767 = vmatprep.subr.mxu0 0.0
  %1768 = vmatpush2.msra.mxu0 0.0
  %1769 = vmatprep.subr.mxu0 0.0
  %1770 = vmatpush2.msra.mxu0 0.0
  %1771 = vmatprep.subr.mxu0 0.0
  %1772 = vmatpush2.msra.mxu0 0.0
  %1773 = vmatprep.mubr.f32.mxu0 0.0
  %1774 = vmatmul.mubr.f32.gmra.mxu0 %v1682
  %v1775 = vpop.f32.mrf.mxu0
  %v1776 = vadd.f32 0.0, %v1775
  %v1777 = vpop.f32.mrf.mxu0
  %1778 = vdwg.mxu0
  %v1779 = vadd.f32 %v1699, %v1776
  %v1780 = vtanh.pop %v1779
  %v1781 = vmul.f32 %v1780, %v1708
  %s1782 = scalar_lea.vmem [#allocation6], 80
  %1783 = vst.msk [vmem:[%s1782] sm:$0xff] %vm69, %v1781
  %1785 = vrot.lane.b32.xlu0 %v1781, 64
  %v1786 = vpop.permute.xlu0 %1785
  %s1788 = scalar_lea.vmem [#allocation7], 40
  %1789 = vst.msk [vmem:[%s1788] sm:$0xff] %vm69, %v1786
  %s1790 = scalar_lea.vmem [#allocation4], 88
  %v1791 = vld [vmem:[%s1790] sm:$0xff]
  %s1792 = scalar_lea.vmem [#allocation5], 32
  %v1793 = vld [vmem:[%s1792] sm:$0xff]
  %1795 = vrot.lane.b32.xlu0 %v1793, 64
  %v1796 = vpop.permute.xlu0 %1795
  %v1798 = vsel %vm69, %v1791, %v1796
  %s1799 = scalar_lea.vmem [#allocation2], 88
  %v1800 = vld [vmem:[%s1799] sm:$0xff]
  %s1801 = scalar_lea.vmem [#allocation3], 32
  %v1802 = vld [vmem:[%s1801] sm:$0xff]
  %1804 = vrot.lane.b32.xlu0 %v1802, 64
  %v1805 = vpop.permute.xlu0 %1804
  %v1807 = vsel %vm69, %v1800, %v1805
  %1808 = vmatprep.subr.mxu0 0.0
  %1809 = vmatpush1.msra.mxu0 %v703
  %1810 = vmatprep.subr.mxu0 0.0
  %1811 = vmatpush1.msra.mxu0 %v702
  %1812 = vmatprep.subr.mxu0 0.0
  %1813 = vmatpush1.msra.mxu0 %v701
  %1814 = vmatprep.subr.mxu0 0.0
  %1815 = vmatpush1.msra.mxu0 %v700
  %1816 = vmatprep.subr.mxu0 0.0
  %1817 = vmatpush1.msra.mxu0 %v699
  %1818 = vmatprep.subr.mxu0 0.0
  %1819 = vmatpush1.msra.mxu0 %v698
  %1820 = vmatprep.subr.mxu0 0.0
  %1821 = vmatpush1.msra.mxu0 %v697
  %1822 = vmatprep.subr.mxu0 0.0
  %1823 = vmatpush1.msra.mxu0 %v696
  %1824 = vmatprep.subr.mxu0 0.0
  %1825 = vmatpush1.msra.mxu0 %v695
  %1826 = vmatprep.subr.mxu0 0.0
  %1827 = vmatpush1.msra.mxu0 %v694
  %1828 = vmatprep.subr.mxu0 0.0
  %1829 = vmatpush1.msra.mxu0 %v693
  %1830 = vmatprep.subr.mxu0 0.0
  %1831 = vmatpush1.msra.mxu0 %v692
  %1832 = vmatprep.subr.mxu0 0.0
  %1833 = vmatpush1.msra.mxu0 %v691
  %1834 = vmatprep.subr.mxu0 0.0
  %1835 = vmatpush1.msra.mxu0 %v690
  %1836 = vmatprep.subr.mxu0 0.0
  %1837 = vmatpush1.msra.mxu0 %v689
  %1838 = vmatprep.subr.mxu0 0.0
  %1839 = vmatpush1.msra.mxu0 %v688
  %1840 = vmatprep.subr.mxu0 0.0
  %1841 = vmatpush2.msra.mxu0 0.0
  %1842 = vmatprep.subr.mxu0 0.0
  %1843 = vmatpush2.msra.mxu0 0.0
  %1844 = vmatprep.subr.mxu0 0.0
  %1845 = vmatpush2.msra.mxu0 0.0
  %1846 = vmatprep.subr.mxu0 0.0
  %1847 = vmatpush2.msra.mxu0 0.0
  %1848 = vmatprep.subr.mxu0 0.0
  %1849 = vmatpush2.msra.mxu0 0.0
  %1850 = vmatprep.subr.mxu0 0.0
  %1851 = vmatpush2.msra.mxu0 0.0
  %1852 = vmatprep.subr.mxu0 0.0
  %1853 = vmatpush2.msra.mxu0 0.0
  %1854 = vmatprep.subr.mxu0 0.0
  %1855 = vmatpush2.msra.mxu0 0.0
  %1856 = vmatprep.subr.mxu0 0.0
  %1857 = vmatpush2.msra.mxu0 0.0
  %1858 = vmatprep.subr.mxu0 0.0
  %1859 = vmatpush2.msra.mxu0 0.0
  %1860 = vmatprep.subr.mxu0 0.0
  %1861 = vmatpush2.msra.mxu0 0.0
  %1862 = vmatprep.subr.mxu0 0.0
  %1863 = vmatpush2.msra.mxu0 0.0
  %1864 = vmatprep.subr.mxu0 0.0
  %1865 = vmatpush2.msra.mxu0 0.0
  %1866 = vmatprep.subr.mxu0 0.0
  %1867 = vmatpush2.msra.mxu0 0.0
  %1868 = vmatprep.subr.mxu0 0.0
  %1869 = vmatpush2.msra.mxu0 0.0
  %1870 = vmatprep.subr.mxu0 0.0
  %1871 = vmatpush2.msra.mxu0 0.0
  %1872 = vmatprep.mubr.f32.mxu0 0.0
  %1873 = vmatmul.mubr.f32.gmra.mxu0 %v1781
  %v1874 = vpop.f32.mrf.mxu0
  %v1875 = vadd.f32 0.0, %v1874
  %v1876 = vpop.f32.mrf.mxu0
  %1877 = vdwg.mxu0
  %v1878 = vadd.f32 %v1798, %v1875
  %v1879 = vtanh.pop %v1878
  %v1880 = vmul.f32 %v1879, %v1807
  %s1881 = scalar_lea.vmem [#allocation6], 88
  %1882 = vst.msk [vmem:[%s1881] sm:$0xff] %vm69, %v1880
  %1884 = vrot.lane.b32.xlu0 %v1880, 64
  %v1885 = vpop.permute.xlu0 %1884
  %s1887 = scalar_lea.vmem [#allocation7], 32
  %1888 = vst.msk [vmem:[%s1887] sm:$0xff] %vm69, %v1885
  %s1889 = scalar_lea.vmem [#allocation4], 96
  %v1890 = vld [vmem:[%s1889] sm:$0xff]
  %s1891 = scalar_lea.vmem [#allocation5], 24
  %v1892 = vld [vmem:[%s1891] sm:$0xff]
  %1894 = vrot.lane.b32.xlu0 %v1892, 64
  %v1895 = vpop.permute.xlu0 %1894
  %v1897 = vsel %vm69, %v1890, %v1895
  %s1898 = scalar_lea.vmem [#allocation2], 96
  %v1899 = vld [vmem:[%s1898] sm:$0xff]
  %s1900 = scalar_lea.vmem [#allocation3], 24
  %v1901 = vld [vmem:[%s1900] sm:$0xff]
  %1903 = vrot.lane.b32.xlu0 %v1901, 64
  %v1904 = vpop.permute.xlu0 %1903
  %v1906 = vsel %vm69, %v1899, %v1904
  %1907 = vmatprep.subr.mxu0 0.0
  %1908 = vmatpush1.msra.mxu0 %v703
  %1909 = vmatprep.subr.mxu0 0.0
  %1910 = vmatpush1.msra.mxu0 %v702
  %1911 = vmatprep.subr.mxu0 0.0
  %1912 = vmatpush1.msra.mxu0 %v701
  %1913 = vmatprep.subr.mxu0 0.0
  %1914 = vmatpush1.msra.mxu0 %v700
  %1915 = vmatprep.subr.mxu0 0.0
  %1916 = vmatpush1.msra.mxu0 %v699
  %1917 = vmatprep.subr.mxu0 0.0
  %1918 = vmatpush1.msra.mxu0 %v698
  %1919 = vmatprep.subr.mxu0 0.0
  %1920 = vmatpush1.msra.mxu0 %v697
  %1921 = vmatprep.subr.mxu0 0.0
  %1922 = vmatpush1.msra.mxu0 %v696
  %1923 = vmatprep.subr.mxu0 0.0
  %1924 = vmatpush1.msra.mxu0 %v695
  %1925 = vmatprep.subr.mxu0 0.0
  %1926 = vmatpush1.msra.mxu0 %v694
  %1927 = vmatprep.subr.mxu0 0.0
  %1928 = vmatpush1.msra.mxu0 %v693
  %1929 = vmatprep.subr.mxu0 0.0
  %1930 = vmatpush1.msra.mxu0 %v692
  %1931 = vmatprep.subr.mxu0 0.0
  %1932 = vmatpush1.msra.mxu0 %v691
  %1933 = vmatprep.subr.mxu0 0.0
  %1934 = vmatpush1.msra.mxu0 %v690
  %1935 = vmatprep.subr.mxu0 0.0
  %1936 = vmatpush1.msra.mxu0 %v689
  %1937 = vmatprep.subr.mxu0 0.0
  %1938 = vmatpush1.msra.mxu0 %v688
  %1939 = vmatprep.subr.mxu0 0.0
  %1940 = vmatpush2.msra.mxu0 0.0
  %1941 = vmatprep.subr.mxu0 0.0
  %1942 = vmatpush2.msra.mxu0 0.0
  %1943 = vmatprep.subr.mxu0 0.0
  %1944 = vmatpush2.msra.mxu0 0.0
  %1945 = vmatprep.subr.mxu0 0.0
  %1946 = vmatpush2.msra.mxu0 0.0
  %1947 = vmatprep.subr.mxu0 0.0
  %1948 = vmatpush2.msra.mxu0 0.0
  %1949 = vmatprep.subr.mxu0 0.0
  %1950 = vmatpush2.msra.mxu0 0.0
  %1951 = vmatprep.subr.mxu0 0.0
  %1952 = vmatpush2.msra.mxu0 0.0
  %1953 = vmatprep.subr.mxu0 0.0
  %1954 = vmatpush2.msra.mxu0 0.0
  %1955 = vmatprep.subr.mxu0 0.0
  %1956 = vmatpush2.msra.mxu0 0.0
  %1957 = vmatprep.subr.mxu0 0.0
  %1958 = vmatpush2.msra.mxu0 0.0
  %1959 = vmatprep.subr.mxu0 0.0
  %1960 = vmatpush2.msra.mxu0 0.0
  %1961 = vmatprep.subr.mxu0 0.0
  %1962 = vmatpush2.msra.mxu0 0.0
  %1963 = vmatprep.subr.mxu0 0.0
  %1964 = vmatpush2.msra.mxu0 0.0
  %1965 = vmatprep.subr.mxu0 0.0
  %1966 = vmatpush2.msra.mxu0 0.0
  %1967 = vmatprep.subr.mxu0 0.0
  %1968 = vmatpush2.msra.mxu0 0.0
  %1969 = vmatprep.subr.mxu0 0.0
  %1970 = vmatpush2.msra.mxu0 0.0
  %1971 = vmatprep.mubr.f32.mxu0 0.0
  %1972 = vmatmul.mubr.f32.gmra.mxu0 %v1880
  %v1973 = vpop.f32.mrf.mxu0
  %v1974 = vadd.f32 0.0, %v1973
  %v1975 = vpop.f32.mrf.mxu0
  %1976 = vdwg.mxu0
  %v1977 = vadd.f32 %v1897, %v1974
  %v1978 = vtanh.pop %v1977
  %v1979 = vmul.f32 %v1978, %v1906
  %s1980 = scalar_lea.vmem [#allocation6], 96
  %1981 = vst.msk [vmem:[%s1980] sm:$0xff] %vm69, %v1979
  %1983 = vrot.lane.b32.xlu0 %v1979, 64
  %v1984 = vpop.permute.xlu0 %1983
  %s1986 = scalar_lea.vmem [#allocation7], 24
  %1987 = vst.msk [vmem:[%s1986] sm:$0xff] %vm69, %v1984
  %s1988 = scalar_lea.vmem [#allocation4], 104
  %v1989 = vld [vmem:[%s1988] sm:$0xff]
  %s1990 = scalar_lea.vmem [#allocation5], 16
  %v1991 = vld [vmem:[%s1990] sm:$0xff]
  %1993 = vrot.lane.b32.xlu0 %v1991, 64
  %v1994 = vpop.permute.xlu0 %1993
  %v1996 = vsel %vm69, %v1989, %v1994
  %s1997 = scalar_lea.vmem [#allocation2], 104
  %v1998 = vld [vmem:[%s1997] sm:$0xff]
  %s1999 = scalar_lea.vmem [#allocation3], 16
  %v2000 = vld [vmem:[%s1999] sm:$0xff]
  %2002 = vrot.lane.b32.xlu0 %v2000, 64
  %v2003 = vpop.permute.xlu0 %2002
  %v2005 = vsel %vm69, %v1998, %v2003
  %2006 = vmatprep.subr.mxu0 0.0
  %2007 = vmatpush1.msra.mxu0 %v703
  %2008 = vmatprep.subr.mxu0 0.0
  %2009 = vmatpush1.msra.mxu0 %v702
  %2010 = vmatprep.subr.mxu0 0.0
  %2011 = vmatpush1.msra.mxu0 %v701
  %2012 = vmatprep.subr.mxu0 0.0
  %2013 = vmatpush1.msra.mxu0 %v700
  %2014 = vmatprep.subr.mxu0 0.0
  %2015 = vmatpush1.msra.mxu0 %v699
  %2016 = vmatprep.subr.mxu0 0.0
  %2017 = vmatpush1.msra.mxu0 %v698
  %2018 = vmatprep.subr.mxu0 0.0
  %2019 = vmatpush1.msra.mxu0 %v697
  %2020 = vmatprep.subr.mxu0 0.0
  %2021 = vmatpush1.msra.mxu0 %v696
  %2022 = vmatprep.subr.mxu0 0.0
  %2023 = vmatpush1.msra.mxu0 %v695
  %2024 = vmatprep.subr.mxu0 0.0
  %2025 = vmatpush1.msra.mxu0 %v694
  %2026 = vmatprep.subr.mxu0 0.0
  %2027 = vmatpush1.msra.mxu0 %v693
  %2028 = vmatprep.subr.mxu0 0.0
  %2029 = vmatpush1.msra.mxu0 %v692
  %2030 = vmatprep.subr.mxu0 0.0
  %2031 = vmatpush1.msra.mxu0 %v691
  %2032 = vmatprep.subr.mxu0 0.0
  %2033 = vmatpush1.msra.mxu0 %v690
  %2034 = vmatprep.subr.mxu0 0.0
  %2035 = vmatpush1.msra.mxu0 %v689
  %2036 = vmatprep.subr.mxu0 0.0
  %2037 = vmatpush1.msra.mxu0 %v688
  %2038 = vmatprep.subr.mxu0 0.0
  %2039 = vmatpush2.msra.mxu0 0.0
  %2040 = vmatprep.subr.mxu0 0.0
  %2041 = vmatpush2.msra.mxu0 0.0
  %2042 = vmatprep.subr.mxu0 0.0
  %2043 = vmatpush2.msra.mxu0 0.0
  %2044 = vmatprep.subr.mxu0 0.0
  %2045 = vmatpush2.msra.mxu0 0.0
  %2046 = vmatprep.subr.mxu0 0.0
  %2047 = vmatpush2.msra.mxu0 0.0
  %2048 = vmatprep.subr.mxu0 0.0
  %2049 = vmatpush2.msra.mxu0 0.0
  %2050 = vmatprep.subr.mxu0 0.0
  %2051 = vmatpush2.msra.mxu0 0.0
  %2052 = vmatprep.subr.mxu0 0.0
  %2053 = vmatpush2.msra.mxu0 0.0
  %2054 = vmatprep.subr.mxu0 0.0
  %2055 = vmatpush2.msra.mxu0 0.0
  %2056 = vmatprep.subr.mxu0 0.0
  %2057 = vmatpush2.msra.mxu0 0.0
  %2058 = vmatprep.subr.mxu0 0.0
  %2059 = vmatpush2.msra.mxu0 0.0
  %2060 = vmatprep.subr.mxu0 0.0
  %2061 = vmatpush2.msra.mxu0 0.0
  %2062 = vmatprep.subr.mxu0 0.0
  %2063 = vmatpush2.msra.mxu0 0.0
  %2064 = vmatprep.subr.mxu0 0.0
  %2065 = vmatpush2.msra.mxu0 0.0
  %2066 = vmatprep.subr.mxu0 0.0
  %2067 = vmatpush2.msra.mxu0 0.0
  %2068 = vmatprep.subr.mxu0 0.0
  %2069 = vmatpush2.msra.mxu0 0.0
  %2070 = vmatprep.mubr.f32.mxu0 0.0
  %2071 = vmatmul.mubr.f32.gmra.mxu0 %v1979
  %v2072 = vpop.f32.mrf.mxu0
  %v2073 = vadd.f32 0.0, %v2072
  %v2074 = vpop.f32.mrf.mxu0
  %2075 = vdwg.mxu0
  %v2076 = vadd.f32 %v1996, %v2073
  %v2077 = vtanh.pop %v2076
  %v2078 = vmul.f32 %v2077, %v2005
  %s2079 = scalar_lea.vmem [#allocation6], 104
  %2080 = vst.msk [vmem:[%s2079] sm:$0xff] %vm69, %v2078
  %2082 = vrot.lane.b32.xlu0 %v2078, 64
  %v2083 = vpop.permute.xlu0 %2082
  %s2085 = scalar_lea.vmem [#allocation7], 16
  %2086 = vst.msk [vmem:[%s2085] sm:$0xff] %vm69, %v2083
  %s2087 = scalar_lea.vmem [#allocation4], 112
  %v2088 = vld [vmem:[%s2087] sm:$0xff]
  %s2089 = scalar_lea.vmem [#allocation5], 8
  %v2090 = vld [vmem:[%s2089] sm:$0xff]
  %2092 = vrot.lane.b32.xlu0 %v2090, 64
  %v2093 = vpop.permute.xlu0 %2092
  %v2095 = vsel %vm69, %v2088, %v2093
  %s2096 = scalar_lea.vmem [#allocation2], 112
  %v2097 = vld [vmem:[%s2096] sm:$0xff]
  %s2098 = scalar_lea.vmem [#allocation3], 8
  %v2099 = vld [vmem:[%s2098] sm:$0xff]
  %2101 = vrot.lane.b32.xlu0 %v2099, 64
  %v2102 = vpop.permute.xlu0 %2101
  %v2104 = vsel %vm69, %v2097, %v2102
  %2105 = vmatprep.subr.mxu0 0.0
  %2106 = vmatpush1.msra.mxu0 %v703
  %2107 = vmatprep.subr.mxu0 0.0
  %2108 = vmatpush1.msra.mxu0 %v702
  %2109 = vmatprep.subr.mxu0 0.0
  %2110 = vmatpush1.msra.mxu0 %v701
  %2111 = vmatprep.subr.mxu0 0.0
  %2112 = vmatpush1.msra.mxu0 %v700
  %2113 = vmatprep.subr.mxu0 0.0
  %2114 = vmatpush1.msra.mxu0 %v699
  %2115 = vmatprep.subr.mxu0 0.0
  %2116 = vmatpush1.msra.mxu0 %v698
  %2117 = vmatprep.subr.mxu0 0.0
  %2118 = vmatpush1.msra.mxu0 %v697
  %2119 = vmatprep.subr.mxu0 0.0
  %2120 = vmatpush1.msra.mxu0 %v696
  %2121 = vmatprep.subr.mxu0 0.0
  %2122 = vmatpush1.msra.mxu0 %v695
  %2123 = vmatprep.subr.mxu0 0.0
  %2124 = vmatpush1.msra.mxu0 %v694
  %2125 = vmatprep.subr.mxu0 0.0
  %2126 = vmatpush1.msra.mxu0 %v693
  %2127 = vmatprep.subr.mxu0 0.0
  %2128 = vmatpush1.msra.mxu0 %v692
  %2129 = vmatprep.subr.mxu0 0.0
  %2130 = vmatpush1.msra.mxu0 %v691
  %2131 = vmatprep.subr.mxu0 0.0
  %2132 = vmatpush1.msra.mxu0 %v690
  %2133 = vmatprep.subr.mxu0 0.0
  %2134 = vmatpush1.msra.mxu0 %v689
  %2135 = vmatprep.subr.mxu0 0.0
  %2136 = vmatpush1.msra.mxu0 %v688
  %2137 = vmatprep.subr.mxu0 0.0
  %2138 = vmatpush2.msra.mxu0 0.0
  %2139 = vmatprep.subr.mxu0 0.0
  %2140 = vmatpush2.msra.mxu0 0.0
  %2141 = vmatprep.subr.mxu0 0.0
  %2142 = vmatpush2.msra.mxu0 0.0
  %2143 = vmatprep.subr.mxu0 0.0
  %2144 = vmatpush2.msra.mxu0 0.0
  %2145 = vmatprep.subr.mxu0 0.0
  %2146 = vmatpush2.msra.mxu0 0.0
  %2147 = vmatprep.subr.mxu0 0.0
  %2148 = vmatpush2.msra.mxu0 0.0
  %2149 = vmatprep.subr.mxu0 0.0
  %2150 = vmatpush2.msra.mxu0 0.0
  %2151 = vmatprep.subr.mxu0 0.0
  %2152 = vmatpush2.msra.mxu0 0.0
  %2153 = vmatprep.subr.mxu0 0.0
  %2154 = vmatpush2.msra.mxu0 0.0
  %2155 = vmatprep.subr.mxu0 0.0
  %2156 = vmatpush2.msra.mxu0 0.0
  %2157 = vmatprep.subr.mxu0 0.0
  %2158 = vmatpush2.msra.mxu0 0.0
  %2159 = vmatprep.subr.mxu0 0.0
  %2160 = vmatpush2.msra.mxu0 0.0
  %2161 = vmatprep.subr.mxu0 0.0
  %2162 = vmatpush2.msra.mxu0 0.0
  %2163 = vmatprep.subr.mxu0 0.0
  %2164 = vmatpush2.msra.mxu0 0.0
  %2165 = vmatprep.subr.mxu0 0.0
  %2166 = vmatpush2.msra.mxu0 0.0
  %2167 = vmatprep.subr.mxu0 0.0
  %2168 = vmatpush2.msra.mxu0 0.0
  %2169 = vmatprep.mubr.f32.mxu0 0.0
  %2170 = vmatmul.mubr.f32.gmra.mxu0 %v2078
  %v2171 = vpop.f32.mrf.mxu0
  %v2172 = vadd.f32 0.0, %v2171
  %v2173 = vpop.f32.mrf.mxu0
  %2174 = vdwg.mxu0
  %v2175 = vadd.f32 %v2095, %v2172
  %v2176 = vtanh.pop %v2175
  %v2177 = vmul.f32 %v2176, %v2104
  %s2178 = scalar_lea.vmem [#allocation6], 112
  %2179 = vst.msk [vmem:[%s2178] sm:$0xff] %vm69, %v2177
  %2181 = vrot.lane.b32.xlu0 %v2177, 64
  %v2182 = vpop.permute.xlu0 %2181
  %s2184 = scalar_lea.vmem [#allocation7], 8
  %2185 = vst.msk [vmem:[%s2184] sm:$0xff] %vm69, %v2182
  %s2186 = scalar_lea.vmem [#allocation4], 120
  %v2187 = vld [vmem:[%s2186] sm:$0xff]
  %v2188 = vld [vmem:[#allocation5] sm:$0xff]
  %2190 = vrot.lane.b32.xlu0 %v2188, 64
  %v2191 = vpop.permute.xlu0 %2190
  %v2193 = vsel %vm69, %v2187, %v2191
  %s2194 = scalar_lea.vmem [#allocation2], 120
  %v2195 = vld [vmem:[%s2194] sm:$0xff]
  %v2196 = vld [vmem:[#allocation3] sm:$0xff]
  %2198 = vrot.lane.b32.xlu0 %v2196, 64
  %v2199 = vpop.permute.xlu0 %2198
  %v2201 = vsel %vm69, %v2195, %v2199
  %2202 = vmatprep.subr.mxu0 0.0
  %2203 = vmatpush1.msra.mxu0 %v703
  %2204 = vmatprep.subr.mxu0 0.0
  %2205 = vmatpush1.msra.mxu0 %v702
  %2206 = vmatprep.subr.mxu0 0.0
  %2207 = vmatpush1.msra.mxu0 %v701
  %2208 = vmatprep.subr.mxu0 0.0
  %2209 = vmatpush1.msra.mxu0 %v700
  %2210 = vmatprep.subr.mxu0 0.0
  %2211 = vmatpush1.msra.mxu0 %v699
  %2212 = vmatprep.subr.mxu0 0.0
  %2213 = vmatpush1.msra.mxu0 %v698
  %2214 = vmatprep.subr.mxu0 0.0
  %2215 = vmatpush1.msra.mxu0 %v697
  %2216 = vmatprep.subr.mxu0 0.0
  %2217 = vmatpush1.msra.mxu0 %v696
  %2218 = vmatprep.subr.mxu0 0.0
  %2219 = vmatpush1.msra.mxu0 %v695
  %2220 = vmatprep.subr.mxu0 0.0
  %2221 = vmatpush1.msra.mxu0 %v694
  %2222 = vmatprep.subr.mxu0 0.0
  %2223 = vmatpush1.msra.mxu0 %v693
  %2224 = vmatprep.subr.mxu0 0.0
  %2225 = vmatpush1.msra.mxu0 %v692
  %2226 = vmatprep.subr.mxu0 0.0
  %2227 = vmatpush1.msra.mxu0 %v691
  %2228 = vmatprep.subr.mxu0 0.0
  %2229 = vmatpush1.msra.mxu0 %v690
  %2230 = vmatprep.subr.mxu0 0.0
  %2231 = vmatpush1.msra.mxu0 %v689
  %2232 = vmatprep.subr.mxu0 0.0
  %2233 = vmatpush1.msra.mxu0 %v688
  %2234 = vmatprep.subr.mxu0 0.0
  %2235 = vmatpush2.msra.mxu0 0.0
  %2236 = vmatprep.subr.mxu0 0.0
  %2237 = vmatpush2.msra.mxu0 0.0
  %2238 = vmatprep.subr.mxu0 0.0
  %2239 = vmatpush2.msra.mxu0 0.0
  %2240 = vmatprep.subr.mxu0 0.0
  %2241 = vmatpush2.msra.mxu0 0.0
  %2242 = vmatprep.subr.mxu0 0.0
  %2243 = vmatpush2.msra.mxu0 0.0
  %2244 = vmatprep.subr.mxu0 0.0
  %2245 = vmatpush2.msra.mxu0 0.0
  %2246 = vmatprep.subr.mxu0 0.0
  %2247 = vmatpush2.msra.mxu0 0.0
  %2248 = vmatprep.subr.mxu0 0.0
  %2249 = vmatpush2.msra.mxu0 0.0
  %2250 = vmatprep.subr.mxu0 0.0
  %2251 = vmatpush2.msra.mxu0 0.0
  %2252 = vmatprep.subr.mxu0 0.0
  %2253 = vmatpush2.msra.mxu0 0.0
  %2254 = vmatprep.subr.mxu0 0.0
  %2255 = vmatpush2.msra.mxu0 0.0
  %2256 = vmatprep.subr.mxu0 0.0
  %2257 = vmatpush2.msra.mxu0 0.0
  %2258 = vmatprep.subr.mxu0 0.0
  %2259 = vmatpush2.msra.mxu0 0.0
  %2260 = vmatprep.subr.mxu0 0.0
  %2261 = vmatpush2.msra.mxu0 0.0
  %2262 = vmatprep.subr.mxu0 0.0
  %2263 = vmatpush2.msra.mxu0 0.0
  %2264 = vmatprep.subr.mxu0 0.0
  %2265 = vmatpush2.msra.mxu0 0.0
  %2266 = vmatprep.mubr.f32.mxu0 0.0
  %2267 = vmatmul.mubr.f32.gmra.mxu0 %v2177
  %v2268 = vpop.f32.mrf.mxu0
  %v2269 = vadd.f32 0.0, %v2268
  %v2270 = vpop.f32.mrf.mxu0
  %2271 = vdwg.mxu0
  %v2272 = vadd.f32 %v2193, %v2269
  %v2273 = vtanh.pop %v2272
  %v2274 = vmul.f32 %v2273, %v2201
  %s2275 = scalar_lea.vmem [#allocation6], 120
  %2276 = vst.msk [vmem:[%s2275] sm:$0xff] %vm69, %v2274
  %2278 = vrot.lane.b32.xlu0 %v2274, 64
  %v2279 = vpop.permute.xlu0 %2278
  %2281 = vst.msk [vmem:[#allocation7] sm:$0xff] %vm69, %v2279
  %v2282 = vld [vmem:[#allocation6] sm:$0xff]
  %v2283 = vld [vmem:[#allocation6 + $0x8] sm:$0xff]
  %v2284 = vld [vmem:[#allocation6 + $0x10] sm:$0xff]
  %v2285 = vld [vmem:[#allocation6 + $0x18] sm:$0xff]
  %v2286 = vld [vmem:[#allocation6 + $0x20] sm:$0xff]
  %v2287 = vld [vmem:[#allocation6 + $0x28] sm:$0xff]
  %v2288 = vld [vmem:[#allocation6 + $0x30] sm:$0xff]
  %v2289 = vld [vmem:[#allocation6 + $0x38] sm:$0xff]
  %v2290 = vld [vmem:[#allocation6 + $0x40] sm:$0xff]
  %v2291 = vld [vmem:[#allocation6 + $0x48] sm:$0xff]
  %v2292 = vld [vmem:[#allocation6 + $0x50] sm:$0xff]
  %v2293 = vld [vmem:[#allocation6 + $0x58] sm:$0xff]
  %v2294 = vld [vmem:[#allocation6 + $0x60] sm:$0xff]
  %v2295 = vld [vmem:[#allocation6 + $0x68] sm:$0xff]
  %v2296 = vld [vmem:[#allocation6 + $0x70] sm:$0xff]
  %v2297 = vld [vmem:[#allocation6 + $0x78] sm:$0xff]
  %v2298 = vld [vmem:[#allocation7] sm:$0xff]
  %v2299 = vld [vmem:[#allocation7 + $0x8] sm:$0xff]
  %v2300 = vld [vmem:[#allocation7 + $0x10] sm:$0xff]
  %v2301 = vld [vmem:[#allocation7 + $0x18] sm:$0xff]
  %v2302 = vld [vmem:[#allocation7 + $0x20] sm:$0xff]
  %v2303 = vld [vmem:[#allocation7 + $0x28] sm:$0xff]
  %v2304 = vld [vmem:[#allocation7 + $0x30] sm:$0xff]
  %v2305 = vld [vmem:[#allocation7 + $0x38] sm:$0xff]
  %v2306 = vld [vmem:[#allocation7 + $0x40] sm:$0xff]
  %v2307 = vld [vmem:[#allocation7 + $0x48] sm:$0xff]
  %v2308 = vld [vmem:[#allocation7 + $0x50] sm:$0xff]
  %v2309 = vld [vmem:[#allocation7 + $0x58] sm:$0xff]
  %v2310 = vld [vmem:[#allocation7 + $0x60] sm:$0xff]
  %v2311 = vld [vmem:[#allocation7 + $0x68] sm:$0xff]
  %v2312 = vld [vmem:[#allocation7 + $0x70] sm:$0xff]
  %v2313 = vld [vmem:[#allocation7 + $0x78] sm:$0xff]
  %2330 = vrot.lane.b32.xlu0 %v2298, 64
  %v2331 = vpop.permute.xlu0 %2330
  %2332 = vrot.lane.b32.xlu0 %v2299, 64
  %v2333 = vpop.permute.xlu0 %2332
  %2334 = vrot.lane.b32.xlu0 %v2300, 64
  %v2335 = vpop.permute.xlu0 %2334
  %2336 = vrot.lane.b32.xlu0 %v2301, 64
  %v2337 = vpop.permute.xlu0 %2336
  %2338 = vrot.lane.b32.xlu0 %v2302, 64
  %v2339 = vpop.permute.xlu0 %2338
  %2340 = vrot.lane.b32.xlu0 %v2303, 64
  %v2341 = vpop.permute.xlu0 %2340
  %2342 = vrot.lane.b32.xlu0 %v2304, 64
  %v2343 = vpop.permute.xlu0 %2342
  %2344 = vrot.lane.b32.xlu0 %v2305, 64
  %v2345 = vpop.permute.xlu0 %2344
  %2346 = vrot.lane.b32.xlu0 %v2306, 64
  %v2347 = vpop.permute.xlu0 %2346
  %2348 = vrot.lane.b32.xlu0 %v2307, 64
  %v2349 = vpop.permute.xlu0 %2348
  %2350 = vrot.lane.b32.xlu0 %v2308, 64
  %v2351 = vpop.permute.xlu0 %2350
  %2352 = vrot.lane.b32.xlu0 %v2309, 64
  %v2353 = vpop.permute.xlu0 %2352
  %2354 = vrot.lane.b32.xlu0 %v2310, 64
  %v2355 = vpop.permute.xlu0 %2354
  %2356 = vrot.lane.b32.xlu0 %v2311, 64
  %v2357 = vpop.permute.xlu0 %2356
  %2358 = vrot.lane.b32.xlu0 %v2312, 64
  %v2359 = vpop.permute.xlu0 %2358
  %2360 = vrot.lane.b32.xlu0 %v2313, 64
  %v2361 = vpop.permute.xlu0 %2360
  %v2378 = vsel %vm69, %v2282, %v2331
  %v2379 = vsel %vm69, %v2283, %v2333
  %v2380 = vsel %vm69, %v2284, %v2335
  %v2381 = vsel %vm69, %v2285, %v2337
  %v2382 = vsel %vm69, %v2286, %v2339
  %v2383 = vsel %vm69, %v2287, %v2341
  %v2384 = vsel %vm69, %v2288, %v2343
  %v2385 = vsel %vm69, %v2289, %v2345
  %v2386 = vsel %vm69, %v2290, %v2347
  %v2387 = vsel %vm69, %v2291, %v2349
  %v2388 = vsel %vm69, %v2292, %v2351
  %v2389 = vsel %vm69, %v2293, %v2353
  %v2390 = vsel %vm69, %v2294, %v2355
  %v2391 = vsel %vm69, %v2295, %v2357
  %v2392 = vsel %vm69, %v2296, %v2359
  %v2393 = vsel %vm69, %v2297, %v2361
  %v2394 = vld [vmem:[%s5] sm:$0xff]
  %v2395 = vld [vmem:[%s5 + $0x8] sm:$0xff]
  %v2396 = vld [vmem:[%s5 + $0x10] sm:$0xff]
  %v2397 = vld [vmem:[%s5 + $0x18] sm:$0xff]
  %v2398 = vld [vmem:[%s5 + $0x20] sm:$0xff]
  %v2399 = vld [vmem:[%s5 + $0x28] sm:$0xff]
  %v2400 = vld [vmem:[%s5 + $0x30] sm:$0xff]
  %v2401 = vld [vmem:[%s5 + $0x38] sm:$0xff]
  %v2402 = vld [vmem:[%s5 + $0x40] sm:$0xff]
  %v2403 = vld [vmem:[%s5 + $0x48] sm:$0xff]
  %v2404 = vld [vmem:[%s5 + $0x50] sm:$0xff]
  %v2405 = vld [vmem:[%s5 + $0x58] sm:$0xff]
  %v2406 = vld [vmem:[%s5 + $0x60] sm:$0xff]
  %v2407 = vld [vmem:[%s5 + $0x68] sm:$0xff]
  %v2408 = vld [vmem:[%s5 + $0x70] sm:$0xff]
  %v2409 = vld [vmem:[%s5 + $0x78] sm:$0xff]
  %2410 = vrot.lane.b32.xlu0 %v38, 64
  %v2411 = vpop.permute.xlu0 %2410
  %2412 = vrot.lane.b32.xlu0 %v39, 64
  %v2413 = vpop.permute.xlu0 %2412
  %2414 = vrot.lane.b32.xlu0 %v40, 64
  %v2415 = vpop.permute.xlu0 %2414
  %2416 = vrot.lane.b32.xlu0 %v41, 64
  %v2417 = vpop.permute.xlu0 %2416
  %2418 = vrot.lane.b32.xlu0 %v42, 64
  %v2419 = vpop.permute.xlu0 %2418
  %2420 = vrot.lane.b32.xlu0 %v43, 64
  %v2421 = vpop.permute.xlu0 %2420
  %2422 = vrot.lane.b32.xlu0 %v44, 64
  %v2423 = vpop.permute.xlu0 %2422
  %2424 = vrot.lane.b32.xlu0 %v45, 64
  %v2425 = vpop.permute.xlu0 %2424
  %2426 = vrot.lane.b32.xlu0 %v46, 64
  %v2427 = vpop.permute.xlu0 %2426
  %2428 = vrot.lane.b32.xlu0 %v47, 64
  %v2429 = vpop.permute.xlu0 %2428
  %2430 = vrot.lane.b32.xlu0 %v48, 64
  %v2431 = vpop.permute.xlu0 %2430
  %2432 = vrot.lane.b32.xlu0 %v49, 64
  %v2433 = vpop.permute.xlu0 %2432
  %2434 = vrot.lane.b32.xlu0 %v50, 64
  %v2435 = vpop.permute.xlu0 %2434
  %2436 = vrot.lane.b32.xlu0 %v51, 64
  %v2437 = vpop.permute.xlu0 %2436
  %2438 = vrot.lane.b32.xlu0 %v52, 64
  %v2439 = vpop.permute.xlu0 %2438
  %2440 = vrot.lane.b32.xlu0 %v53, 64
  %v2441 = vpop.permute.xlu0 %2440
  %v2458 = vsel %vm69, %v38, %v2411
  %v2459 = vsel %vm69, %v39, %v2413
  %v2460 = vsel %vm69, %v40, %v2415
  %v2461 = vsel %vm69, %v41, %v2417
  %v2462 = vsel %vm69, %v42, %v2419
  %v2463 = vsel %vm69, %v43, %v2421
  %v2464 = vsel %vm69, %v44, %v2423
  %v2465 = vsel %vm69, %v45, %v2425
  %v2466 = vsel %vm69, %v46, %v2427
  %v2467 = vsel %vm69, %v47, %v2429
  %v2468 = vsel %vm69, %v48, %v2431
  %v2469 = vsel %vm69, %v49, %v2433
  %v2470 = vsel %vm69, %v50, %v2435
  %v2471 = vsel %vm69, %v51, %v2437
  %v2472 = vsel %vm69, %v52, %v2439
  %v2473 = vsel %vm69, %v53, %v2441
  %v2474 = vld [vmem:[%s6] sm:$0x1]
  %v2476 = vlaneseq
  %v2477 = vshrl.u32 %v2476, 7
  %v2478 = vsub.s32 0, %v2477
  %v2479 = vrot.slane %v2474, %v2478
  %v2481 = vmul.f32 %v2458, %v2479
  %v2482 = vmul.f32 %v2459, %v2479
  %v2483 = vmul.f32 %v2460, %v2479
  %v2484 = vmul.f32 %v2461, %v2479
  %v2485 = vmul.f32 %v2462, %v2479
  %v2486 = vmul.f32 %v2463, %v2479
  %v2487 = vmul.f32 %v2464, %v2479
  %v2488 = vmul.f32 %v2465, %v2479
  %v2489 = vmul.f32 %v2466, %v2479
  %v2490 = vmul.f32 %v2467, %v2479
  %v2491 = vmul.f32 %v2468, %v2479
  %v2492 = vmul.f32 %v2469, %v2479
  %v2493 = vmul.f32 %v2470, %v2479
  %v2494 = vmul.f32 %v2471, %v2479
  %v2495 = vmul.f32 %v2472, %v2479
  %v2496 = vmul.f32 %v2473, %v2479
  %2497 = vmatprep.subr.mxu0 0.0
  %2498 = vmatpush1.msra.mxu0 %v2409
  %2499 = vmatprep.subr.mxu0 0.0
  %2500 = vmatpush1.msra.mxu0 %v2408
  %2501 = vmatprep.subr.mxu0 0.0
  %2502 = vmatpush1.msra.mxu0 %v2407
  %2503 = vmatprep.subr.mxu0 0.0
  %2504 = vmatpush1.msra.mxu0 %v2406
  %2505 = vmatprep.subr.mxu0 0.0
  %2506 = vmatpush1.msra.mxu0 %v2405
  %2507 = vmatprep.subr.mxu0 0.0
  %2508 = vmatpush1.msra.mxu0 %v2404
  %2509 = vmatprep.subr.mxu0 0.0
  %2510 = vmatpush1.msra.mxu0 %v2403
  %2511 = vmatprep.subr.mxu0 0.0
  %2512 = vmatpush1.msra.mxu0 %v2402
  %2513 = vmatprep.subr.mxu0 0.0
  %2514 = vmatpush1.msra.mxu0 %v2401
  %2515 = vmatprep.subr.mxu0 0.0
  %2516 = vmatpush1.msra.mxu0 %v2400
  %2517 = vmatprep.subr.mxu0 0.0
  %2518 = vmatpush1.msra.mxu0 %v2399
  %2519 = vmatprep.subr.mxu0 0.0
  %2520 = vmatpush1.msra.mxu0 %v2398
  %2521 = vmatprep.subr.mxu0 0.0
  %2522 = vmatpush1.msra.mxu0 %v2397
  %2523 = vmatprep.subr.mxu0 0.0
  %2524 = vmatpush1.msra.mxu0 %v2396
  %2525 = vmatprep.subr.mxu0 0.0
  %2526 = vmatpush1.msra.mxu0 %v2395
  %2527 = vmatprep.subr.mxu0 0.0
  %2528 = vmatpush1.msra.mxu0 %v2394
  %2529 = vmatprep.subr.mxu0 0.0
  %2530 = vmatpush2.msra.mxu0 0.0
  %2531 = vmatprep.subr.mxu0 0.0
  %2532 = vmatpush2.msra.mxu0 0.0
  %2533 = vmatprep.subr.mxu0 0.0
  %2534 = vmatpush2.msra.mxu0 0.0
  %2535 = vmatprep.subr.mxu0 0.0
  %2536 = vmatpush2.msra.mxu0 0.0
  %2537 = vmatprep.subr.mxu0 0.0
  %2538 = vmatpush2.msra.mxu0 0.0
  %2539 = vmatprep.subr.mxu0 0.0
  %2540 = vmatpush2.msra.mxu0 0.0
  %2541 = vmatprep.subr.mxu0 0.0
  %2542 = vmatpush2.msra.mxu0 0.0
  %2543 = vmatprep.subr.mxu0 0.0
  %2544 = vmatpush2.msra.mxu0 0.0
  %2545 = vmatprep.subr.mxu0 0.0
  %2546 = vmatpush2.msra.mxu0 0.0
  %2547 = vmatprep.subr.mxu0 0.0
  %2548 = vmatpush2.msra.mxu0 0.0
  %2549 = vmatprep.subr.mxu0 0.0
  %2550 = vmatpush2.msra.mxu0 0.0
  %2551 = vmatprep.subr.mxu0 0.0
  %2552 = vmatpush2.msra.mxu0 0.0
  %2553 = vmatprep.subr.mxu0 0.0
  %2554 = vmatpush2.msra.mxu0 0.0
  %2555 = vmatprep.subr.mxu0 0.0
  %2556 = vmatpush2.msra.mxu0 0.0
  %2557 = vmatprep.subr.mxu0 0.0
  %2558 = vmatpush2.msra.mxu0 0.0
  %2559 = vmatprep.subr.mxu0 0.0
  %2560 = vmatpush2.msra.mxu0 0.0
  %2561 = vmatprep.mubr.f32.mxu0 0.0
  %2562 = vmatmul.mubr.f32.gmra.mxu0 %v2378
  %v2563 = vpop.f32.mrf.mxu0
  %v2564 = vadd.f32 %v2481, %v2563
  %v2565 = vpop.f32.mrf.mxu0
  %2566 = vmatprep.mubr.f32.mxu0 0.0
  %2567 = vmatmul.mubr.f32.gmra.mxu0 %v2379
  %v2568 = vpop.f32.mrf.mxu0
  %v2569 = vadd.f32 %v2482, %v2568
  %v2570 = vpop.f32.mrf.mxu0
  %2571 = vmatprep.mubr.f32.mxu0 0.0
  %2572 = vmatmul.mubr.f32.gmra.mxu0 %v2380
  %v2573 = vpop.f32.mrf.mxu0
  %v2574 = vadd.f32 %v2483, %v2573
  %v2575 = vpop.f32.mrf.mxu0
  %2576 = vmatprep.mubr.f32.mxu0 0.0
  %2577 = vmatmul.mubr.f32.gmra.mxu0 %v2381
  %v2578 = vpop.f32.mrf.mxu0
  %v2579 = vadd.f32 %v2484, %v2578
  %v2580 = vpop.f32.mrf.mxu0
  %2581 = vmatprep.mubr.f32.mxu0 0.0
  %2582 = vmatmul.mubr.f32.gmra.mxu0 %v2382
  %v2583 = vpop.f32.mrf.mxu0
  %v2584 = vadd.f32 %v2485, %v2583
  %v2585 = vpop.f32.mrf.mxu0
  %2586 = vmatprep.mubr.f32.mxu0 0.0
  %2587 = vmatmul.mubr.f32.gmra.mxu0 %v2383
  %v2588 = vpop.f32.mrf.mxu0
  %v2589 = vadd.f32 %v2486, %v2588
  %v2590 = vpop.f32.mrf.mxu0
  %2591 = vmatprep.mubr.f32.mxu0 0.0
  %2592 = vmatmul.mubr.f32.gmra.mxu0 %v2384
  %v2593 = vpop.f32.mrf.mxu0
  %v2594 = vadd.f32 %v2487, %v2593
  %v2595 = vpop.f32.mrf.mxu0
  %2596 = vmatprep.mubr.f32.mxu0 0.0
  %2597 = vmatmul.mubr.f32.gmra.mxu0 %v2385
  %v2598 = vpop.f32.mrf.mxu0
  %v2599 = vadd.f32 %v2488, %v2598
  %v2600 = vpop.f32.mrf.mxu0
  %2601 = vmatprep.mubr.f32.mxu0 0.0
  %2602 = vmatmul.mubr.f32.gmra.mxu0 %v2386
  %v2603 = vpop.f32.mrf.mxu0
  %v2604 = vadd.f32 %v2489, %v2603
  %v2605 = vpop.f32.mrf.mxu0
  %2606 = vmatprep.mubr.f32.mxu0 0.0
  %2607 = vmatmul.mubr.f32.gmra.mxu0 %v2387
  %v2608 = vpop.f32.mrf.mxu0
  %v2609 = vadd.f32 %v2490, %v2608
  %v2610 = vpop.f32.mrf.mxu0
  %2611 = vmatprep.mubr.f32.mxu0 0.0
  %2612 = vmatmul.mubr.f32.gmra.mxu0 %v2388
  %v2613 = vpop.f32.mrf.mxu0
  %v2614 = vadd.f32 %v2491, %v2613
  %v2615 = vpop.f32.mrf.mxu0
  %2616 = vmatprep.mubr.f32.mxu0 0.0
  %2617 = vmatmul.mubr.f32.gmra.mxu0 %v2389
  %v2618 = vpop.f32.mrf.mxu0
  %v2619 = vadd.f32 %v2492, %v2618
  %v2620 = vpop.f32.mrf.mxu0
  %2621 = vmatprep.mubr.f32.mxu0 0.0
  %2622 = vmatmul.mubr.f32.gmra.mxu0 %v2390
  %v2623 = vpop.f32.mrf.mxu0
  %v2624 = vadd.f32 %v2493, %v2623
  %v2625 = vpop.f32.mrf.mxu0
  %2626 = vmatprep.mubr.f32.mxu0 0.0
  %2627 = vmatmul.mubr.f32.gmra.mxu0 %v2391
  %v2628 = vpop.f32.mrf.mxu0
  %v2629 = vadd.f32 %v2494, %v2628
  %v2630 = vpop.f32.mrf.mxu0
  %2631 = vmatprep.mubr.f32.mxu0 0.0
  %2632 = vmatmul.mubr.f32.gmra.mxu0 %v2392
  %v2633 = vpop.f32.mrf.mxu0
  %v2634 = vadd.f32 %v2495, %v2633
  %v2635 = vpop.f32.mrf.mxu0
  %2636 = vmatprep.mubr.f32.mxu0 0.0
  %2637 = vmatmul.mubr.f32.gmra.mxu0 %v2393
  %v2638 = vpop.f32.mrf.mxu0
  %v2639 = vadd.f32 %v2496, %v2638
  %v2640 = vpop.f32.mrf.mxu0
  %2641 = vdwg.mxu0
  %v2642 = vld [vmem:[%s7] sm:$0x1]
  %v2643 = vld [vmem:[%s8] sm:$0x1]
  %v2644 = vsel %vm69, %v2564, 0.0
  %2645 = vadd.xlane.f32.xlu0 %v2644
  %v2646 = vpop.xlane.xlu0 %2645
  %v2647 = vsel %vm69, %v2569, 0.0
  %2648 = vadd.xlane.f32.xlu0 %v2647
  %v2649 = vpop.xlane.xlu0 %2648
  %v2650 = vsel %vm69, %v2574, 0.0
  %2651 = vadd.xlane.f32.xlu0 %v2650
  %v2652 = vpop.xlane.xlu0 %2651
  %v2653 = vsel %vm69, %v2579, 0.0
  %2654 = vadd.xlane.f32.xlu0 %v2653
  %v2655 = vpop.xlane.xlu0 %2654
  %v2656 = vsel %vm69, %v2584, 0.0
  %2657 = vadd.xlane.f32.xlu0 %v2656
  %v2658 = vpop.xlane.xlu0 %2657
  %v2659 = vsel %vm69, %v2589, 0.0
  %2660 = vadd.xlane.f32.xlu0 %v2659
  %v2661 = vpop.xlane.xlu0 %2660
  %v2662 = vsel %vm69, %v2594, 0.0
  %2663 = vadd.xlane.f32.xlu0 %v2662
  %v2664 = vpop.xlane.xlu0 %2663
  %v2665 = vsel %vm69, %v2599, 0.0
  %2666 = vadd.xlane.f32.xlu0 %v2665
  %v2667 = vpop.xlane.xlu0 %2666
  %v2668 = vsel %vm69, %v2604, 0.0
  %2669 = vadd.xlane.f32.xlu0 %v2668
  %v2670 = vpop.xlane.xlu0 %2669
  %v2671 = vsel %vm69, %v2609, 0.0
  %2672 = vadd.xlane.f32.xlu0 %v2671
  %v2673 = vpop.xlane.xlu0 %2672
  %v2674 = vsel %vm69, %v2614, 0.0
  %2675 = vadd.xlane.f32.xlu0 %v2674
  %v2676 = vpop.xlane.xlu0 %2675
  %v2677 = vsel %vm69, %v2619, 0.0
  %2678 = vadd.xlane.f32.xlu0 %v2677
  %v2679 = vpop.xlane.xlu0 %2678
  %v2680 = vsel %vm69, %v2624, 0.0
  %2681 = vadd.xlane.f32.xlu0 %v2680
  %v2682 = vpop.xlane.xlu0 %2681
  %v2683 = vsel %vm69, %v2629, 0.0
  %2684 = vadd.xlane.f32.xlu0 %v2683
  %v2685 = vpop.xlane.xlu0 %2684
  %v2686 = vsel %vm69, %v2634, 0.0
  %2687 = vadd.xlane.f32.xlu0 %v2686
  %v2688 = vpop.xlane.xlu0 %2687
  %v2689 = vsel %vm69, %v2639, 0.0
  %2690 = vadd.xlane.f32.xlu0 %v2689
  %v2691 = vpop.xlane.xlu0 %2690
  %v2692 = vrcp.pop 64.0
  %v2693 = vmul.f32 %v2646, %v2692
  %v2694 = vmul.f32 %v2649, %v2692
  %v2695 = vmul.f32 %v2652, %v2692
  %v2696 = vmul.f32 %v2655, %v2692
  %v2697 = vmul.f32 %v2658, %v2692
  %v2698 = vmul.f32 %v2661, %v2692
  %v2699 = vmul.f32 %v2664, %v2692
  %v2700 = vmul.f32 %v2667, %v2692
  %v2701 = vmul.f32 %v2670, %v2692
  %v2702 = vmul.f32 %v2673, %v2692
  %v2703 = vmul.f32 %v2676, %v2692
  %v2704 = vmul.f32 %v2679, %v2692
  %v2705 = vmul.f32 %v2682, %v2692
  %v2706 = vmul.f32 %v2685, %v2692
  %v2707 = vmul.f32 %v2688, %v2692
  %v2708 = vmul.f32 %v2691, %v2692
  %v2709 = vsub.f32 %v2564, %v2693
  %v2710 = vsub.f32 %v2569, %v2694
  %v2711 = vsub.f32 %v2574, %v2695
  %v2712 = vsub.f32 %v2579, %v2696
  %v2713 = vsub.f32 %v2584, %v2697
  %v2714 = vsub.f32 %v2589, %v2698
  %v2715 = vsub.f32 %v2594, %v2699
  %v2716 = vsub.f32 %v2599, %v2700
  %v2717 = vsub.f32 %v2604, %v2701
  %v2718 = vsub.f32 %v2609, %v2702
  %v2719 = vsub.f32 %v2614, %v2703
  %v2720 = vsub.f32 %v2619, %v2704
  %v2721 = vsub.f32 %v2624, %v2705
  %v2722 = vsub.f32 %v2629, %v2706
  %v2723 = vsub.f32 %v2634, %v2707
  %v2724 = vsub.f32 %v2639, %v2708
  %v2725 = vmul.f32 %v2709, %v2709
  %v2726 = vmul.f32 %v2710, %v2710
  %v2727 = vmul.f32 %v2711, %v2711
  %v2728 = vmul.f32 %v2712, %v2712
  %v2729 = vmul.f32 %v2713, %v2713
  %v2730 = vmul.f32 %v2714, %v2714
  %v2731 = vmul.f32 %v2715, %v2715
  %v2732 = vmul.f32 %v2716, %v2716
  %v2733 = vmul.f32 %v2717, %v2717
  %v2734 = vmul.f32 %v2718, %v2718
  %v2735 = vmul.f32 %v2719, %v2719
  %v2736 = vmul.f32 %v2720, %v2720
  %v2737 = vmul.f32 %v2721, %v2721
  %v2738 = vmul.f32 %v2722, %v2722
  %v2739 = vmul.f32 %v2723, %v2723
  %v2740 = vmul.f32 %v2724, %v2724
  %v2741 = vsel %vm69, %v2725, 0.0
  %2742 = vadd.xlane.f32.xlu0 %v2741
  %v2743 = vpop.xlane.xlu0 %2742
  %v2744 = vsel %vm69, %v2726, 0.0
  %2745 = vadd.xlane.f32.xlu0 %v2744
  %v2746 = vpop.xlane.xlu0 %2745
  %v2747 = vsel %vm69, %v2727, 0.0
  %2748 = vadd.xlane.f32.xlu0 %v2747
  %v2749 = vpop.xlane.xlu0 %2748
  %v2750 = vsel %vm69, %v2728, 0.0
  %2751 = vadd.xlane.f32.xlu0 %v2750
  %v2752 = vpop.xlane.xlu0 %2751
  %v2753 = vsel %vm69, %v2729, 0.0
  %2754 = vadd.xlane.f32.xlu0 %v2753
  %v2755 = vpop.xlane.xlu0 %2754
  %v2756 = vsel %vm69, %v2730, 0.0
  %2757 = vadd.xlane.f32.xlu0 %v2756
  %v2758 = vpop.xlane.xlu0 %2757
  %v2759 = vsel %vm69, %v2731, 0.0
  %2760 = vadd.xlane.f32.xlu0 %v2759
  %v2761 = vpop.xlane.xlu0 %2760
  %v2762 = vsel %vm69, %v2732, 0.0
  %2763 = vadd.xlane.f32.xlu0 %v2762
  %v2764 = vpop.xlane.xlu0 %2763
  %v2765 = vsel %vm69, %v2733, 0.0
  %2766 = vadd.xlane.f32.xlu0 %v2765
  %v2767 = vpop.xlane.xlu0 %2766
  %v2768 = vsel %vm69, %v2734, 0.0
  %2769 = vadd.xlane.f32.xlu0 %v2768
  %v2770 = vpop.xlane.xlu0 %2769
  %v2771 = vsel %vm69, %v2735, 0.0
  %2772 = vadd.xlane.f32.xlu0 %v2771
  %v2773 = vpop.xlane.xlu0 %2772
  %v2774 = vsel %vm69, %v2736, 0.0
  %2775 = vadd.xlane.f32.xlu0 %v2774
  %v2776 = vpop.xlane.xlu0 %2775
  %v2777 = vsel %vm69, %v2737, 0.0
  %2778 = vadd.xlane.f32.xlu0 %v2777
  %v2779 = vpop.xlane.xlu0 %2778
  %v2780 = vsel %vm69, %v2738, 0.0
  %2781 = vadd.xlane.f32.xlu0 %v2780
  %v2782 = vpop.xlane.xlu0 %2781
  %v2783 = vsel %vm69, %v2739, 0.0
  %2784 = vadd.xlane.f32.xlu0 %v2783
  %v2785 = vpop.xlane.xlu0 %2784
  %v2786 = vsel %vm69, %v2740, 0.0
  %2787 = vadd.xlane.f32.xlu0 %v2786
  %v2788 = vpop.xlane.xlu0 %2787
  %v2789 = vmul.f32 %v2743, %v2692
  %v2790 = vmul.f32 %v2746, %v2692
  %v2791 = vmul.f32 %v2749, %v2692
  %v2792 = vmul.f32 %v2752, %v2692
  %v2793 = vmul.f32 %v2755, %v2692
  %v2794 = vmul.f32 %v2758, %v2692
  %v2795 = vmul.f32 %v2761, %v2692
  %v2796 = vmul.f32 %v2764, %v2692
  %v2797 = vmul.f32 %v2767, %v2692
  %v2798 = vmul.f32 %v2770, %v2692
  %v2799 = vmul.f32 %v2773, %v2692
  %v2800 = vmul.f32 %v2776, %v2692
  %v2801 = vmul.f32 %v2779, %v2692
  %v2802 = vmul.f32 %v2782, %v2692
  %v2803 = vmul.f32 %v2785, %v2692
  %v2804 = vmul.f32 %v2788, %v2692
  %v2805 = vadd.f32 %v2789, 1e-05
  %v2806 = vadd.f32 %v2790, 1e-05
  %v2807 = vadd.f32 %v2791, 1e-05
  %v2808 = vadd.f32 %v2792, 1e-05
  %v2809 = vadd.f32 %v2793, 1e-05
  %v2810 = vadd.f32 %v2794, 1e-05
  %v2811 = vadd.f32 %v2795, 1e-05
  %v2812 = vadd.f32 %v2796, 1e-05
  %v2813 = vadd.f32 %v2797, 1e-05
  %v2814 = vadd.f32 %v2798, 1e-05
  %v2815 = vadd.f32 %v2799, 1e-05
  %v2816 = vadd.f32 %v2800, 1e-05
  %v2817 = vadd.f32 %v2801, 1e-05
  %v2818 = vadd.f32 %v2802, 1e-05
  %v2819 = vadd.f32 %v2803, 1e-05
  %v2820 = vadd.f32 %v2804, 1e-05
  %v2821 = vrsqrt.pop %v2805
  %v2822 = vrsqrt.pop %v2806
  %v2823 = vrsqrt.pop %v2807
  %v2824 = vrsqrt.pop %v2808
  %v2825 = vrsqrt.pop %v2809
  %v2826 = vrsqrt.pop %v2810
  %v2827 = vrsqrt.pop %v2811
  %v2828 = vrsqrt.pop %v2812
  %v2829 = vrsqrt.pop %v2813
  %v2830 = vrsqrt.pop %v2814
  %v2831 = vrsqrt.pop %v2815
  %v2832 = vrsqrt.pop %v2816
  %v2833 = vrsqrt.pop %v2817
  %v2834 = vrsqrt.pop %v2818
  %v2835 = vrsqrt.pop %v2819
  %v2836 = vrsqrt.pop %v2820
  %v2837 = vmul.f32 %v2709, %v2821
  %v2838 = vmul.f32 %v2710, %v2822
  %v2839 = vmul.f32 %v2711, %v2823
  %v2840 = vmul.f32 %v2712, %v2824
  %v2841 = vmul.f32 %v2713, %v2825
  %v2842 = vmul.f32 %v2714, %v2826
  %v2843 = vmul.f32 %v2715, %v2827
  %v2844 = vmul.f32 %v2716, %v2828
  %v2845 = vmul.f32 %v2717, %v2829
  %v2846 = vmul.f32 %v2718, %v2830
  %v2847 = vmul.f32 %v2719, %v2831
  %v2848 = vmul.f32 %v2720, %v2832
  %v2849 = vmul.f32 %v2721, %v2833
  %v2850 = vmul.f32 %v2722, %v2834
  %v2851 = vmul.f32 %v2723, %v2835
  %v2852 = vmul.f32 %v2724, %v2836
  %v2854 = vlaneseq
  %v2855 = vshrl.u32 %v2854, 7
  %v2856 = vsub.s32 0, %v2855
  %v2857 = vrot.slane %v2642, %v2856
  %v2859 = vmul.f32 %v2837, %v2857
  %v2860 = vmul.f32 %v2838, %v2857
  %v2861 = vmul.f32 %v2839, %v2857
  %v2862 = vmul.f32 %v2840, %v2857
  %v2863 = vmul.f32 %v2841, %v2857
  %v2864 = vmul.f32 %v2842, %v2857
  %v2865 = vmul.f32 %v2843, %v2857
  %v2866 = vmul.f32 %v2844, %v2857
  %v2867 = vmul.f32 %v2845, %v2857
  %v2868 = vmul.f32 %v2846, %v2857
  %v2869 = vmul.f32 %v2847, %v2857
  %v2870 = vmul.f32 %v2848, %v2857
  %v2871 = vmul.f32 %v2849, %v2857
  %v2872 = vmul.f32 %v2850, %v2857
  %v2873 = vmul.f32 %v2851, %v2857
  %v2874 = vmul.f32 %v2852, %v2857
  %v2876 = vlaneseq
  %v2877 = vshrl.u32 %v2876, 7
  %v2878 = vsub.s32 0, %v2877
  %v2879 = vrot.slane %v2643, %v2878
  %v2881 = vadd.f32 %v2859, %v2879
  %v2882 = vadd.f32 %v2860, %v2879
  %v2883 = vadd.f32 %v2861, %v2879
  %v2884 = vadd.f32 %v2862, %v2879
  %v2885 = vadd.f32 %v2863, %v2879
  %v2886 = vadd.f32 %v2864, %v2879
  %v2887 = vadd.f32 %v2865, %v2879
  %v2888 = vadd.f32 %v2866, %v2879
  %v2889 = vadd.f32 %v2867, %v2879
  %v2890 = vadd.f32 %v2868, %v2879
  %v2891 = vadd.f32 %v2869, %v2879
  %v2892 = vadd.f32 %v2870, %v2879
  %v2893 = vadd.f32 %v2871, %v2879
  %v2894 = vadd.f32 %v2872, %v2879
  %v2895 = vadd.f32 %v2873, %v2879
  %v2896 = vadd.f32 %v2874, %v2879
  %2913 = vrot.lane.b32.xlu0 %v2564, 64
  %v2914 = vpop.permute.xlu0 %2913
  %2915 = vrot.lane.b32.xlu0 %v2569, 64
  %v2916 = vpop.permute.xlu0 %2915
  %2917 = vrot.lane.b32.xlu0 %v2574, 64
  %v2918 = vpop.permute.xlu0 %2917
  %2919 = vrot.lane.b32.xlu0 %v2579, 64
  %v2920 = vpop.permute.xlu0 %2919
  %2921 = vrot.lane.b32.xlu0 %v2584, 64
  %v2922 = vpop.permute.xlu0 %2921
  %2923 = vrot.lane.b32.xlu0 %v2589, 64
  %v2924 = vpop.permute.xlu0 %2923
  %2925 = vrot.lane.b32.xlu0 %v2594, 64
  %v2926 = vpop.permute.xlu0 %2925
  %2927 = vrot.lane.b32.xlu0 %v2599, 64
  %v2928 = vpop.permute.xlu0 %2927
  %2929 = vrot.lane.b32.xlu0 %v2604, 64
  %v2930 = vpop.permute.xlu0 %2929
  %2931 = vrot.lane.b32.xlu0 %v2609, 64
  %v2932 = vpop.permute.xlu0 %2931
  %2933 = vrot.lane.b32.xlu0 %v2614, 64
  %v2934 = vpop.permute.xlu0 %2933
  %2935 = vrot.lane.b32.xlu0 %v2619, 64
  %v2936 = vpop.permute.xlu0 %2935
  %2937 = vrot.lane.b32.xlu0 %v2624, 64
  %v2938 = vpop.permute.xlu0 %2937
  %2939 = vrot.lane.b32.xlu0 %v2629, 64
  %v2940 = vpop.permute.xlu0 %2939
  %2941 = vrot.lane.b32.xlu0 %v2634, 64
  %v2942 = vpop.permute.xlu0 %2941
  %2943 = vrot.lane.b32.xlu0 %v2639, 64
  %v2944 = vpop.permute.xlu0 %2943
  %v2961 = vsel %vm69, %v2914, 0.0
  %2962 = vadd.xlane.f32.xlu0 %v2961
  %v2963 = vpop.xlane.xlu0 %2962
  %v2964 = vsel %vm69, %v2916, 0.0
  %2965 = vadd.xlane.f32.xlu0 %v2964
  %v2966 = vpop.xlane.xlu0 %2965
  %v2967 = vsel %vm69, %v2918, 0.0
  %2968 = vadd.xlane.f32.xlu0 %v2967
  %v2969 = vpop.xlane.xlu0 %2968
  %v2970 = vsel %vm69, %v2920, 0.0
  %2971 = vadd.xlane.f32.xlu0 %v2970
  %v2972 = vpop.xlane.xlu0 %2971
  %v2973 = vsel %vm69, %v2922, 0.0
  %2974 = vadd.xlane.f32.xlu0 %v2973
  %v2975 = vpop.xlane.xlu0 %2974
  %v2976 = vsel %vm69, %v2924, 0.0
  %2977 = vadd.xlane.f32.xlu0 %v2976
  %v2978 = vpop.xlane.xlu0 %2977
  %v2979 = vsel %vm69, %v2926, 0.0
  %2980 = vadd.xlane.f32.xlu0 %v2979
  %v2981 = vpop.xlane.xlu0 %2980
  %v2982 = vsel %vm69, %v2928, 0.0
  %2983 = vadd.xlane.f32.xlu0 %v2982
  %v2984 = vpop.xlane.xlu0 %2983
  %v2985 = vsel %vm69, %v2930, 0.0
  %2986 = vadd.xlane.f32.xlu0 %v2985
  %v2987 = vpop.xlane.xlu0 %2986
  %v2988 = vsel %vm69, %v2932, 0.0
  %2989 = vadd.xlane.f32.xlu0 %v2988
  %v2990 = vpop.xlane.xlu0 %2989
  %v2991 = vsel %vm69, %v2934, 0.0
  %2992 = vadd.xlane.f32.xlu0 %v2991
  %v2993 = vpop.xlane.xlu0 %2992
  %v2994 = vsel %vm69, %v2936, 0.0
  %2995 = vadd.xlane.f32.xlu0 %v2994
  %v2996 = vpop.xlane.xlu0 %2995
  %v2997 = vsel %vm69, %v2938, 0.0
  %2998 = vadd.xlane.f32.xlu0 %v2997
  %v2999 = vpop.xlane.xlu0 %2998
  %v3000 = vsel %vm69, %v2940, 0.0
  %3001 = vadd.xlane.f32.xlu0 %v3000
  %v3002 = vpop.xlane.xlu0 %3001
  %v3003 = vsel %vm69, %v2942, 0.0
  %3004 = vadd.xlane.f32.xlu0 %v3003
  %v3005 = vpop.xlane.xlu0 %3004
  %v3006 = vsel %vm69, %v2944, 0.0
  %3007 = vadd.xlane.f32.xlu0 %v3006
  %v3008 = vpop.xlane.xlu0 %3007
  %v3009 = vmul.f32 %v2963, %v2692
  %v3010 = vmul.f32 %v2966, %v2692
  %v3011 = vmul.f32 %v2969, %v2692
  %v3012 = vmul.f32 %v2972, %v2692
  %v3013 = vmul.f32 %v2975, %v2692
  %v3014 = vmul.f32 %v2978, %v2692
  %v3015 = vmul.f32 %v2981, %v2692
  %v3016 = vmul.f32 %v2984, %v2692
  %v3017 = vmul.f32 %v2987, %v2692
  %v3018 = vmul.f32 %v2990, %v2692
  %v3019 = vmul.f32 %v2993, %v2692
  %v3020 = vmul.f32 %v2996, %v2692
  %v3021 = vmul.f32 %v2999, %v2692
  %v3022 = vmul.f32 %v3002, %v2692
  %v3023 = vmul.f32 %v3005, %v2692
  %v3024 = vmul.f32 %v3008, %v2692
  %v3025 = vsub.f32 %v2564, %v3009
  %v3026 = vsub.f32 %v2569, %v3010
  %v3027 = vsub.f32 %v2574, %v3011
  %v3028 = vsub.f32 %v2579, %v3012
  %v3029 = vsub.f32 %v2584, %v3013
  %v3030 = vsub.f32 %v2589, %v3014
  %v3031 = vsub.f32 %v2594, %v3015
  %v3032 = vsub.f32 %v2599, %v3016
  %v3033 = vsub.f32 %v2604, %v3017
  %v3034 = vsub.f32 %v2609, %v3018
  %v3035 = vsub.f32 %v2614, %v3019
  %v3036 = vsub.f32 %v2619, %v3020
  %v3037 = vsub.f32 %v2624, %v3021
  %v3038 = vsub.f32 %v2629, %v3022
  %v3039 = vsub.f32 %v2634, %v3023
  %v3040 = vsub.f32 %v2639, %v3024
  %v3041 = vmul.f32 %v3025, %v3025
  %v3042 = vmul.f32 %v3026, %v3026
  %v3043 = vmul.f32 %v3027, %v3027
  %v3044 = vmul.f32 %v3028, %v3028
  %v3045 = vmul.f32 %v3029, %v3029
  %v3046 = vmul.f32 %v3030, %v3030
  %v3047 = vmul.f32 %v3031, %v3031
  %v3048 = vmul.f32 %v3032, %v3032
  %v3049 = vmul.f32 %v3033, %v3033
  %v3050 = vmul.f32 %v3034, %v3034
  %v3051 = vmul.f32 %v3035, %v3035
  %v3052 = vmul.f32 %v3036, %v3036
  %v3053 = vmul.f32 %v3037, %v3037
  %v3054 = vmul.f32 %v3038, %v3038
  %v3055 = vmul.f32 %v3039, %v3039
  %v3056 = vmul.f32 %v3040, %v3040
  %3073 = vrot.lane.b32.xlu0 %v3041, 64
  %v3074 = vpop.permute.xlu0 %3073
  %3075 = vrot.lane.b32.xlu0 %v3042, 64
  %v3076 = vpop.permute.xlu0 %3075
  %3077 = vrot.lane.b32.xlu0 %v3043, 64
  %v3078 = vpop.permute.xlu0 %3077
  %3079 = vrot.lane.b32.xlu0 %v3044, 64
  %v3080 = vpop.permute.xlu0 %3079
  %3081 = vrot.lane.b32.xlu0 %v3045, 64
  %v3082 = vpop.permute.xlu0 %3081
  %3083 = vrot.lane.b32.xlu0 %v3046, 64
  %v3084 = vpop.permute.xlu0 %3083
  %3085 = vrot.lane.b32.xlu0 %v3047, 64
  %v3086 = vpop.permute.xlu0 %3085
  %3087 = vrot.lane.b32.xlu0 %v3048, 64
  %v3088 = vpop.permute.xlu0 %3087
  %3089 = vrot.lane.b32.xlu0 %v3049, 64
  %v3090 = vpop.permute.xlu0 %3089
  %3091 = vrot.lane.b32.xlu0 %v3050, 64
  %v3092 = vpop.permute.xlu0 %3091
  %3093 = vrot.lane.b32.xlu0 %v3051, 64
  %v3094 = vpop.permute.xlu0 %3093
  %3095 = vrot.lane.b32.xlu0 %v3052, 64
  %v3096 = vpop.permute.xlu0 %3095
  %3097 = vrot.lane.b32.xlu0 %v3053, 64
  %v3098 = vpop.permute.xlu0 %3097
  %3099 = vrot.lane.b32.xlu0 %v3054, 64
  %v3100 = vpop.permute.xlu0 %3099
  %3101 = vrot.lane.b32.xlu0 %v3055, 64
  %v3102 = vpop.permute.xlu0 %3101
  %3103 = vrot.lane.b32.xlu0 %v3056, 64
  %v3104 = vpop.permute.xlu0 %3103
  %v3121 = vsel %vm69, %v3074, 0.0
  %3122 = vadd.xlane.f32.xlu0 %v3121
  %v3123 = vpop.xlane.xlu0 %3122
  %v3124 = vsel %vm69, %v3076, 0.0
  %3125 = vadd.xlane.f32.xlu0 %v3124
  %v3126 = vpop.xlane.xlu0 %3125
  %v3127 = vsel %vm69, %v3078, 0.0
  %3128 = vadd.xlane.f32.xlu0 %v3127
  %v3129 = vpop.xlane.xlu0 %3128
  %v3130 = vsel %vm69, %v3080, 0.0
  %3131 = vadd.xlane.f32.xlu0 %v3130
  %v3132 = vpop.xlane.xlu0 %3131
  %v3133 = vsel %vm69, %v3082, 0.0
  %3134 = vadd.xlane.f32.xlu0 %v3133
  %v3135 = vpop.xlane.xlu0 %3134
  %v3136 = vsel %vm69, %v3084, 0.0
  %3137 = vadd.xlane.f32.xlu0 %v3136
  %v3138 = vpop.xlane.xlu0 %3137
  %v3139 = vsel %vm69, %v3086, 0.0
  %3140 = vadd.xlane.f32.xlu0 %v3139
  %v3141 = vpop.xlane.xlu0 %3140
  %v3142 = vsel %vm69, %v3088, 0.0
  %3143 = vadd.xlane.f32.xlu0 %v3142
  %v3144 = vpop.xlane.xlu0 %3143
  %v3145 = vsel %vm69, %v3090, 0.0
  %3146 = vadd.xlane.f32.xlu0 %v3145
  %v3147 = vpop.xlane.xlu0 %3146
  %v3148 = vsel %vm69, %v3092, 0.0
  %3149 = vadd.xlane.f32.xlu0 %v3148
  %v3150 = vpop.xlane.xlu0 %3149
  %v3151 = vsel %vm69, %v3094, 0.0
  %3152 = vadd.xlane.f32.xlu0 %v3151
  %v3153 = vpop.xlane.xlu0 %3152
  %v3154 = vsel %vm69, %v3096, 0.0
  %3155 = vadd.xlane.f32.xlu0 %v3154
  %v3156 = vpop.xlane.xlu0 %3155
  %v3157 = vsel %vm69, %v3098, 0.0
  %3158 = vadd.xlane.f32.xlu0 %v3157
  %v3159 = vpop.xlane.xlu0 %3158
  %v3160 = vsel %vm69, %v3100, 0.0
  %3161 = vadd.xlane.f32.xlu0 %v3160
  %v3162 = vpop.xlane.xlu0 %3161
  %v3163 = vsel %vm69, %v3102, 0.0
  %3164 = vadd.xlane.f32.xlu0 %v3163
  %v3165 = vpop.xlane.xlu0 %3164
  %v3166 = vsel %vm69, %v3104, 0.0
  %3167 = vadd.xlane.f32.xlu0 %v3166
  %v3168 = vpop.xlane.xlu0 %3167
  %v3169 = vmul.f32 %v3123, %v2692
  %v3170 = vmul.f32 %v3126, %v2692
  %v3171 = vmul.f32 %v3129, %v2692
  %v3172 = vmul.f32 %v3132, %v2692
  %v3173 = vmul.f32 %v3135, %v2692
  %v3174 = vmul.f32 %v3138, %v2692
  %v3175 = vmul.f32 %v3141, %v2692
  %v3176 = vmul.f32 %v3144, %v2692
  %v3177 = vmul.f32 %v3147, %v2692
  %v3178 = vmul.f32 %v3150, %v2692
  %v3179 = vmul.f32 %v3153, %v2692
  %v3180 = vmul.f32 %v3156, %v2692
  %v3181 = vmul.f32 %v3159, %v2692
  %v3182 = vmul.f32 %v3162, %v2692
  %v3183 = vmul.f32 %v3165, %v2692
  %v3184 = vmul.f32 %v3168, %v2692
  %v3185 = vadd.f32 %v3169, 1e-05
  %v3186 = vadd.f32 %v3170, 1e-05
  %v3187 = vadd.f32 %v3171, 1e-05
  %v3188 = vadd.f32 %v3172, 1e-05
  %v3189 = vadd.f32 %v3173, 1e-05
  %v3190 = vadd.f32 %v3174, 1e-05
  %v3191 = vadd.f32 %v3175, 1e-05
  %v3192 = vadd.f32 %v3176, 1e-05
  %v3193 = vadd.f32 %v3177, 1e-05
  %v3194 = vadd.f32 %v3178, 1e-05
  %v3195 = vadd.f32 %v3179, 1e-05
  %v3196 = vadd.f32 %v3180, 1e-05
  %v3197 = vadd.f32 %v3181, 1e-05
  %v3198 = vadd.f32 %v3182, 1e-05
  %v3199 = vadd.f32 %v3183, 1e-05
  %v3200 = vadd.f32 %v3184, 1e-05
  %v3201 = vrsqrt.pop %v3185
  %v3202 = vrsqrt.pop %v3186
  %v3203 = vrsqrt.pop %v3187
  %v3204 = vrsqrt.pop %v3188
  %v3205 = vrsqrt.pop %v3189
  %v3206 = vrsqrt.pop %v3190
  %v3207 = vrsqrt.pop %v3191
  %v3208 = vrsqrt.pop %v3192
  %v3209 = vrsqrt.pop %v3193
  %v3210 = vrsqrt.pop %v3194
  %v3211 = vrsqrt.pop %v3195
  %v3212 = vrsqrt.pop %v3196
  %v3213 = vrsqrt.pop %v3197
  %v3214 = vrsqrt.pop %v3198
  %v3215 = vrsqrt.pop %v3199
  %v3216 = vrsqrt.pop %v3200
  %v3217 = vmul.f32 %v3025, %v3201
  %v3218 = vmul.f32 %v3026, %v3202
  %v3219 = vmul.f32 %v3027, %v3203
  %v3220 = vmul.f32 %v3028, %v3204
  %v3221 = vmul.f32 %v3029, %v3205
  %v3222 = vmul.f32 %v3030, %v3206
  %v3223 = vmul.f32 %v3031, %v3207
  %v3224 = vmul.f32 %v3032, %v3208
  %v3225 = vmul.f32 %v3033, %v3209
  %v3226 = vmul.f32 %v3034, %v3210
  %v3227 = vmul.f32 %v3035, %v3211
  %v3228 = vmul.f32 %v3036, %v3212
  %v3229 = vmul.f32 %v3037, %v3213
  %v3230 = vmul.f32 %v3038, %v3214
  %v3231 = vmul.f32 %v3039, %v3215
  %v3232 = vmul.f32 %v3040, %v3216
  %v3233 = vmul.f32 %v3217, %v2857
  %v3234 = vmul.f32 %v3218, %v2857
  %v3235 = vmul.f32 %v3219, %v2857
  %v3236 = vmul.f32 %v3220, %v2857
  %v3237 = vmul.f32 %v3221, %v2857
  %v3238 = vmul.f32 %v3222, %v2857
  %v3239 = vmul.f32 %v3223, %v2857
  %v3240 = vmul.f32 %v3224, %v2857
  %v3241 = vmul.f32 %v3225, %v2857
  %v3242 = vmul.f32 %v3226, %v2857
  %v3243 = vmul.f32 %v3227, %v2857
  %v3244 = vmul.f32 %v3228, %v2857
  %v3245 = vmul.f32 %v3229, %v2857
  %v3246 = vmul.f32 %v3230, %v2857
  %v3247 = vmul.f32 %v3231, %v2857
  %v3248 = vmul.f32 %v3232, %v2857
  %v3249 = vadd.f32 %v3233, %v2879
  %v3250 = vadd.f32 %v3234, %v2879
  %v3251 = vadd.f32 %v3235, %v2879
  %v3252 = vadd.f32 %v3236, %v2879
  %v3253 = vadd.f32 %v3237, %v2879
  %v3254 = vadd.f32 %v3238, %v2879
  %v3255 = vadd.f32 %v3239, %v2879
  %v3256 = vadd.f32 %v3240, %v2879
  %v3257 = vadd.f32 %v3241, %v2879
  %v3258 = vadd.f32 %v3242, %v2879
  %v3259 = vadd.f32 %v3243, %v2879
  %v3260 = vadd.f32 %v3244, %v2879
  %v3261 = vadd.f32 %v3245, %v2879
  %v3262 = vadd.f32 %v3246, %v2879
  %v3263 = vadd.f32 %v3247, %v2879
  %v3264 = vadd.f32 %v3248, %v2879
  %v3265 = vsel %vm69, %v2881, %v3249
  %v3266 = vsel %vm69, %v2882, %v3250
  %v3267 = vsel %vm69, %v2883, %v3251
  %v3268 = vsel %vm69, %v2884, %v3252
  %v3269 = vsel %vm69, %v2885, %v3253
  %v3270 = vsel %vm69, %v2886, %v3254
  %v3271 = vsel %vm69, %v2887, %v3255
  %v3272 = vsel %vm69, %v2888, %v3256
  %v3273 = vsel %vm69, %v2889, %v3257
  %v3274 = vsel %vm69, %v2890, %v3258
  %v3275 = vsel %vm69, %v2891, %v3259
  %v3276 = vsel %vm69, %v2892, %v3260
  %v3277 = vsel %vm69, %v2893, %v3261
  %v3278 = vsel %vm69, %v2894, %v3262
  %v3279 = vsel %vm69, %v2895, %v3263
  %v3280 = vsel %vm69, %v2896, %v3264
  %v3281 = vld [vmem:[%s9] sm:$0x1]
  %v3282 = vld [vmem:[%s10] sm:$0x1]
  %3283 = vadd.xlane.f32.xlu0 %v3265
  %v3284 = vpop.xlane.xlu0 %3283
  %3285 = vadd.xlane.f32.xlu0 %v3266
  %v3286 = vpop.xlane.xlu0 %3285
  %3287 = vadd.xlane.f32.xlu0 %v3267
  %v3288 = vpop.xlane.xlu0 %3287
  %3289 = vadd.xlane.f32.xlu0 %v3268
  %v3290 = vpop.xlane.xlu0 %3289
  %3291 = vadd.xlane.f32.xlu0 %v3269
  %v3292 = vpop.xlane.xlu0 %3291
  %3293 = vadd.xlane.f32.xlu0 %v3270
  %v3294 = vpop.xlane.xlu0 %3293
  %3295 = vadd.xlane.f32.xlu0 %v3271
  %v3296 = vpop.xlane.xlu0 %3295
  %3297 = vadd.xlane.f32.xlu0 %v3272
  %v3298 = vpop.xlane.xlu0 %3297
  %3299 = vadd.xlane.f32.xlu0 %v3273
  %v3300 = vpop.xlane.xlu0 %3299
  %3301 = vadd.xlane.f32.xlu0 %v3274
  %v3302 = vpop.xlane.xlu0 %3301
  %3303 = vadd.xlane.f32.xlu0 %v3275
  %v3304 = vpop.xlane.xlu0 %3303
  %3305 = vadd.xlane.f32.xlu0 %v3276
  %v3306 = vpop.xlane.xlu0 %3305
  %3307 = vadd.xlane.f32.xlu0 %v3277
  %v3308 = vpop.xlane.xlu0 %3307
  %3309 = vadd.xlane.f32.xlu0 %v3278
  %v3310 = vpop.xlane.xlu0 %3309
  %3311 = vadd.xlane.f32.xlu0 %v3279
  %v3312 = vpop.xlane.xlu0 %3311
  %3313 = vadd.xlane.f32.xlu0 %v3280
  %v3314 = vpop.xlane.xlu0 %3313
  %v3315 = vrcp.pop 128.0
  %v3316 = vmul.f32 %v3284, %v3315
  %v3317 = vmul.f32 %v3286, %v3315
  %v3318 = vmul.f32 %v3288, %v3315
  %v3319 = vmul.f32 %v3290, %v3315
  %v3320 = vmul.f32 %v3292, %v3315
  %v3321 = vmul.f32 %v3294, %v3315
  %v3322 = vmul.f32 %v3296, %v3315
  %v3323 = vmul.f32 %v3298, %v3315
  %v3324 = vmul.f32 %v3300, %v3315
  %v3325 = vmul.f32 %v3302, %v3315
  %v3326 = vmul.f32 %v3304, %v3315
  %v3327 = vmul.f32 %v3306, %v3315
  %v3328 = vmul.f32 %v3308, %v3315
  %v3329 = vmul.f32 %v3310, %v3315
  %v3330 = vmul.f32 %v3312, %v3315
  %v3331 = vmul.f32 %v3314, %v3315
  %v3332 = vsub.f32 %v3265, %v3316
  %v3333 = vsub.f32 %v3266, %v3317
  %v3334 = vsub.f32 %v3267, %v3318
  %v3335 = vsub.f32 %v3268, %v3319
  %v3336 = vsub.f32 %v3269, %v3320
  %v3337 = vsub.f32 %v3270, %v3321
  %v3338 = vsub.f32 %v3271, %v3322
  %v3339 = vsub.f32 %v3272, %v3323
  %v3340 = vsub.f32 %v3273, %v3324
  %v3341 = vsub.f32 %v3274, %v3325
  %v3342 = vsub.f32 %v3275, %v3326
  %v3343 = vsub.f32 %v3276, %v3327
  %v3344 = vsub.f32 %v3277, %v3328
  %v3345 = vsub.f32 %v3278, %v3329
  %v3346 = vsub.f32 %v3279, %v3330
  %v3347 = vsub.f32 %v3280, %v3331
  %v3348 = vmul.f32 %v3332, %v3332
  %v3349 = vmul.f32 %v3333, %v3333
  %v3350 = vmul.f32 %v3334, %v3334
  %v3351 = vmul.f32 %v3335, %v3335
  %v3352 = vmul.f32 %v3336, %v3336
  %v3353 = vmul.f32 %v3337, %v3337
  %v3354 = vmul.f32 %v3338, %v3338
  %v3355 = vmul.f32 %v3339, %v3339
  %v3356 = vmul.f32 %v3340, %v3340
  %v3357 = vmul.f32 %v3341, %v3341
  %v3358 = vmul.f32 %v3342, %v3342
  %v3359 = vmul.f32 %v3343, %v3343
  %v3360 = vmul.f32 %v3344, %v3344
  %v3361 = vmul.f32 %v3345, %v3345
  %v3362 = vmul.f32 %v3346, %v3346
  %v3363 = vmul.f32 %v3347, %v3347
  %3364 = vadd.xlane.f32.xlu0 %v3348
  %v3365 = vpop.xlane.xlu0 %3364
  %3366 = vadd.xlane.f32.xlu0 %v3349
  %v3367 = vpop.xlane.xlu0 %3366
  %3368 = vadd.xlane.f32.xlu0 %v3350
  %v3369 = vpop.xlane.xlu0 %3368
  %3370 = vadd.xlane.f32.xlu0 %v3351
  %v3371 = vpop.xlane.xlu0 %3370
  %3372 = vadd.xlane.f32.xlu0 %v3352
  %v3373 = vpop.xlane.xlu0 %3372
  %3374 = vadd.xlane.f32.xlu0 %v3353
  %v3375 = vpop.xlane.xlu0 %3374
  %3376 = vadd.xlane.f32.xlu0 %v3354
  %v3377 = vpop.xlane.xlu0 %3376
  %3378 = vadd.xlane.f32.xlu0 %v3355
  %v3379 = vpop.xlane.xlu0 %3378
  %3380 = vadd.xlane.f32.xlu0 %v3356
  %v3381 = vpop.xlane.xlu0 %3380
  %3382 = vadd.xlane.f32.xlu0 %v3357
  %v3383 = vpop.xlane.xlu0 %3382
  %3384 = vadd.xlane.f32.xlu0 %v3358
  %v3385 = vpop.xlane.xlu0 %3384
  %3386 = vadd.xlane.f32.xlu0 %v3359
  %v3387 = vpop.xlane.xlu0 %3386
  %3388 = vadd.xlane.f32.xlu0 %v3360
  %v3389 = vpop.xlane.xlu0 %3388
  %3390 = vadd.xlane.f32.xlu0 %v3361
  %v3391 = vpop.xlane.xlu0 %3390
  %3392 = vadd.xlane.f32.xlu0 %v3362
  %v3393 = vpop.xlane.xlu0 %3392
  %3394 = vadd.xlane.f32.xlu0 %v3363
  %v3395 = vpop.xlane.xlu0 %3394
  %v3396 = vmul.f32 %v3365, %v3315
  %v3397 = vmul.f32 %v3367, %v3315
  %v3398 = vmul.f32 %v3369, %v3315
  %v3399 = vmul.f32 %v3371, %v3315
  %v3400 = vmul.f32 %v3373, %v3315
  %v3401 = vmul.f32 %v3375, %v3315
  %v3402 = vmul.f32 %v3377, %v3315
  %v3403 = vmul.f32 %v3379, %v3315
  %v3404 = vmul.f32 %v3381, %v3315
  %v3405 = vmul.f32 %v3383, %v3315
  %v3406 = vmul.f32 %v3385, %v3315
  %v3407 = vmul.f32 %v3387, %v3315
  %v3408 = vmul.f32 %v3389, %v3315
  %v3409 = vmul.f32 %v3391, %v3315
  %v3410 = vmul.f32 %v3393, %v3315
  %v3411 = vmul.f32 %v3395, %v3315
  %v3412 = vadd.f32 %v3396, 1e-05
  %v3413 = vadd.f32 %v3397, 1e-05
  %v3414 = vadd.f32 %v3398, 1e-05
  %v3415 = vadd.f32 %v3399, 1e-05
  %v3416 = vadd.f32 %v3400, 1e-05
  %v3417 = vadd.f32 %v3401, 1e-05
  %v3418 = vadd.f32 %v3402, 1e-05
  %v3419 = vadd.f32 %v3403, 1e-05
  %v3420 = vadd.f32 %v3404, 1e-05
  %v3421 = vadd.f32 %v3405, 1e-05
  %v3422 = vadd.f32 %v3406, 1e-05
  %v3423 = vadd.f32 %v3407, 1e-05
  %v3424 = vadd.f32 %v3408, 1e-05
  %v3425 = vadd.f32 %v3409, 1e-05
  %v3426 = vadd.f32 %v3410, 1e-05
  %v3427 = vadd.f32 %v3411, 1e-05
  %v3428 = vrsqrt.pop %v3412
  %v3429 = vrsqrt.pop %v3413
  %v3430 = vrsqrt.pop %v3414
  %v3431 = vrsqrt.pop %v3415
  %v3432 = vrsqrt.pop %v3416
  %v3433 = vrsqrt.pop %v3417
  %v3434 = vrsqrt.pop %v3418
  %v3435 = vrsqrt.pop %v3419
  %v3436 = vrsqrt.pop %v3420
  %v3437 = vrsqrt.pop %v3421
  %v3438 = vrsqrt.pop %v3422
  %v3439 = vrsqrt.pop %v3423
  %v3440 = vrsqrt.pop %v3424
  %v3441 = vrsqrt.pop %v3425
  %v3442 = vrsqrt.pop %v3426
  %v3443 = vrsqrt.pop %v3427
  %v3444 = vmul.f32 %v3332, %v3428
  %v3445 = vmul.f32 %v3333, %v3429
  %v3446 = vmul.f32 %v3334, %v3430
  %v3447 = vmul.f32 %v3335, %v3431
  %v3448 = vmul.f32 %v3336, %v3432
  %v3449 = vmul.f32 %v3337, %v3433
  %v3450 = vmul.f32 %v3338, %v3434
  %v3451 = vmul.f32 %v3339, %v3435
  %v3452 = vmul.f32 %v3340, %v3436
  %v3453 = vmul.f32 %v3341, %v3437
  %v3454 = vmul.f32 %v3342, %v3438
  %v3455 = vmul.f32 %v3343, %v3439
  %v3456 = vmul.f32 %v3344, %v3440
  %v3457 = vmul.f32 %v3345, %v3441
  %v3458 = vmul.f32 %v3346, %v3442
  %v3459 = vmul.f32 %v3347, %v3443
  %v3461 = vlaneseq
  %v3462 = vshrl.u32 %v3461, 7
  %v3463 = vsub.s32 0, %v3462
  %v3464 = vrot.slane %v3281, %v3463
  %v3466 = vmul.f32 %v3444, %v3464
  %v3467 = vmul.f32 %v3445, %v3464
  %v3468 = vmul.f32 %v3446, %v3464
  %v3469 = vmul.f32 %v3447, %v3464
  %v3470 = vmul.f32 %v3448, %v3464
  %v3471 = vmul.f32 %v3449, %v3464
  %v3472 = vmul.f32 %v3450, %v3464
  %v3473 = vmul.f32 %v3451, %v3464
  %v3474 = vmul.f32 %v3452, %v3464
  %v3475 = vmul.f32 %v3453, %v3464
  %v3476 = vmul.f32 %v3454, %v3464
  %v3477 = vmul.f32 %v3455, %v3464
  %v3478 = vmul.f32 %v3456, %v3464
  %v3479 = vmul.f32 %v3457, %v3464
  %v3480 = vmul.f32 %v3458, %v3464
  %v3481 = vmul.f32 %v3459, %v3464
  %v3483 = vlaneseq
  %v3484 = vshrl.u32 %v3483, 7
  %v3485 = vsub.s32 0, %v3484
  %v3486 = vrot.slane %v3282, %v3485
  %v3488 = vadd.f32 %v3466, %v3486
  %v3489 = vadd.f32 %v3467, %v3486
  %v3490 = vadd.f32 %v3468, %v3486
  %v3491 = vadd.f32 %v3469, %v3486
  %v3492 = vadd.f32 %v3470, %v3486
  %v3493 = vadd.f32 %v3471, %v3486
  %v3494 = vadd.f32 %v3472, %v3486
  %v3495 = vadd.f32 %v3473, %v3486
  %v3496 = vadd.f32 %v3474, %v3486
  %v3497 = vadd.f32 %v3475, %v3486
  %v3498 = vadd.f32 %v3476, %v3486
  %v3499 = vadd.f32 %v3477, %v3486
  %v3500 = vadd.f32 %v3478, %v3486
  %v3501 = vadd.f32 %v3479, %v3486
  %v3502 = vadd.f32 %v3480, %v3486
  %v3503 = vadd.f32 %v3481, %v3486
  %3504 = vst [vmem:[%s11] sm:$0xff] %v3488
  %3505 = vst [vmem:[%s11 + $0x8] sm:$0xff] %v3489
  %3506 = vst [vmem:[%s11 + $0x10] sm:$0xff] %v3490
  %3507 = vst [vmem:[%s11 + $0x18] sm:$0xff] %v3491
  %3508 = vst [vmem:[%s11 + $0x20] sm:$0xff] %v3492
  %3509 = vst [vmem:[%s11 + $0x28] sm:$0xff] %v3493
  %3510 = vst [vmem:[%s11 + $0x30] sm:$0xff] %v3494
  %3511 = vst [vmem:[%s11 + $0x38] sm:$0xff] %v3495
  %3512 = vst [vmem:[%s11 + $0x40] sm:$0xff] %v3496
  %3513 = vst [vmem:[%s11 + $0x48] sm:$0xff] %v3497
  %3514 = vst [vmem:[%s11 + $0x50] sm:$0xff] %v3498
  %3515 = vst [vmem:[%s11 + $0x58] sm:$0xff] %v3499
  %3516 = vst [vmem:[%s11 + $0x60] sm:$0xff] %v3500
  %3517 = vst [vmem:[%s11 + $0x68] sm:$0xff] %v3501
  %3518 = vst [vmem:[%s11 + $0x70] sm:$0xff] %v3502
  %3519 = vst [vmem:[%s11 + $0x78] sm:$0xff] %v3503
  // Predicated region
  $region46: #{fabis6_forward.3} parent=0 // pred_check
    _
  $region47: #{fabis6_forward.3} parent=0 // pred_check_branch
    %3521 = sbr.rel (0) target = $region49
  $region48: #{fabis6_forward.3} parent=0 // pred_region
    _
  $region49: #{fabis6_forward.3} parent=0 // pred_fallthru
    _
  // Predicated region
  $region50: #{fabis6_forward.3} parent=0 // pred_check
    _
  $region51: #{fabis6_forward.3} parent=0 // pred_check_branch
    %3523 = sbr.rel (0) target = $region53
  $region52: #{fabis6_forward.3} parent=0 // pred_region
    _
  $region53: #{fabis6_forward.3} parent=0 // pred_fallthru
    _

</llo_original>
